<compile_context>
chip_gen: v6e
topology: v6e:2x2x1
jax: 0.10.0
libtpu: 0.0.40
codegen_flags: <defaults>
</compile_context>

<pallas_src>
import functools
import math

import jax
import jax.numpy as jnp
from jax.experimental import pallas as pl
from jax.experimental.pallas import tpu as pltpu


def _block_kernel(x_ref, ln1w_ref, ln1b_ref, qkvw_ref, qkvb_ref,
                  projw_ref, projb_ref, ln2w_ref, ln2b_ref,
                  fc1w_ref, fc1b_ref, fc2w_ref, fc2b_ref, out_ref,
                  *, heads, eps=1e-5):
    x = x_ref[0]                               # (N, C) float32
    N, C = x.shape
    hd = C // heads
    wdt = qkvw_ref.dtype                       # bfloat16 matmul-operand dtype

    def layernorm(z, w, b):
        mu = jnp.mean(z, axis=-1, keepdims=True)
        var = jnp.mean((z - mu) ** 2, axis=-1, keepdims=True)
        return (z - mu) * jax.lax.rsqrt(var + eps) * w + b

    # ---------------- Attention ----------------
    xn = layernorm(x, ln1w_ref[0], ln1b_ref[0]).astype(wdt)           # (N, C)

    # Single lane-dense QKV projection. Columns are [Q | K | V] (heads-major
    # inside each block); the softmax scale is already folded into the Q columns.
    qkv = jnp.dot(xn, qkvw_ref[...],
                  preferred_element_type=jnp.float32) + qkvb_ref[0]   # (N, 3C) f32

    # Per-head attention; head merge fused into the output projection:
    #   attn_acc = sum_h softmax(q_h k_h^T) v_h @ Wproj[h]   (all matmuls on MXU)
    attn_acc = None
    for h in range(heads):
        q = qkv[:, h * hd:(h + 1) * hd].astype(wdt)                   # (N, hd), pre-scaled
        k = qkv[:, C + h * hd:C + (h + 1) * hd].astype(wdt)           # (N, hd)
        v = qkv[:, 2 * C + h * hd:2 * C + (h + 1) * hd].astype(wdt)   # (N, hd)

        # TODO(synk): check lowering for an inserted XLU transpose of k; if present,
        # produce K pre-transposed host-side instead.
        s = jax.lax.dot_general(q, k, (((1,), (1,)), ((), ())),
                                preferred_element_type=jnp.float32)   # (N, N)
        s = s - jnp.max(s, axis=-1, keepdims=True)
        p = jnp.exp(s)
        p = p * pl.reciprocal(jnp.sum(p, axis=-1, keepdims=True), approx=True)
        y = jnp.dot(p.astype(wdt), v,
                    preferred_element_type=jnp.float32)               # (N, hd)
        contrib = jnp.dot(y.astype(wdt), projw_ref[h],
                          preferred_element_type=jnp.float32)         # (N, C) lane-dense
        attn_acc = contrib if attn_acc is None else attn_acc + contrib

    x1 = x + attn_acc + projb_ref[0]                                  # residual 1

    # ---------------- MLP ----------------
    xn2 = layernorm(x1, ln2w_ref[0], ln2b_ref[0]).astype(wdt)
    h1 = jnp.dot(xn2, fc1w_ref[...],
                 preferred_element_type=jnp.float32) + fc1b_ref[0]
    # exact (erf-based) GELU, matching torch.nn.GELU() default
    h1 = 0.5 * h1 * (1.0 + jax.lax.erf(h1 * (1.0 / math.sqrt(2.0))))
    h2 = jnp.dot(h1.astype(wdt), fc2w_ref[...],
                 preferred_element_type=jnp.float32) + fc2b_ref[0]

    out_ref[0] = x1 + h2                                              # residual 2


def _pick_vmem_limit_bytes():
    """Generation-aware scoped-VMEM limit (100 MiB on v5e/v6e, ~56 MiB on v7x)."""
    try:
        cap = int(pltpu.get_tpu_info().vmem_capacity_bytes)
    except Exception:
        return 48 * 1024 * 1024
    return int(max(32 * 1024 * 1024,
                   min(100 * 1024 * 1024, cap - 8 * 1024 * 1024)))


def _vit_block_call(x, weights, heads, single_buffer_weights):
    (ln1_w, ln1_b, qkv_w, qkv_b, proj_w, proj_b,
     ln2_w, ln2_b, fc1_w, fc1_b, fc2_w, fc2_b) = weights
    B, N, C = x.shape
    hd = C // heads
    mlp_dim = fc1_w.shape[1]
    wbytes = jnp.dtype(qkv_w.dtype).itemsize

    def const_spec(shape):
        zeros = (0,) * len(shape)
        if single_buffer_weights:
            # Constant index_map -> nothing to pipeline; one VMEM copy is enough.
            return pl.BlockSpec(shape, lambda b: zeros, pipeline_mode=pl.Buffered(1))
        return pl.BlockSpec(shape, lambda b: zeros)

    in_specs = [
        pl.BlockSpec((1, N, C), lambda b: (b, 0, 0)),        # x
        const_spec((1, C)), const_spec((1, C)),              # ln1 w/b
        const_spec((C, 3 * C)), const_spec((1, 3 * C)),      # qkv w/b (scale folded)
        const_spec((heads, hd, C)), const_spec((1, C)),      # proj w/b
        const_spec((1, C)), const_spec((1, C)),              # ln2 w/b
        const_spec((C, mlp_dim)), const_spec((1, mlp_dim)),  # fc1 w/b
        const_spec((mlp_dim, C)), const_spec((1, C)),        # fc2 w/b
    ]

    flops = int(2 * B * N * C * (3 * C)          # qkv projection
                + 4 * B * N * N * C              # q.k^T and p.v (all heads)
                + 2 * B * N * C * C              # output projection (head-fused)
                + 4 * B * N * C * mlp_dim)       # fc1 + fc2
    transcendentals = int(B * heads * N * N + B * N * mlp_dim)
    bytes_accessed = int(2 * B * N * C * 4
                         + (4 * C * C + 2 * C * mlp_dim) * wbytes
                         + (3 * C + 8 * C + mlp_dim) * 4)

    return pl.pallas_call(
        functools.partial(_block_kernel, heads=heads),
        out_shape=jax.ShapeDtypeStruct((B, N, C), jnp.float32),
        grid=(B,),
        in_specs=in_specs,
        out_specs=pl.BlockSpec((1, N, C), lambda b: (b, 0, 0)),
        compiler_params=pltpu.CompilerParams(
            dimension_semantics=("parallel",),
            vmem_limit_bytes=_pick_vmem_limit_bytes()),
        cost_estimate=pl.CostEstimate(
            flops=flops,
            transcendentals=transcendentals,
            bytes_accessed=bytes_accessed),
    )(x, ln1_w, ln1_b, qkv_w, qkv_b, proj_w, proj_b,
      ln2_w, ln2_b, fc1_w, fc1_b, fc2_w, fc2_b)


def vit_block(x, params, heads, *, weight_dtype=jnp.bfloat16):
    B, N, C = x.shape
    hd = C // heads
    scale = hd ** (-0.5)

    # --- host/JAX-side weight prep (free; no kernel cost) ---
    # Fold the softmax 1/sqrt(hd) into the Q columns of the qkv weight/bias;
    # cast matmul weights to bf16 (accumulation stays f32 on the MXU).
    col_scale = jnp.concatenate(
        [jnp.full((C,), scale, jnp.float32), jnp.ones((2 * C,), jnp.float32)])
    qkv_w = (params["qkv_w"] * col_scale[None, :]).astype(weight_dtype)
    qkv_b = (params["qkv_b"] * col_scale[None, :]).astype(jnp.float32)
    proj_w = params["proj_w"].reshape(heads, hd, C).astype(weight_dtype)
    fc1_w = params["fc1_w"].astype(weight_dtype)
    fc2_w = params["fc2_w"].astype(weight_dtype)

    weights = (params["ln1_w"], params["ln1_b"], qkv_w, qkv_b,
               proj_w, params["proj_b"], params["ln2_w"], params["ln2_b"],
               fc1_w, params["fc1_b"], fc2_w, params["fc2_b"])

    try:
        out = _vit_block_call(x, weights, heads, single_buffer_weights=True)
        return jax.block_until_ready(out)
    except Exception:
        # Fallback if this jax build rejects BlockSpec(pipeline_mode=pl.Buffered(1)).
        return _vit_block_call(x, weights, heads, single_buffer_weights=False)


def init_params(key, dim, mlp_dim):
    ks = jax.random.split(key, 4)
    std = 0.02
    return {
        "ln1_w": jnp.ones((1, dim), jnp.float32),
        "ln1_b": jnp.zeros((1, dim), jnp.float32),
        "qkv_w": std * jax.random.normal(ks[0], (dim, 3 * dim), jnp.float32),
        "qkv_b": jnp.zeros((1, 3 * dim), jnp.float32),
        "proj_w": std * jax.random.normal(ks[1], (dim, dim), jnp.float32),
        "proj_b": jnp.zeros((1, dim), jnp.float32),
        "ln2_w": jnp.ones((1, dim), jnp.float32),
        "ln2_b": jnp.zeros((1, dim), jnp.float32),
        "fc1_w": std * jax.random.normal(ks[2], (dim, mlp_dim), jnp.float32),
        "fc1_b": jnp.zeros((1, mlp_dim), jnp.float32),
        "fc2_w": std * jax.random.normal(ks[3], (mlp_dim, dim), jnp.float32),
        "fc2_b": jnp.zeros((1, dim), jnp.float32),
    }


def vit_block_ref(x, p, heads):
    """Pure-JAX float32 reference of the same math (for correctness check)."""
    B, N, C = x.shape
    hd = C // heads

    def ln(z, w, b, eps=1e-5):
        mu = jnp.mean(z, -1, keepdims=True)
        var = jnp.mean((z - mu) ** 2, -1, keepdims=True)
        return (z - mu) / jnp.sqrt(var + eps) * w + b

    xn = ln(x, p["ln1_w"][0], p["ln1_b"][0])
    qkv = xn @ p["qkv_w"] + p["qkv_b"][0]
    q, k, v = jnp.split(qkv, 3, axis=-1)
    q = q.reshape(B, N, heads, hd).transpose(0, 2, 1, 3)
    k = k.reshape(B, N, heads, hd).transpose(0, 2, 1, 3)
    v = v.reshape(B, N, heads, hd).transpose(0, 2, 1, 3)
    attn = jax.nn.softmax((q @ jnp.swapaxes(k, -1, -2)) * hd ** -0.5, axis=-1)
    y = (attn @ v).transpose(0, 2, 1, 3).reshape(B, N, C)
    y = y @ p["proj_w"] + p["proj_b"][0]
    x1 = x + y
    xn2 = ln(x1, p["ln2_w"][0], p["ln2_b"][0])
    h = xn2 @ p["fc1_w"] + p["fc1_b"][0]
    h = 0.5 * h * (1.0 + jax.lax.erf(h / math.sqrt(2.0)))
    h = h @ p["fc2_w"] + p["fc2_b"][0]
    return x1 + h


if __name__ == "__main__":
    B, N, dim, heads, mlp_dim = 2, 8, 32, 4, 64

    key = jax.random.PRNGKey(0)
    kx, kp = jax.random.split(key)
    x = jax.random.normal(kx, (B, N, dim), jnp.float32)
    params = init_params(kp, dim, mlp_dim)

    out = vit_block(x, params, heads)
    out = jax.block_until_ready(out)

    ref = jax.block_until_ready(vit_block_ref(x, params, heads))
    assert out.shape == (B, N, dim)
    # bf16 matmul operands + approximate reciprocal -> modest tolerance vs fp32 ref
    assert jnp.allclose(out, ref, atol=2e-2, rtol=2e-2), "mismatch vs JAX reference"

    print("KERNEL_OK")
</pallas_src>

<mosaic_0001>
module attributes {stable_mosaic.version = 11 : i64} {
  func.func @_block_kernel(%arg0: i32, %arg1: memref<1x8x32xf32, #tpu.memory_space<vmem>>, %arg2: memref<1x32xf32, #tpu.memory_space<vmem>>, %arg3: memref<1x32xf32, #tpu.memory_space<vmem>>, %arg4: memref<32x96xbf16, #tpu.memory_space<vmem>>, %arg5: memref<1x96xf32, #tpu.memory_space<vmem>>, %arg6: memref<4x8x32xbf16, #tpu.memory_space<vmem>>, %arg7: memref<1x32xf32, #tpu.memory_space<vmem>>, %arg8: memref<1x32xf32, #tpu.memory_space<vmem>>, %arg9: memref<1x32xf32, #tpu.memory_space<vmem>>, %arg10: memref<32x64xbf16, #tpu.memory_space<vmem>>, %arg11: memref<1x64xf32, #tpu.memory_space<vmem>>, %arg12: memref<64x32xbf16, #tpu.memory_space<vmem>>, %arg13: memref<1x32xf32, #tpu.memory_space<vmem>>, %arg14: memref<1x8x32xf32, #tpu.memory_space<vmem>>) attributes {dimension_semantics = [#tpu.dimension_semantics<parallel>], iteration_bounds = array<i64: 2>, scalar_prefetch = 0 : i64, scratch_operands = 0 : i64, tpu.core_type = #tpu.core_type<tc>, window_params = [{transform_indices = @transform_0, window_bounds = array<i64: 1, 8, 32>}, {pipeline_mode = #tpu.pipeline_mode<synchronous>, transform_indices = @transform_1, window_bounds = array<i64: 1, 32>}, {pipeline_mode = #tpu.pipeline_mode<synchronous>, transform_indices = @transform_2, window_bounds = array<i64: 1, 32>}, {pipeline_mode = #tpu.pipeline_mode<synchronous>, transform_indices = @transform_3, window_bounds = array<i64: 32, 96>}, {pipeline_mode = #tpu.pipeline_mode<synchronous>, transform_indices = @transform_4, window_bounds = array<i64: 1, 96>}, {pipeline_mode = #tpu.pipeline_mode<synchronous>, transform_indices = @transform_5, window_bounds = array<i64: 4, 8, 32>}, {pipeline_mode = #tpu.pipeline_mode<synchronous>, transform_indices = @transform_6, window_bounds = array<i64: 1, 32>}, {pipeline_mode = #tpu.pipeline_mode<synchronous>, transform_indices = @transform_7, window_bounds = array<i64: 1, 32>}, {pipeline_mode = #tpu.pipeline_mode<synchronous>, transform_indices = @transform_8, window_bounds = array<i64: 1, 32>}, {pipeline_mode = #tpu.pipeline_mode<synchronous>, transform_indices = @transform_9, window_bounds = array<i64: 32, 64>}, {pipeline_mode = #tpu.pipeline_mode<synchronous>, transform_indices = @transform_10, window_bounds = array<i64: 1, 64>}, {pipeline_mode = #tpu.pipeline_mode<synchronous>, transform_indices = @transform_11, window_bounds = array<i64: 64, 32>}, {pipeline_mode = #tpu.pipeline_mode<synchronous>, transform_indices = @transform_12, window_bounds = array<i64: 1, 32>}, {transform_indices = @transform_13, window_bounds = array<i64: 1, 8, 32>}]} {
    %c0 = arith.constant 0 : index
    %c0_0 = arith.constant 0 : index
    %c0_1 = arith.constant 0 : index
    %0 = vector.load %arg1[%c0, %c0_0, %c0_1] : memref<1x8x32xf32, #tpu.memory_space<vmem>>, vector<1x8x32xf32>
    %1 = vector.shape_cast %0 : vector<1x8x32xf32> to vector<8x32xf32>
    %c0_2 = arith.constant 0 : index
    %c0_3 = arith.constant 0 : index
    %2 = vector.load %arg2[%c0_2, %c0_3] : memref<1x32xf32, #tpu.memory_space<vmem>>, vector<1x32xf32>
    %3 = vector.shape_cast %2 : vector<1x32xf32> to vector<32xf32>
    %c0_4 = arith.constant 0 : index
    %c0_5 = arith.constant 0 : index
    %4 = vector.load %arg3[%c0_4, %c0_5] : memref<1x32xf32, #tpu.memory_space<vmem>>, vector<1x32xf32>
    %5 = vector.shape_cast %4 : vector<1x32xf32> to vector<32xf32>
    %cst = arith.constant dense<0.000000e+00> : vector<8xf32>
    %6 = vector.multi_reduction <add>, %1, %cst [1] : vector<8x32xf32> to vector<8xf32>
    %7 = vector.shape_cast %6 : vector<8xf32> to vector<8x1xf32>
    %cst_6 = arith.constant 3.200000e+01 : f32
    %8 = vector.broadcast %cst_6 : f32 to vector<8x1xf32>
    %9 = arith.divf %7, %8 : vector<8x1xf32>
    %10 = vector.broadcast %9 : vector<8x1xf32> to vector<8x32xf32>
    %11 = arith.subf %1, %10 : vector<8x32xf32>
    %12 = arith.mulf %11, %11 : vector<8x32xf32>
    %cst_7 = arith.constant dense<0.000000e+00> : vector<8xf32>
    %13 = vector.multi_reduction <add>, %12, %cst_7 [1] : vector<8x32xf32> to vector<8xf32>
    %14 = vector.shape_cast %13 : vector<8xf32> to vector<8x1xf32>
    %cst_8 = arith.constant 3.200000e+01 : f32
    %15 = vector.broadcast %cst_8 : f32 to vector<8x1xf32>
    %16 = arith.divf %14, %15 : vector<8x1xf32>
    %17 = vector.broadcast %9 : vector<8x1xf32> to vector<8x32xf32>
    %18 = arith.subf %1, %17 : vector<8x32xf32>
    %cst_9 = arith.constant 9.99999974E-6 : f32
    %19 = vector.broadcast %cst_9 : f32 to vector<8x1xf32>
    %20 = arith.addf %16, %19 : vector<8x1xf32>
    %21 = math.rsqrt %20 : vector<8x1xf32>
    %22 = vector.broadcast %21 : vector<8x1xf32> to vector<8x32xf32>
    %23 = arith.mulf %18, %22 : vector<8x32xf32>
    %24 = vector.shape_cast %3 : vector<32xf32> to vector<1x32xf32>
    %25 = vector.broadcast %24 : vector<1x32xf32> to vector<8x32xf32>
    %26 = arith.mulf %23, %25 : vector<8x32xf32>
    %27 = vector.shape_cast %5 : vector<32xf32> to vector<1x32xf32>
    %28 = vector.broadcast %27 : vector<1x32xf32> to vector<8x32xf32>
    %29 = arith.addf %26, %28 : vector<8x32xf32>
    %30 = arith.truncf %29 : vector<8x32xf32> to vector<8x32xbf16>
    %c0_10 = arith.constant 0 : index
    %c0_11 = arith.constant 0 : index
    %31 = vector.load %arg4[%c0_10, %c0_11] : memref<32x96xbf16, #tpu.memory_space<vmem>>, vector<32x96xbf16>
    %cst_12 = arith.constant dense<0.000000e+00> : vector<8x96xf32>
    %32 = tpu.matmul %30, %31, %cst_12 {dimension_numbers = #tpu.dot_dimension_numbers<[1], [0], [0], [1], [0, 0, 1, 1], [], []>} : vector<8x32xbf16>, vector<32x96xbf16>, vector<8x96xf32> -> vector<8x96xf32>
    %c0_13 = arith.constant 0 : index
    %c0_14 = arith.constant 0 : index
    %33 = vector.load %arg5[%c0_13, %c0_14] : memref<1x96xf32, #tpu.memory_space<vmem>>, vector<1x96xf32>
    %34 = vector.shape_cast %33 : vector<1x96xf32> to vector<96xf32>
    %35 = vector.shape_cast %34 : vector<96xf32> to vector<1x96xf32>
    %36 = vector.broadcast %35 : vector<1x96xf32> to vector<8x96xf32>
    %37 = arith.addf %32, %36 : vector<8x96xf32>
    %38 = vector.extract_strided_slice %37 {offsets = [0, 0], sizes = [8, 8], strides = [1, 1]} : vector<8x96xf32> to vector<8x8xf32>
    %39 = arith.truncf %38 : vector<8x8xf32> to vector<8x8xbf16>
    %40 = vector.extract_strided_slice %37 {offsets = [0, 32], sizes = [8, 8], strides = [1, 1]} : vector<8x96xf32> to vector<8x8xf32>
    %41 = arith.truncf %40 : vector<8x8xf32> to vector<8x8xbf16>
    %42 = vector.extract_strided_slice %37 {offsets = [0, 64], sizes = [8, 8], strides = [1, 1]} : vector<8x96xf32> to vector<8x8xf32>
    %43 = arith.truncf %42 : vector<8x8xf32> to vector<8x8xbf16>
    %cst_15 = arith.constant dense<0.000000e+00> : vector<8x8xf32>
    %44 = tpu.matmul %39, %41, %cst_15 {dimension_numbers = #tpu.dot_dimension_numbers<[1], [1], [0], [0], [0, 0, 1, 0], [], []>} : vector<8x8xbf16>, vector<8x8xbf16>, vector<8x8xf32> -> vector<8x8xf32>
    %cst_16 = arith.constant dense<0xFF800000> : vector<8xf32>
    %45 = vector.multi_reduction <maximumf>, %44, %cst_16 [1] : vector<8x8xf32> to vector<8xf32>
    %46 = vector.shape_cast %45 : vector<8xf32> to vector<8x1xf32>
    %47 = vector.broadcast %46 : vector<8x1xf32> to vector<8x8xf32>
    %48 = arith.subf %44, %47 : vector<8x8xf32>
    %49 = math.exp %48 : vector<8x8xf32>
    %cst_17 = arith.constant dense<0.000000e+00> : vector<8xf32>
    %50 = vector.multi_reduction <add>, %49, %cst_17 [1] : vector<8x8xf32> to vector<8xf32>
    %51 = vector.shape_cast %50 : vector<8xf32> to vector<8x1xf32>
    %52 = tpu.reciprocal %51 {approx = true} : vector<8x1xf32> -> vector<8x1xf32>
    %53 = vector.broadcast %52 : vector<8x1xf32> to vector<8x8xf32>
    %54 = arith.mulf %49, %53 : vector<8x8xf32>
    %55 = arith.truncf %54 : vector<8x8xf32> to vector<8x8xbf16>
    %cst_18 = arith.constant dense<0.000000e+00> : vector<8x8xf32>
    %56 = tpu.matmul %55, %43, %cst_18 {dimension_numbers = #tpu.dot_dimension_numbers<[1], [0], [0], [1], [0, 0, 1, 1], [], []>} : vector<8x8xbf16>, vector<8x8xbf16>, vector<8x8xf32> -> vector<8x8xf32>
    %57 = arith.truncf %56 : vector<8x8xf32> to vector<8x8xbf16>
    %c0_19 = arith.constant 0 : index
    %c0_20 = arith.constant 0 : index
    %c0_21 = arith.constant 0 : index
    %58 = vector.load %arg6[%c0_19, %c0_20, %c0_21] : memref<4x8x32xbf16, #tpu.memory_space<vmem>>, vector<1x8x32xbf16>
    %59 = vector.shape_cast %58 : vector<1x8x32xbf16> to vector<8x32xbf16>
    %cst_22 = arith.constant dense<0.000000e+00> : vector<8x32xf32>
    %60 = tpu.matmul %57, %59, %cst_22 {dimension_numbers = #tpu.dot_dimension_numbers<[1], [0], [0], [1], [0, 0, 1, 1], [], []>} : vector<8x8xbf16>, vector<8x32xbf16>, vector<8x32xf32> -> vector<8x32xf32>
    %61 = vector.extract_strided_slice %37 {offsets = [0, 8], sizes = [8, 8], strides = [1, 1]} : vector<8x96xf32> to vector<8x8xf32>
    %62 = arith.truncf %61 : vector<8x8xf32> to vector<8x8xbf16>
    %63 = vector.extract_strided_slice %37 {offsets = [0, 40], sizes = [8, 8], strides = [1, 1]} : vector<8x96xf32> to vector<8x8xf32>
    %64 = arith.truncf %63 : vector<8x8xf32> to vector<8x8xbf16>
    %65 = vector.extract_strided_slice %37 {offsets = [0, 72], sizes = [8, 8], strides = [1, 1]} : vector<8x96xf32> to vector<8x8xf32>
    %66 = arith.truncf %65 : vector<8x8xf32> to vector<8x8xbf16>
    %cst_23 = arith.constant dense<0.000000e+00> : vector<8x8xf32>
    %67 = tpu.matmul %62, %64, %cst_23 {dimension_numbers = #tpu.dot_dimension_numbers<[1], [1], [0], [0], [0, 0, 1, 0], [], []>} : vector<8x8xbf16>, vector<8x8xbf16>, vector<8x8xf32> -> vector<8x8xf32>
    %cst_24 = arith.constant dense<0xFF800000> : vector<8xf32>
    %68 = vector.multi_reduction <maximumf>, %67, %cst_24 [1] : vector<8x8xf32> to vector<8xf32>
    %69 = vector.shape_cast %68 : vector<8xf32> to vector<8x1xf32>
    %70 = vector.broadcast %69 : vector<8x1xf32> to vector<8x8xf32>
    %71 = arith.subf %67, %70 : vector<8x8xf32>
    %72 = math.exp %71 : vector<8x8xf32>
    %cst_25 = arith.constant dense<0.000000e+00> : vector<8xf32>
    %73 = vector.multi_reduction <add>, %72, %cst_25 [1] : vector<8x8xf32> to vector<8xf32>
    %74 = vector.shape_cast %73 : vector<8xf32> to vector<8x1xf32>
    %75 = tpu.reciprocal %74 {approx = true} : vector<8x1xf32> -> vector<8x1xf32>
    %76 = vector.broadcast %75 : vector<8x1xf32> to vector<8x8xf32>
    %77 = arith.mulf %72, %76 : vector<8x8xf32>
    %78 = arith.truncf %77 : vector<8x8xf32> to vector<8x8xbf16>
    %cst_26 = arith.constant dense<0.000000e+00> : vector<8x8xf32>
    %79 = tpu.matmul %78, %66, %cst_26 {dimension_numbers = #tpu.dot_dimension_numbers<[1], [0], [0], [1], [0, 0, 1, 1], [], []>} : vector<8x8xbf16>, vector<8x8xbf16>, vector<8x8xf32> -> vector<8x8xf32>
    %80 = arith.truncf %79 : vector<8x8xf32> to vector<8x8xbf16>
    %c1 = arith.constant 1 : index
    %c0_27 = arith.constant 0 : index
    %c0_28 = arith.constant 0 : index
    %81 = vector.load %arg6[%c1, %c0_27, %c0_28] : memref<4x8x32xbf16, #tpu.memory_space<vmem>>, vector<1x8x32xbf16>
    %82 = vector.shape_cast %81 : vector<1x8x32xbf16> to vector<8x32xbf16>
    %cst_29 = arith.constant dense<0.000000e+00> : vector<8x32xf32>
    %83 = tpu.matmul %80, %82, %cst_29 {dimension_numbers = #tpu.dot_dimension_numbers<[1], [0], [0], [1], [0, 0, 1, 1], [], []>} : vector<8x8xbf16>, vector<8x32xbf16>, vector<8x32xf32> -> vector<8x32xf32>
    %84 = arith.addf %60, %83 : vector<8x32xf32>
    %85 = vector.extract_strided_slice %37 {offsets = [0, 16], sizes = [8, 8], strides = [1, 1]} : vector<8x96xf32> to vector<8x8xf32>
    %86 = arith.truncf %85 : vector<8x8xf32> to vector<8x8xbf16>
    %87 = vector.extract_strided_slice %37 {offsets = [0, 48], sizes = [8, 8], strides = [1, 1]} : vector<8x96xf32> to vector<8x8xf32>
    %88 = arith.truncf %87 : vector<8x8xf32> to vector<8x8xbf16>
    %89 = vector.extract_strided_slice %37 {offsets = [0, 80], sizes = [8, 8], strides = [1, 1]} : vector<8x96xf32> to vector<8x8xf32>
    %90 = arith.truncf %89 : vector<8x8xf32> to vector<8x8xbf16>
    %cst_30 = arith.constant dense<0.000000e+00> : vector<8x8xf32>
    %91 = tpu.matmul %86, %88, %cst_30 {dimension_numbers = #tpu.dot_dimension_numbers<[1], [1], [0], [0], [0, 0, 1, 0], [], []>} : vector<8x8xbf16>, vector<8x8xbf16>, vector<8x8xf32> -> vector<8x8xf32>
    %cst_31 = arith.constant dense<0xFF800000> : vector<8xf32>
    %92 = vector.multi_reduction <maximumf>, %91, %cst_31 [1] : vector<8x8xf32> to vector<8xf32>
    %93 = vector.shape_cast %92 : vector<8xf32> to vector<8x1xf32>
    %94 = vector.broadcast %93 : vector<8x1xf32> to vector<8x8xf32>
    %95 = arith.subf %91, %94 : vector<8x8xf32>
    %96 = math.exp %95 : vector<8x8xf32>
    %cst_32 = arith.constant dense<0.000000e+00> : vector<8xf32>
    %97 = vector.multi_reduction <add>, %96, %cst_32 [1] : vector<8x8xf32> to vector<8xf32>
    %98 = vector.shape_cast %97 : vector<8xf32> to vector<8x1xf32>
    %99 = tpu.reciprocal %98 {approx = true} : vector<8x1xf32> -> vector<8x1xf32>
    %100 = vector.broadcast %99 : vector<8x1xf32> to vector<8x8xf32>
    %101 = arith.mulf %96, %100 : vector<8x8xf32>
    %102 = arith.truncf %101 : vector<8x8xf32> to vector<8x8xbf16>
    %cst_33 = arith.constant dense<0.000000e+00> : vector<8x8xf32>
    %103 = tpu.matmul %102, %90, %cst_33 {dimension_numbers = #tpu.dot_dimension_numbers<[1], [0], [0], [1], [0, 0, 1, 1], [], []>} : vector<8x8xbf16>, vector<8x8xbf16>, vector<8x8xf32> -> vector<8x8xf32>
    %104 = arith.truncf %103 : vector<8x8xf32> to vector<8x8xbf16>
    %c2 = arith.constant 2 : index
    %c0_34 = arith.constant 0 : index
    %c0_35 = arith.constant 0 : index
    %105 = vector.load %arg6[%c2, %c0_34, %c0_35] : memref<4x8x32xbf16, #tpu.memory_space<vmem>>, vector<1x8x32xbf16>
    %106 = vector.shape_cast %105 : vector<1x8x32xbf16> to vector<8x32xbf16>
    %cst_36 = arith.constant dense<0.000000e+00> : vector<8x32xf32>
    %107 = tpu.matmul %104, %106, %cst_36 {dimension_numbers = #tpu.dot_dimension_numbers<[1], [0], [0], [1], [0, 0, 1, 1], [], []>} : vector<8x8xbf16>, vector<8x32xbf16>, vector<8x32xf32> -> vector<8x32xf32>
    %108 = arith.addf %84, %107 : vector<8x32xf32>
    %109 = vector.extract_strided_slice %37 {offsets = [0, 24], sizes = [8, 8], strides = [1, 1]} : vector<8x96xf32> to vector<8x8xf32>
    %110 = arith.truncf %109 : vector<8x8xf32> to vector<8x8xbf16>
    %111 = vector.extract_strided_slice %37 {offsets = [0, 56], sizes = [8, 8], strides = [1, 1]} : vector<8x96xf32> to vector<8x8xf32>
    %112 = arith.truncf %111 : vector<8x8xf32> to vector<8x8xbf16>
    %113 = vector.extract_strided_slice %37 {offsets = [0, 88], sizes = [8, 8], strides = [1, 1]} : vector<8x96xf32> to vector<8x8xf32>
    %114 = arith.truncf %113 : vector<8x8xf32> to vector<8x8xbf16>
    %cst_37 = arith.constant dense<0.000000e+00> : vector<8x8xf32>
    %115 = tpu.matmul %110, %112, %cst_37 {dimension_numbers = #tpu.dot_dimension_numbers<[1], [1], [0], [0], [0, 0, 1, 0], [], []>} : vector<8x8xbf16>, vector<8x8xbf16>, vector<8x8xf32> -> vector<8x8xf32>
    %cst_38 = arith.constant dense<0xFF800000> : vector<8xf32>
    %116 = vector.multi_reduction <maximumf>, %115, %cst_38 [1] : vector<8x8xf32> to vector<8xf32>
    %117 = vector.shape_cast %116 : vector<8xf32> to vector<8x1xf32>
    %118 = vector.broadcast %117 : vector<8x1xf32> to vector<8x8xf32>
    %119 = arith.subf %115, %118 : vector<8x8xf32>
    %120 = math.exp %119 : vector<8x8xf32>
    %cst_39 = arith.constant dense<0.000000e+00> : vector<8xf32>
    %121 = vector.multi_reduction <add>, %120, %cst_39 [1] : vector<8x8xf32> to vector<8xf32>
    %122 = vector.shape_cast %121 : vector<8xf32> to vector<8x1xf32>
    %123 = tpu.reciprocal %122 {approx = true} : vector<8x1xf32> -> vector<8x1xf32>
    %124 = vector.broadcast %123 : vector<8x1xf32> to vector<8x8xf32>
    %125 = arith.mulf %120, %124 : vector<8x8xf32>
    %126 = arith.truncf %125 : vector<8x8xf32> to vector<8x8xbf16>
    %cst_40 = arith.constant dense<0.000000e+00> : vector<8x8xf32>
    %127 = tpu.matmul %126, %114, %cst_40 {dimension_numbers = #tpu.dot_dimension_numbers<[1], [0], [0], [1], [0, 0, 1, 1], [], []>} : vector<8x8xbf16>, vector<8x8xbf16>, vector<8x8xf32> -> vector<8x8xf32>
    %128 = arith.truncf %127 : vector<8x8xf32> to vector<8x8xbf16>
    %c3 = arith.constant 3 : index
    %c0_41 = arith.constant 0 : index
    %c0_42 = arith.constant 0 : index
    %129 = vector.load %arg6[%c3, %c0_41, %c0_42] : memref<4x8x32xbf16, #tpu.memory_space<vmem>>, vector<1x8x32xbf16>
    %130 = vector.shape_cast %129 : vector<1x8x32xbf16> to vector<8x32xbf16>
    %cst_43 = arith.constant dense<0.000000e+00> : vector<8x32xf32>
    %131 = tpu.matmul %128, %130, %cst_43 {dimension_numbers = #tpu.dot_dimension_numbers<[1], [0], [0], [1], [0, 0, 1, 1], [], []>} : vector<8x8xbf16>, vector<8x32xbf16>, vector<8x32xf32> -> vector<8x32xf32>
    %132 = arith.addf %108, %131 : vector<8x32xf32>
    %133 = arith.addf %1, %132 : vector<8x32xf32>
    %c0_44 = arith.constant 0 : index
    %c0_45 = arith.constant 0 : index
    %134 = vector.load %arg7[%c0_44, %c0_45] : memref<1x32xf32, #tpu.memory_space<vmem>>, vector<1x32xf32>
    %135 = vector.shape_cast %134 : vector<1x32xf32> to vector<32xf32>
    %136 = vector.shape_cast %135 : vector<32xf32> to vector<1x32xf32>
    %137 = vector.broadcast %136 : vector<1x32xf32> to vector<8x32xf32>
    %138 = arith.addf %133, %137 : vector<8x32xf32>
    %c0_46 = arith.constant 0 : index
    %c0_47 = arith.constant 0 : index
    %139 = vector.load %arg8[%c0_46, %c0_47] : memref<1x32xf32, #tpu.memory_space<vmem>>, vector<1x32xf32>
    %140 = vector.shape_cast %139 : vector<1x32xf32> to vector<32xf32>
    %c0_48 = arith.constant 0 : index
    %c0_49 = arith.constant 0 : index
    %141 = vector.load %arg9[%c0_48, %c0_49] : memref<1x32xf32, #tpu.memory_space<vmem>>, vector<1x32xf32>
    %142 = vector.shape_cast %141 : vector<1x32xf32> to vector<32xf32>
    %cst_50 = arith.constant dense<0.000000e+00> : vector<8xf32>
    %143 = vector.multi_reduction <add>, %138, %cst_50 [1] : vector<8x32xf32> to vector<8xf32>
    %144 = vector.shape_cast %143 : vector<8xf32> to vector<8x1xf32>
    %cst_51 = arith.constant 3.200000e+01 : f32
    %145 = vector.broadcast %cst_51 : f32 to vector<8x1xf32>
    %146 = arith.divf %144, %145 : vector<8x1xf32>
    %147 = vector.broadcast %146 : vector<8x1xf32> to vector<8x32xf32>
    %148 = arith.subf %138, %147 : vector<8x32xf32>
    %149 = arith.mulf %148, %148 : vector<8x32xf32>
    %cst_52 = arith.constant dense<0.000000e+00> : vector<8xf32>
    %150 = vector.multi_reduction <add>, %149, %cst_52 [1] : vector<8x32xf32> to vector<8xf32>
    %151 = vector.shape_cast %150 : vector<8xf32> to vector<8x1xf32>
    %cst_53 = arith.constant 3.200000e+01 : f32
    %152 = vector.broadcast %cst_53 : f32 to vector<8x1xf32>
    %153 = arith.divf %151, %152 : vector<8x1xf32>
    %154 = vector.broadcast %146 : vector<8x1xf32> to vector<8x32xf32>
    %155 = arith.subf %138, %154 : vector<8x32xf32>
    %cst_54 = arith.constant 9.99999974E-6 : f32
    %156 = vector.broadcast %cst_54 : f32 to vector<8x1xf32>
    %157 = arith.addf %153, %156 : vector<8x1xf32>
    %158 = math.rsqrt %157 : vector<8x1xf32>
    %159 = vector.broadcast %158 : vector<8x1xf32> to vector<8x32xf32>
    %160 = arith.mulf %155, %159 : vector<8x32xf32>
    %161 = vector.shape_cast %140 : vector<32xf32> to vector<1x32xf32>
    %162 = vector.broadcast %161 : vector<1x32xf32> to vector<8x32xf32>
    %163 = arith.mulf %160, %162 : vector<8x32xf32>
    %164 = vector.shape_cast %142 : vector<32xf32> to vector<1x32xf32>
    %165 = vector.broadcast %164 : vector<1x32xf32> to vector<8x32xf32>
    %166 = arith.addf %163, %165 : vector<8x32xf32>
    %167 = arith.truncf %166 : vector<8x32xf32> to vector<8x32xbf16>
    %c0_55 = arith.constant 0 : index
    %c0_56 = arith.constant 0 : index
    %168 = vector.load %arg10[%c0_55, %c0_56] : memref<32x64xbf16, #tpu.memory_space<vmem>>, vector<32x64xbf16>
    %cst_57 = arith.constant dense<0.000000e+00> : vector<8x64xf32>
    %169 = tpu.matmul %167, %168, %cst_57 {dimension_numbers = #tpu.dot_dimension_numbers<[1], [0], [0], [1], [0, 0, 1, 1], [], []>} : vector<8x32xbf16>, vector<32x64xbf16>, vector<8x64xf32> -> vector<8x64xf32>
    %c0_58 = arith.constant 0 : index
    %c0_59 = arith.constant 0 : index
    %170 = vector.load %arg11[%c0_58, %c0_59] : memref<1x64xf32, #tpu.memory_space<vmem>>, vector<1x64xf32>
    %171 = vector.shape_cast %170 : vector<1x64xf32> to vector<64xf32>
    %172 = vector.shape_cast %171 : vector<64xf32> to vector<1x64xf32>
    %173 = vector.broadcast %172 : vector<1x64xf32> to vector<8x64xf32>
    %174 = arith.addf %169, %173 : vector<8x64xf32>
    %cst_60 = arith.constant 5.000000e-01 : f32
    %175 = vector.broadcast %cst_60 : f32 to vector<8x64xf32>
    %176 = arith.mulf %175, %174 : vector<8x64xf32>
    %cst_61 = arith.constant 0.707106769 : f32
    %177 = vector.broadcast %cst_61 : f32 to vector<8x64xf32>
    %178 = arith.mulf %174, %177 : vector<8x64xf32>
    %179 = math.erf %178 : vector<8x64xf32>
    %cst_62 = arith.constant 1.000000e+00 : f32
    %180 = vector.broadcast %cst_62 : f32 to vector<8x64xf32>
    %181 = arith.addf %180, %179 : vector<8x64xf32>
    %182 = arith.mulf %176, %181 : vector<8x64xf32>
    %183 = arith.truncf %182 : vector<8x64xf32> to vector<8x64xbf16>
    %c0_63 = arith.constant 0 : index
    %c0_64 = arith.constant 0 : index
    %184 = vector.load %arg12[%c0_63, %c0_64] : memref<64x32xbf16, #tpu.memory_space<vmem>>, vector<64x32xbf16>
    %cst_65 = arith.constant dense<0.000000e+00> : vector<8x32xf32>
    %185 = tpu.matmul %183, %184, %cst_65 {dimension_numbers = #tpu.dot_dimension_numbers<[1], [0], [0], [1], [0, 0, 1, 1], [], []>} : vector<8x64xbf16>, vector<64x32xbf16>, vector<8x32xf32> -> vector<8x32xf32>
    %c0_66 = arith.constant 0 : index
    %c0_67 = arith.constant 0 : index
    %186 = vector.load %arg13[%c0_66, %c0_67] : memref<1x32xf32, #tpu.memory_space<vmem>>, vector<1x32xf32>
    %187 = vector.shape_cast %186 : vector<1x32xf32> to vector<32xf32>
    %188 = vector.shape_cast %187 : vector<32xf32> to vector<1x32xf32>
    %189 = vector.broadcast %188 : vector<1x32xf32> to vector<8x32xf32>
    %190 = arith.addf %185, %189 : vector<8x32xf32>
    %191 = arith.addf %138, %190 : vector<8x32xf32>
    %c0_68 = arith.constant 0 : index
    %c0_69 = arith.constant 0 : index
    %c0_70 = arith.constant 0 : index
    %192 = vector.load %arg14[%c0_68, %c0_69, %c0_70] : memref<1x8x32xf32, #tpu.memory_space<vmem>>, vector<1x8x32xf32>
    %193 = vector.shape_cast %192 : vector<1x8x32xf32> to vector<8x32xf32>
    %194 = vector.shape_cast %191 : vector<8x32xf32> to vector<1x8x32xf32>
    tpu.vector_store %arg14[%c0_68, %c0_69, %c0_70], %194 {strides = array<i32>} : memref<1x8x32xf32, #tpu.memory_space<vmem>>, vector<1x8x32xf32>,
    return
  }
  func.func @transform_0(%arg0: i32) -> (i32, i32, i32) {
    %c0_i32 = arith.constant 0 : i32
    %c0_i32_0 = arith.constant 0 : i32
    %c0_i32_1 = arith.constant 0 : i32
    return %arg0, %c0_i32, %c0_i32_0 : i32, i32, i32
  }
  func.func @transform_1(%arg0: i32) -> (i32, i32) {
    %c0_i32 = arith.constant 0 : i32
    %c0_i32_0 = arith.constant 0 : i32
    %c0_i32_1 = arith.constant 0 : i32
    return %c0_i32, %c0_i32_0 : i32, i32
  }
  func.func @transform_2(%arg0: i32) -> (i32, i32) {
    %c0_i32 = arith.constant 0 : i32
    %c0_i32_0 = arith.constant 0 : i32
    %c0_i32_1 = arith.constant 0 : i32
    return %c0_i32, %c0_i32_0 : i32, i32
  }
  func.func @transform_3(%arg0: i32) -> (i32, i32) {
    %c0_i32 = arith.constant 0 : i32
    %c0_i32_0 = arith.constant 0 : i32
    %c0_i32_1 = arith.constant 0 : i32
    return %c0_i32, %c0_i32_0 : i32, i32
  }
  func.func @transform_4(%arg0: i32) -> (i32, i32) {
    %c0_i32 = arith.constant 0 : i32
    %c0_i32_0 = arith.constant 0 : i32
    %c0_i32_1 = arith.constant 0 : i32
    return %c0_i32, %c0_i32_0 : i32, i32
  }
  func.func @transform_5(%arg0: i32) -> (i32, i32, i32) {
    %c0_i32 = arith.constant 0 : i32
    %c0_i32_0 = arith.constant 0 : i32
    %c0_i32_1 = arith.constant 0 : i32
    %c0_i32_2 = arith.constant 0 : i32
    return %c0_i32, %c0_i32_0, %c0_i32_1 : i32, i32, i32
  }
  func.func @transform_6(%arg0: i32) -> (i32, i32) {
    %c0_i32 = arith.constant 0 : i32
    %c0_i32_0 = arith.constant 0 : i32
    %c0_i32_1 = arith.constant 0 : i32
    return %c0_i32, %c0_i32_0 : i32, i32
  }
  func.func @transform_7(%arg0: i32) -> (i32, i32) {
    %c0_i32 = arith.constant 0 : i32
    %c0_i32_0 = arith.constant 0 : i32
    %c0_i32_1 = arith.constant 0 : i32
    return %c0_i32, %c0_i32_0 : i32, i32
  }
  func.func @transform_8(%arg0: i32) -> (i32, i32) {
    %c0_i32 = arith.constant 0 : i32
    %c0_i32_0 = arith.constant 0 : i32
    %c0_i32_1 = arith.constant 0 : i32
    return %c0_i32, %c0_i32_0 : i32, i32
  }
  func.func @transform_9(%arg0: i32) -> (i32, i32) {
    %c0_i32 = arith.constant 0 : i32
    %c0_i32_0 = arith.constant 0 : i32
    %c0_i32_1 = arith.constant 0 : i32
    return %c0_i32, %c0_i32_0 : i32, i32
  }
  func.func @transform_10(%arg0: i32) -> (i32, i32) {
    %c0_i32 = arith.constant 0 : i32
    %c0_i32_0 = arith.constant 0 : i32
    %c0_i32_1 = arith.constant 0 : i32
    return %c0_i32, %c0_i32_0 : i32, i32
  }
  func.func @transform_11(%arg0: i32) -> (i32, i32) {
    %c0_i32 = arith.constant 0 : i32
    %c0_i32_0 = arith.constant 0 : i32
    %c0_i32_1 = arith.constant 0 : i32
    return %c0_i32, %c0_i32_0 : i32, i32
  }
  func.func @transform_12(%arg0: i32) -> (i32, i32) {
    %c0_i32 = arith.constant 0 : i32
    %c0_i32_0 = arith.constant 0 : i32
    %c0_i32_1 = arith.constant 0 : i32
    return %c0_i32, %c0_i32_0 : i32, i32
  }
  func.func @transform_13(%arg0: i32) -> (i32, i32, i32) {
    %c0_i32 = arith.constant 0 : i32
    %c0_i32_0 = arith.constant 0 : i32
    %c0_i32_1 = arith.constant 0 : i32
    return %arg0, %c0_i32, %c0_i32_0 : i32, i32, i32
  }
}

module attributes {stable_mosaic.version = 11 : i64} {
  func.func @_block_kernel(%arg0: i32, %arg1: memref<1x8x32xf32, #tpu.memory_space<vmem>>, %arg2: memref<1x32xf32, #tpu.memory_space<vmem>>, %arg3: memref<1x32xf32, #tpu.memory_space<vmem>>, %arg4: memref<32x96xbf16, #tpu.memory_space<vmem>>, %arg5: memref<1x96xf32, #tpu.memory_space<vmem>>, %arg6: memref<4x8x32xbf16, #tpu.memory_space<vmem>>, %arg7: memref<1x32xf32, #tpu.memory_space<vmem>>, %arg8: memref<1x32xf32, #tpu.memory_space<vmem>>, %arg9: memref<1x32xf32, #tpu.memory_space<vmem>>, %arg10: memref<32x64xbf16, #tpu.memory_space<vmem>>, %arg11: memref<1x64xf32, #tpu.memory_space<vmem>>, %arg12: memref<64x32xbf16, #tpu.memory_space<vmem>>, %arg13: memref<1x32xf32, #tpu.memory_space<vmem>>, %arg14: memref<1x8x32xf32, #tpu.memory_space<vmem>>) attributes {dimension_semantics = [#tpu.dimension_semantics<parallel>], iteration_bounds = array<i64: 2>, scalar_prefetch = 0 : i64, scratch_operands = 0 : i64, tpu.core_type = #tpu.core_type<tc>, window_params = [{transform_indices = @transform_0, window_bounds = array<i64: 1, 8, 32>}, {pipeline_mode = #tpu.pipeline_mode<synchronous>, transform_indices = @transform_1, window_bounds = array<i64: 1, 32>}, {pipeline_mode = #tpu.pipeline_mode<synchronous>, transform_indices = @transform_2, window_bounds = array<i64: 1, 32>}, {pipeline_mode = #tpu.pipeline_mode<synchronous>, transform_indices = @transform_3, window_bounds = array<i64: 32, 96>}, {pipeline_mode = #tpu.pipeline_mode<synchronous>, transform_indices = @transform_4, window_bounds = array<i64: 1, 96>}, {pipeline_mode = #tpu.pipeline_mode<synchronous>, transform_indices = @transform_5, window_bounds = array<i64: 4, 8, 32>}, {pipeline_mode = #tpu.pipeline_mode<synchronous>, transform_indices = @transform_6, window_bounds = array<i64: 1, 32>}, {pipeline_mode = #tpu.pipeline_mode<synchronous>, transform_indices = @transform_7, window_bounds = array<i64: 1, 32>}, {pipeline_mode = #tpu.pipeline_mode<synchronous>, transform_indices = @transform_8, window_bounds = array<i64: 1, 32>}, {pipeline_mode = #tpu.pipeline_mode<synchronous>, transform_indices = @transform_9, window_bounds = array<i64: 32, 64>}, {pipeline_mode = #tpu.pipeline_mode<synchronous>, transform_indices = @transform_10, window_bounds = array<i64: 1, 64>}, {pipeline_mode = #tpu.pipeline_mode<synchronous>, transform_indices = @transform_11, window_bounds = array<i64: 64, 32>}, {pipeline_mode = #tpu.pipeline_mode<synchronous>, transform_indices = @transform_12, window_bounds = array<i64: 1, 32>}, {transform_indices = @transform_13, window_bounds = array<i64: 1, 8, 32>}]} {
    %c0 = arith.constant 0 : index
    %c0_0 = arith.constant 0 : index
    %c0_1 = arith.constant 0 : index
    %0 = vector.load %arg1[%c0, %c0_0, %c0_1] : memref<1x8x32xf32, #tpu.memory_space<vmem>>, vector<1x8x32xf32>
    %1 = vector.shape_cast %0 : vector<1x8x32xf32> to vector<8x32xf32>
    %c0_2 = arith.constant 0 : index
    %c0_3 = arith.constant 0 : index
    %2 = vector.load %arg2[%c0_2, %c0_3] : memref<1x32xf32, #tpu.memory_space<vmem>>, vector<1x32xf32>
    %3 = vector.shape_cast %2 : vector<1x32xf32> to vector<32xf32>
    %c0_4 = arith.constant 0 : index
    %c0_5 = arith.constant 0 : index
    %4 = vector.load %arg3[%c0_4, %c0_5] : memref<1x32xf32, #tpu.memory_space<vmem>>, vector<1x32xf32>
    %5 = vector.shape_cast %4 : vector<1x32xf32> to vector<32xf32>
    %cst = arith.constant dense<0.000000e+00> : vector<8xf32>
    %6 = vector.multi_reduction <add>, %1, %cst [1] : vector<8x32xf32> to vector<8xf32>
    %7 = vector.shape_cast %6 : vector<8xf32> to vector<8x1xf32>
    %cst_6 = arith.constant 3.200000e+01 : f32
    %8 = vector.broadcast %cst_6 : f32 to vector<8x1xf32>
    %9 = arith.divf %7, %8 : vector<8x1xf32>
    %10 = vector.broadcast %9 : vector<8x1xf32> to vector<8x32xf32>
    %11 = arith.subf %1, %10 : vector<8x32xf32>
    %12 = arith.mulf %11, %11 : vector<8x32xf32>
    %cst_7 = arith.constant dense<0.000000e+00> : vector<8xf32>
    %13 = vector.multi_reduction <add>, %12, %cst_7 [1] : vector<8x32xf32> to vector<8xf32>
    %14 = vector.shape_cast %13 : vector<8xf32> to vector<8x1xf32>
    %cst_8 = arith.constant 3.200000e+01 : f32
    %15 = vector.broadcast %cst_8 : f32 to vector<8x1xf32>
    %16 = arith.divf %14, %15 : vector<8x1xf32>
    %17 = vector.broadcast %9 : vector<8x1xf32> to vector<8x32xf32>
    %18 = arith.subf %1, %17 : vector<8x32xf32>
    %cst_9 = arith.constant 9.99999974E-6 : f32
    %19 = vector.broadcast %cst_9 : f32 to vector<8x1xf32>
    %20 = arith.addf %16, %19 : vector<8x1xf32>
    %21 = math.rsqrt %20 : vector<8x1xf32>
    %22 = vector.broadcast %21 : vector<8x1xf32> to vector<8x32xf32>
    %23 = arith.mulf %18, %22 : vector<8x32xf32>
    %24 = vector.shape_cast %3 : vector<32xf32> to vector<1x32xf32>
    %25 = vector.broadcast %24 : vector<1x32xf32> to vector<8x32xf32>
    %26 = arith.mulf %23, %25 : vector<8x32xf32>
    %27 = vector.shape_cast %5 : vector<32xf32> to vector<1x32xf32>
    %28 = vector.broadcast %27 : vector<1x32xf32> to vector<8x32xf32>
    %29 = arith.addf %26, %28 : vector<8x32xf32>
    %30 = arith.truncf %29 : vector<8x32xf32> to vector<8x32xbf16>
    %c0_10 = arith.constant 0 : index
    %c0_11 = arith.constant 0 : index
    %31 = vector.load %arg4[%c0_10, %c0_11] : memref<32x96xbf16, #tpu.memory_space<vmem>>, vector<32x96xbf16>
    %cst_12 = arith.constant dense<0.000000e+00> : vector<8x96xf32>
    %32 = tpu.matmul %30, %31, %cst_12 {dimension_numbers = #tpu.dot_dimension_numbers<[1], [0], [0], [1], [0, 0, 1, 1], [], []>} : vector<8x32xbf16>, vector<32x96xbf16>, vector<8x96xf32> -> vector<8x96xf32>
    %c0_13 = arith.constant 0 : index
    %c0_14 = arith.constant 0 : index
    %33 = vector.load %arg5[%c0_13, %c0_14] : memref<1x96xf32, #tpu.memory_space<vmem>>, vector<1x96xf32>
    %34 = vector.shape_cast %33 : vector<1x96xf32> to vector<96xf32>
    %35 = vector.shape_cast %34 : vector<96xf32> to vector<1x96xf32>
    %36 = vector.broadcast %35 : vector<1x96xf32> to vector<8x96xf32>
    %37 = arith.addf %32, %36 : vector<8x96xf32>
    %38 = vector.extract_strided_slice %37 {offsets = [0, 0], sizes = [8, 8], strides = [1, 1]} : vector<8x96xf32> to vector<8x8xf32>
    %39 = arith.truncf %38 : vector<8x8xf32> to vector<8x8xbf16>
    %40 = vector.extract_strided_slice %37 {offsets = [0, 32], sizes = [8, 8], strides = [1, 1]} : vector<8x96xf32> to vector<8x8xf32>
    %41 = arith.truncf %40 : vector<8x8xf32> to vector<8x8xbf16>
    %42 = vector.extract_strided_slice %37 {offsets = [0, 64], sizes = [8, 8], strides = [1, 1]} : vector<8x96xf32> to vector<8x8xf32>
    %43 = arith.truncf %42 : vector<8x8xf32> to vector<8x8xbf16>
    %cst_15 = arith.constant dense<0.000000e+00> : vector<8x8xf32>
    %44 = tpu.matmul %39, %41, %cst_15 {dimension_numbers = #tpu.dot_dimension_numbers<[1], [1], [0], [0], [0, 0, 1, 0], [], []>} : vector<8x8xbf16>, vector<8x8xbf16>, vector<8x8xf32> -> vector<8x8xf32>
    %cst_16 = arith.constant dense<0xFF800000> : vector<8xf32>
    %45 = vector.multi_reduction <maximumf>, %44, %cst_16 [1] : vector<8x8xf32> to vector<8xf32>
    %46 = vector.shape_cast %45 : vector<8xf32> to vector<8x1xf32>
    %47 = vector.broadcast %46 : vector<8x1xf32> to vector<8x8xf32>
    %48 = arith.subf %44, %47 : vector<8x8xf32>
    %49 = math.exp %48 : vector<8x8xf32>
    %cst_17 = arith.constant dense<0.000000e+00> : vector<8xf32>
    %50 = vector.multi_reduction <add>, %49, %cst_17 [1] : vector<8x8xf32> to vector<8xf32>
    %51 = vector.shape_cast %50 : vector<8xf32> to vector<8x1xf32>
    %52 = tpu.reciprocal %51 {approx = true} : vector<8x1xf32> -> vector<8x1xf32>
    %53 = vector.broadcast %52 : vector<8x1xf32> to vector<8x8xf32>
    %54 = arith.mulf %49, %53 : vector<8x8xf32>
    %55 = arith.truncf %54 : vector<8x8xf32> to vector<8x8xbf16>
    %cst_18 = arith.constant dense<0.000000e+00> : vector<8x8xf32>
    %56 = tpu.matmul %55, %43, %cst_18 {dimension_numbers = #tpu.dot_dimension_numbers<[1], [0], [0], [1], [0, 0, 1, 1], [], []>} : vector<8x8xbf16>, vector<8x8xbf16>, vector<8x8xf32> -> vector<8x8xf32>
    %57 = arith.truncf %56 : vector<8x8xf32> to vector<8x8xbf16>
    %c0_19 = arith.constant 0 : index
    %c0_20 = arith.constant 0 : index
    %c0_21 = arith.constant 0 : index
    %58 = vector.load %arg6[%c0_19, %c0_20, %c0_21] : memref<4x8x32xbf16, #tpu.memory_space<vmem>>, vector<1x8x32xbf16>
    %59 = vector.shape_cast %58 : vector<1x8x32xbf16> to vector<8x32xbf16>
    %cst_22 = arith.constant dense<0.000000e+00> : vector<8x32xf32>
    %60 = tpu.matmul %57, %59, %cst_22 {dimension_numbers = #tpu.dot_dimension_numbers<[1], [0], [0], [1], [0, 0, 1, 1], [], []>} : vector<8x8xbf16>, vector<8x32xbf16>, vector<8x32xf32> -> vector<8x32xf32>
    %61 = vector.extract_strided_slice %37 {offsets = [0, 8], sizes = [8, 8], strides = [1, 1]} : vector<8x96xf32> to vector<8x8xf32>
    %62 = arith.truncf %61 : vector<8x8xf32> to vector<8x8xbf16>
    %63 = vector.extract_strided_slice %37 {offsets = [0, 40], sizes = [8, 8], strides = [1, 1]} : vector<8x96xf32> to vector<8x8xf32>
    %64 = arith.truncf %63 : vector<8x8xf32> to vector<8x8xbf16>
    %65 = vector.extract_strided_slice %37 {offsets = [0, 72], sizes = [8, 8], strides = [1, 1]} : vector<8x96xf32> to vector<8x8xf32>
    %66 = arith.truncf %65 : vector<8x8xf32> to vector<8x8xbf16>
    %cst_23 = arith.constant dense<0.000000e+00> : vector<8x8xf32>
    %67 = tpu.matmul %62, %64, %cst_23 {dimension_numbers = #tpu.dot_dimension_numbers<[1], [1], [0], [0], [0, 0, 1, 0], [], []>} : vector<8x8xbf16>, vector<8x8xbf16>, vector<8x8xf32> -> vector<8x8xf32>
    %cst_24 = arith.constant dense<0xFF800000> : vector<8xf32>
    %68 = vector.multi_reduction <maximumf>, %67, %cst_24 [1] : vector<8x8xf32> to vector<8xf32>
    %69 = vector.shape_cast %68 : vector<8xf32> to vector<8x1xf32>
    %70 = vector.broadcast %69 : vector<8x1xf32> to vector<8x8xf32>
    %71 = arith.subf %67, %70 : vector<8x8xf32>
    %72 = math.exp %71 : vector<8x8xf32>
    %cst_25 = arith.constant dense<0.000000e+00> : vector<8xf32>
    %73 = vector.multi_reduction <add>, %72, %cst_25 [1] : vector<8x8xf32> to vector<8xf32>
    %74 = vector.shape_cast %73 : vector<8xf32> to vector<8x1xf32>
    %75 = tpu.reciprocal %74 {approx = true} : vector<8x1xf32> -> vector<8x1xf32>
    %76 = vector.broadcast %75 : vector<8x1xf32> to vector<8x8xf32>
    %77 = arith.mulf %72, %76 : vector<8x8xf32>
    %78 = arith.truncf %77 : vector<8x8xf32> to vector<8x8xbf16>
    %cst_26 = arith.constant dense<0.000000e+00> : vector<8x8xf32>
    %79 = tpu.matmul %78, %66, %cst_26 {dimension_numbers = #tpu.dot_dimension_numbers<[1], [0], [0], [1], [0, 0, 1, 1], [], []>} : vector<8x8xbf16>, vector<8x8xbf16>, vector<8x8xf32> -> vector<8x8xf32>
    %80 = arith.truncf %79 : vector<8x8xf32> to vector<8x8xbf16>
    %c1 = arith.constant 1 : index
    %c0_27 = arith.constant 0 : index
    %c0_28 = arith.constant 0 : index
    %81 = vector.load %arg6[%c1, %c0_27, %c0_28] : memref<4x8x32xbf16, #tpu.memory_space<vmem>>, vector<1x8x32xbf16>
    %82 = vector.shape_cast %81 : vector<1x8x32xbf16> to vector<8x32xbf16>
    %cst_29 = arith.constant dense<0.000000e+00> : vector<8x32xf32>
    %83 = tpu.matmul %80, %82, %cst_29 {dimension_numbers = #tpu.dot_dimension_numbers<[1], [0], [0], [1], [0, 0, 1, 1], [], []>} : vector<8x8xbf16>, vector<8x32xbf16>, vector<8x32xf32> -> vector<8x32xf32>
    %84 = arith.addf %60, %83 : vector<8x32xf32>
    %85 = vector.extract_strided_slice %37 {offsets = [0, 16], sizes = [8, 8], strides = [1, 1]} : vector<8x96xf32> to vector<8x8xf32>
    %86 = arith.truncf %85 : vector<8x8xf32> to vector<8x8xbf16>
    %87 = vector.extract_strided_slice %37 {offsets = [0, 48], sizes = [8, 8], strides = [1, 1]} : vector<8x96xf32> to vector<8x8xf32>
    %88 = arith.truncf %87 : vector<8x8xf32> to vector<8x8xbf16>
    %89 = vector.extract_strided_slice %37 {offsets = [0, 80], sizes = [8, 8], strides = [1, 1]} : vector<8x96xf32> to vector<8x8xf32>
    %90 = arith.truncf %89 : vector<8x8xf32> to vector<8x8xbf16>
    %cst_30 = arith.constant dense<0.000000e+00> : vector<8x8xf32>
    %91 = tpu.matmul %86, %88, %cst_30 {dimension_numbers = #tpu.dot_dimension_numbers<[1], [1], [0], [0], [0, 0, 1, 0], [], []>} : vector<8x8xbf16>, vector<8x8xbf16>, vector<8x8xf32> -> vector<8x8xf32>
    %cst_31 = arith.constant dense<0xFF800000> : vector<8xf32>
    %92 = vector.multi_reduction <maximumf>, %91, %cst_31 [1] : vector<8x8xf32> to vector<8xf32>
    %93 = vector.shape_cast %92 : vector<8xf32> to vector<8x1xf32>
    %94 = vector.broadcast %93 : vector<8x1xf32> to vector<8x8xf32>
    %95 = arith.subf %91, %94 : vector<8x8xf32>
    %96 = math.exp %95 : vector<8x8xf32>
    %cst_32 = arith.constant dense<0.000000e+00> : vector<8xf32>
    %97 = vector.multi_reduction <add>, %96, %cst_32 [1] : vector<8x8xf32> to vector<8xf32>
    %98 = vector.shape_cast %97 : vector<8xf32> to vector<8x1xf32>
    %99 = tpu.reciprocal %98 {approx = true} : vector<8x1xf32> -> vector<8x1xf32>
    %100 = vector.broadcast %99 : vector<8x1xf32> to vector<8x8xf32>
    %101 = arith.mulf %96, %100 : vector<8x8xf32>
    %102 = arith.truncf %101 : vector<8x8xf32> to vector<8x8xbf16>
    %cst_33 = arith.constant dense<0.000000e+00> : vector<8x8xf32>
    %103 = tpu.matmul %102, %90, %cst_33 {dimension_numbers = #tpu.dot_dimension_numbers<[1], [0], [0], [1], [0, 0, 1, 1], [], []>} : vector<8x8xbf16>, vector<8x8xbf16>, vector<8x8xf32> -> vector<8x8xf32>
    %104 = arith.truncf %103 : vector<8x8xf32> to vector<8x8xbf16>
    %c2 = arith.constant 2 : index
    %c0_34 = arith.constant 0 : index
    %c0_35 = arith.constant 0 : index
    %105 = vector.load %arg6[%c2, %c0_34, %c0_35] : memref<4x8x32xbf16, #tpu.memory_space<vmem>>, vector<1x8x32xbf16>
    %106 = vector.shape_cast %105 : vector<1x8x32xbf16> to vector<8x32xbf16>
    %cst_36 = arith.constant dense<0.000000e+00> : vector<8x32xf32>
    %107 = tpu.matmul %104, %106, %cst_36 {dimension_numbers = #tpu.dot_dimension_numbers<[1], [0], [0], [1], [0, 0, 1, 1], [], []>} : vector<8x8xbf16>, vector<8x32xbf16>, vector<8x32xf32> -> vector<8x32xf32>
    %108 = arith.addf %84, %107 : vector<8x32xf32>
    %109 = vector.extract_strided_slice %37 {offsets = [0, 24], sizes = [8, 8], strides = [1, 1]} : vector<8x96xf32> to vector<8x8xf32>
    %110 = arith.truncf %109 : vector<8x8xf32> to vector<8x8xbf16>
    %111 = vector.extract_strided_slice %37 {offsets = [0, 56], sizes = [8, 8], strides = [1, 1]} : vector<8x96xf32> to vector<8x8xf32>
    %112 = arith.truncf %111 : vector<8x8xf32> to vector<8x8xbf16>
    %113 = vector.extract_strided_slice %37 {offsets = [0, 88], sizes = [8, 8], strides = [1, 1]} : vector<8x96xf32> to vector<8x8xf32>
    %114 = arith.truncf %113 : vector<8x8xf32> to vector<8x8xbf16>
    %cst_37 = arith.constant dense<0.000000e+00> : vector<8x8xf32>
    %115 = tpu.matmul %110, %112, %cst_37 {dimension_numbers = #tpu.dot_dimension_numbers<[1], [1], [0], [0], [0, 0, 1, 0], [], []>} : vector<8x8xbf16>, vector<8x8xbf16>, vector<8x8xf32> -> vector<8x8xf32>
    %cst_38 = arith.constant dense<0xFF800000> : vector<8xf32>
    %116 = vector.multi_reduction <maximumf>, %115, %cst_38 [1] : vector<8x8xf32> to vector<8xf32>
    %117 = vector.shape_cast %116 : vector<8xf32> to vector<8x1xf32>
    %118 = vector.broadcast %117 : vector<8x1xf32> to vector<8x8xf32>
    %119 = arith.subf %115, %118 : vector<8x8xf32>
    %120 = math.exp %119 : vector<8x8xf32>
    %cst_39 = arith.constant dense<0.000000e+00> : vector<8xf32>
    %121 = vector.multi_reduction <add>, %120, %cst_39 [1] : vector<8x8xf32> to vector<8xf32>
    %122 = vector.shape_cast %121 : vector<8xf32> to vector<8x1xf32>
    %123 = tpu.reciprocal %122 {approx = true} : vector<8x1xf32> -> vector<8x1xf32>
    %124 = vector.broadcast %123 : vector<8x1xf32> to vector<8x8xf32>
    %125 = arith.mulf %120, %124 : vector<8x8xf32>
    %126 = arith.truncf %125 : vector<8x8xf32> to vector<8x8xbf16>
    %cst_40 = arith.constant dense<0.000000e+00> : vector<8x8xf32>
    %127 = tpu.matmul %126, %114, %cst_40 {dimension_numbers = #tpu.dot_dimension_numbers<[1], [0], [0], [1], [0, 0, 1, 1], [], []>} : vector<8x8xbf16>, vector<8x8xbf16>, vector<8x8xf32> -> vector<8x8xf32>
    %128 = arith.truncf %127 : vector<8x8xf32> to vector<8x8xbf16>
    %c3 = arith.constant 3 : index
    %c0_41 = arith.constant 0 : index
    %c0_42 = arith.constant 0 : index
    %129 = vector.load %arg6[%c3, %c0_41, %c0_42] : memref<4x8x32xbf16, #tpu.memory_space<vmem>>, vector<1x8x32xbf16>
    %130 = vector.shape_cast %129 : vector<1x8x32xbf16> to vector<8x32xbf16>
    %cst_43 = arith.constant dense<0.000000e+00> : vector<8x32xf32>
    %131 = tpu.matmul %128, %130, %cst_43 {dimension_numbers = #tpu.dot_dimension_numbers<[1], [0], [0], [1], [0, 0, 1, 1], [], []>} : vector<8x8xbf16>, vector<8x32xbf16>, vector<8x32xf32> -> vector<8x32xf32>
    %132 = arith.addf %108, %131 : vector<8x32xf32>
    %133 = arith.addf %1, %132 : vector<8x32xf32>
    %c0_44 = arith.constant 0 : index
    %c0_45 = arith.constant 0 : index
    %134 = vector.load %arg7[%c0_44, %c0_45] : memref<1x32xf32, #tpu.memory_space<vmem>>, vector<1x32xf32>
    %135 = vector.shape_cast %134 : vector<1x32xf32> to vector<32xf32>
    %136 = vector.shape_cast %135 : vector<32xf32> to vector<1x32xf32>
    %137 = vector.broadcast %136 : vector<1x32xf32> to vector<8x32xf32>
    %138 = arith.addf %133, %137 : vector<8x32xf32>
    %c0_46 = arith.constant 0 : index
    %c0_47 = arith.constant 0 : index
    %139 = vector.load %arg8[%c0_46, %c0_47] : memref<1x32xf32, #tpu.memory_space<vmem>>, vector<1x32xf32>
    %140 = vector.shape_cast %139 : vector<1x32xf32> to vector<32xf32>
    %c0_48 = arith.constant 0 : index
    %c0_49 = arith.constant 0 : index
    %141 = vector.load %arg9[%c0_48, %c0_49] : memref<1x32xf32, #tpu.memory_space<vmem>>, vector<1x32xf32>
    %142 = vector.shape_cast %141 : vector<1x32xf32> to vector<32xf32>
    %cst_50 = arith.constant dense<0.000000e+00> : vector<8xf32>
    %143 = vector.multi_reduction <add>, %138, %cst_50 [1] : vector<8x32xf32> to vector<8xf32>
    %144 = vector.shape_cast %143 : vector<8xf32> to vector<8x1xf32>
    %cst_51 = arith.constant 3.200000e+01 : f32
    %145 = vector.broadcast %cst_51 : f32 to vector<8x1xf32>
    %146 = arith.divf %144, %145 : vector<8x1xf32>
    %147 = vector.broadcast %146 : vector<8x1xf32> to vector<8x32xf32>
    %148 = arith.subf %138, %147 : vector<8x32xf32>
    %149 = arith.mulf %148, %148 : vector<8x32xf32>
    %cst_52 = arith.constant dense<0.000000e+00> : vector<8xf32>
    %150 = vector.multi_reduction <add>, %149, %cst_52 [1] : vector<8x32xf32> to vector<8xf32>
    %151 = vector.shape_cast %150 : vector<8xf32> to vector<8x1xf32>
    %cst_53 = arith.constant 3.200000e+01 : f32
    %152 = vector.broadcast %cst_53 : f32 to vector<8x1xf32>
    %153 = arith.divf %151, %152 : vector<8x1xf32>
    %154 = vector.broadcast %146 : vector<8x1xf32> to vector<8x32xf32>
    %155 = arith.subf %138, %154 : vector<8x32xf32>
    %cst_54 = arith.constant 9.99999974E-6 : f32
    %156 = vector.broadcast %cst_54 : f32 to vector<8x1xf32>
    %157 = arith.addf %153, %156 : vector<8x1xf32>
    %158 = math.rsqrt %157 : vector<8x1xf32>
    %159 = vector.broadcast %158 : vector<8x1xf32> to vector<8x32xf32>
    %160 = arith.mulf %155, %159 : vector<8x32xf32>
    %161 = vector.shape_cast %140 : vector<32xf32> to vector<1x32xf32>
    %162 = vector.broadcast %161 : vector<1x32xf32> to vector<8x32xf32>
    %163 = arith.mulf %160, %162 : vector<8x32xf32>
    %164 = vector.shape_cast %142 : vector<32xf32> to vector<1x32xf32>
    %165 = vector.broadcast %164 : vector<1x32xf32> to vector<8x32xf32>
    %166 = arith.addf %163, %165 : vector<8x32xf32>
    %167 = arith.truncf %166 : vector<8x32xf32> to vector<8x32xbf16>
    %c0_55 = arith.constant 0 : index
    %c0_56 = arith.constant 0 : index
    %168 = vector.load %arg10[%c0_55, %c0_56] : memref<32x64xbf16, #tpu.memory_space<vmem>>, vector<32x64xbf16>
    %cst_57 = arith.constant dense<0.000000e+00> : vector<8x64xf32>
    %169 = tpu.matmul %167, %168, %cst_57 {dimension_numbers = #tpu.dot_dimension_numbers<[1], [0], [0], [1], [0, 0, 1, 1], [], []>} : vector<8x32xbf16>, vector<32x64xbf16>, vector<8x64xf32> -> vector<8x64xf32>
    %c0_58 = arith.constant 0 : index
    %c0_59 = arith.constant 0 : index
    %170 = vector.load %arg11[%c0_58, %c0_59] : memref<1x64xf32, #tpu.memory_space<vmem>>, vector<1x64xf32>
    %171 = vector.shape_cast %170 : vector<1x64xf32> to vector<64xf32>
    %172 = vector.shape_cast %171 : vector<64xf32> to vector<1x64xf32>
    %173 = vector.broadcast %172 : vector<1x64xf32> to vector<8x64xf32>
    %174 = arith.addf %169, %173 : vector<8x64xf32>
    %cst_60 = arith.constant 5.000000e-01 : f32
    %175 = vector.broadcast %cst_60 : f32 to vector<8x64xf32>
    %176 = arith.mulf %175, %174 : vector<8x64xf32>
    %cst_61 = arith.constant 0.707106769 : f32
    %177 = vector.broadcast %cst_61 : f32 to vector<8x64xf32>
    %178 = arith.mulf %174, %177 : vector<8x64xf32>
    %179 = math.erf %178 : vector<8x64xf32>
    %cst_62 = arith.constant 1.000000e+00 : f32
    %180 = vector.broadcast %cst_62 : f32 to vector<8x64xf32>
    %181 = arith.addf %180, %179 : vector<8x64xf32>
    %182 = arith.mulf %176, %181 : vector<8x64xf32>
    %183 = arith.truncf %182 : vector<8x64xf32> to vector<8x64xbf16>
    %c0_63 = arith.constant 0 : index
    %c0_64 = arith.constant 0 : index
    %184 = vector.load %arg12[%c0_63, %c0_64] : memref<64x32xbf16, #tpu.memory_space<vmem>>, vector<64x32xbf16>
    %cst_65 = arith.constant dense<0.000000e+00> : vector<8x32xf32>
    %185 = tpu.matmul %183, %184, %cst_65 {dimension_numbers = #tpu.dot_dimension_numbers<[1], [0], [0], [1], [0, 0, 1, 1], [], []>} : vector<8x64xbf16>, vector<64x32xbf16>, vector<8x32xf32> -> vector<8x32xf32>
    %c0_66 = arith.constant 0 : index
    %c0_67 = arith.constant 0 : index
    %186 = vector.load %arg13[%c0_66, %c0_67] : memref<1x32xf32, #tpu.memory_space<vmem>>, vector<1x32xf32>
    %187 = vector.shape_cast %186 : vector<1x32xf32> to vector<32xf32>
    %188 = vector.shape_cast %187 : vector<32xf32> to vector<1x32xf32>
    %189 = vector.broadcast %188 : vector<1x32xf32> to vector<8x32xf32>
    %190 = arith.addf %185, %189 : vector<8x32xf32>
    %191 = arith.addf %138, %190 : vector<8x32xf32>
    %c0_68 = arith.constant 0 : index
    %c0_69 = arith.constant 0 : index
    %c0_70 = arith.constant 0 : index
    %192 = vector.load %arg14[%c0_68, %c0_69, %c0_70] : memref<1x8x32xf32, #tpu.memory_space<vmem>>, vector<1x8x32xf32>
    %193 = vector.shape_cast %192 : vector<1x8x32xf32> to vector<8x32xf32>
    %194 = vector.shape_cast %191 : vector<8x32xf32> to vector<1x8x32xf32>
    tpu.vector_store %arg14[%c0_68, %c0_69, %c0_70], %194 {strides = array<i32>} : memref<1x8x32xf32, #tpu.memory_space<vmem>>, vector<1x8x32xf32>,
    return
  }
  func.func @transform_0(%arg0: i32) -> (i32, i32, i32) {
    %c0_i32 = arith.constant 0 : i32
    %c0_i32_0 = arith.constant 0 : i32
    %c0_i32_1 = arith.constant 0 : i32
    return %arg0, %c0_i32, %c0_i32_0 : i32, i32, i32
  }
  func.func @transform_1(%arg0: i32) -> (i32, i32) {
    %c0_i32 = arith.constant 0 : i32
    %c0_i32_0 = arith.constant 0 : i32
    %c0_i32_1 = arith.constant 0 : i32
    return %c0_i32, %c0_i32_0 : i32, i32
  }
  func.func @transform_2(%arg0: i32) -> (i32, i32) {
    %c0_i32 = arith.constant 0 : i32
    %c0_i32_0 = arith.constant 0 : i32
    %c0_i32_1 = arith.constant 0 : i32
    return %c0_i32, %c0_i32_0 : i32, i32
  }
  func.func @transform_3(%arg0: i32) -> (i32, i32) {
    %c0_i32 = arith.constant 0 : i32
    %c0_i32_0 = arith.constant 0 : i32
    %c0_i32_1 = arith.constant 0 : i32
    return %c0_i32, %c0_i32_0 : i32, i32
  }
  func.func @transform_4(%arg0: i32) -> (i32, i32) {
    %c0_i32 = arith.constant 0 : i32
    %c0_i32_0 = arith.constant 0 : i32
    %c0_i32_1 = arith.constant 0 : i32
    return %c0_i32, %c0_i32_0 : i32, i32
  }
  func.func @transform_5(%arg0: i32) -> (i32, i32, i32) {
    %c0_i32 = arith.constant 0 : i32
    %c0_i32_0 = arith.constant 0 : i32
    %c0_i32_1 = arith.constant 0 : i32
    %c0_i32_2 = arith.constant 0 : i32
    return %c0_i32, %c0_i32_0, %c0_i32_1 : i32, i32, i32
  }
  func.func @transform_6(%arg0: i32) -> (i32, i32) {
    %c0_i32 = arith.constant 0 : i32
    %c0_i32_0 = arith.constant 0 : i32
    %c0_i32_1 = arith.constant 0 : i32
    return %c0_i32, %c0_i32_0 : i32, i32
  }
  func.func @transform_7(%arg0: i32) -> (i32, i32) {
    %c0_i32 = arith.constant 0 : i32
    %c0_i32_0 = arith.constant 0 : i32
    %c0_i32_1 = arith.constant 0 : i32
    return %c0_i32, %c0_i32_0 : i32, i32
  }
  func.func @transform_8(%arg0: i32) -> (i32, i32) {
    %c0_i32 = arith.constant 0 : i32
    %c0_i32_0 = arith.constant 0 : i32
    %c0_i32_1 = arith.constant 0 : i32
    return %c0_i32, %c0_i32_0 : i32, i32
  }
  func.func @transform_9(%arg0: i32) -> (i32, i32) {
    %c0_i32 = arith.constant 0 : i32
    %c0_i32_0 = arith.constant 0 : i32
    %c0_i32_1 = arith.constant 0 : i32
    return %c0_i32, %c0_i32_0 : i32, i32
  }
  func.func @transform_10(%arg0: i32) -> (i32, i32) {
    %c0_i32 = arith.constant 0 : i32
    %c0_i32_0 = arith.constant 0 : i32
    %c0_i32_1 = arith.constant 0 : i32
    return %c0_i32, %c0_i32_0 : i32, i32
  }
  func.func @transform_11(%arg0: i32) -> (i32, i32) {
    %c0_i32 = arith.constant 0 : i32
    %c0_i32_0 = arith.constant 0 : i32
    %c0_i32_1 = arith.constant 0 : i32
    return %c0_i32, %c0_i32_0 : i32, i32
  }
  func.func @transform_12(%arg0: i32) -> (i32, i32) {
    %c0_i32 = arith.constant 0 : i32
    %c0_i32_0 = arith.constant 0 : i32
    %c0_i32_1 = arith.constant 0 : i32
    return %c0_i32, %c0_i32_0 : i32, i32
  }
  func.func @transform_13(%arg0: i32) -> (i32, i32, i32) {
    %c0_i32 = arith.constant 0 : i32
    %c0_i32_0 = arith.constant 0 : i32
    %c0_i32_1 = arith.constant 0 : i32
    return %arg0, %c0_i32, %c0_i32_0 : i32, i32, i32
  }
}

</mosaic_0001>

<llo_original>
// kernel: tpu_custom_call.1
$region0: #{tpu_custom_call.1}
  #allocation0 [shape = 'u32[]', space=smem, size = 0x4, offset = 0x4, fixed_abs, tag = 'smem constant byte address 0x4 - core index']
  #allocation1 [shape = 'u32[144,128]{1,0:T(1,128)}', space=vmem, size = 0x12000, scoped, tag = 'internal scratch']
  %s0 = inlined_call_operand.vmem [shape: f32[2,8,32], index: 0, kind: input, shape index: {}]
  %s1 = inlined_call_operand.vmem [shape: f32[1,32], index: 1, kind: input, shape index: {}]
  %s2 = inlined_call_operand.vmem [shape: f32[1,32], index: 2, kind: input, shape index: {}]
  %s3 = inlined_call_operand.vmem [shape: bf16[32,96], index: 3, kind: input, shape index: {}]
  %s4 = inlined_call_operand.vmem [shape: f32[1,96], index: 4, kind: input, shape index: {}]
  %s5 = inlined_call_operand.vmem [shape: bf16[4,8,32], index: 5, kind: input, shape index: {}]
  %s6 = inlined_call_operand.vmem [shape: f32[1,32], index: 6, kind: input, shape index: {}]
  %s7 = inlined_call_operand.hbm [shape: f32[1,32], index: 7, kind: input, shape index: {}]
  %s8 = inlined_call_operand.hbm [shape: f32[1,32], index: 8, kind: input, shape index: {}]
  %s9 = inlined_call_operand.hbm [shape: bf16[32,64], index: 9, kind: input, shape index: {}]
  %s10 = inlined_call_operand.hbm [shape: f32[1,64], index: 10, kind: input, shape index: {}]
  %s11 = inlined_call_operand.vmem [shape: bf16[64,32], index: 11, kind: input, shape index: {}]
  %s12 = inlined_call_operand.vmem [shape: f32[1,32], index: 12, kind: input, shape index: {}]
  %s13 = inlined_call_operand.hbm [shape: f32[2,8,32], index: 13, kind: output, shape index: {}]
  %s14 = sld [smem:[#allocation0]]
  $region101: #{tpu_custom_call.1} parent=0
    _
  %s16 = ssub.s32 1, %s14
  %s17 = scalar_select 0, %s16, %s14
  $region1: #{tpu_custom_call.1} parent=0
    #allocation2 [shape = 'u8[512]{0}', space=vmem, size = 0x400, scoped, tag = 'input window, operand 7, single buffered']
    #allocation3 [shape = 's32[2]{0}', space=sflag, size = 0x8, scoped, tag = 'scoped memory for tpu_custom_call.1']
    #allocation4 [shape = 's32[2]{0}', space=sflag, size = 0x8, scoped, tag = 'scoped memory for tpu_custom_call.1']
    #allocation5 [shape = 'u8[512]{0}', space=vmem, size = 0x400, scoped, tag = 'input window, operand 8, single buffered']
    #allocation6 [shape = 's32[1]{0}', space=sflag, size = 0x4, scoped, tag = 'scoped memory for tpu_custom_call.1']
    #allocation7 [shape = 'u8[8192]{0}', space=vmem, size = 0x2000, scoped, tag = 'input window, operand 9, single buffered']
    #allocation8 [shape = 'u8[512]{0}', space=vmem, size = 0x400, scoped, tag = 'input window, operand 10, single buffered']
    #allocation9 [shape = 's32[1]{0}', space=sflag, size = 0x4, scoped, tag = 'scoped memory for tpu_custom_call.1']
    #allocation10 [shape = 'u8[8192]{0}', space=vmem, size = 0x2000, scoped, tag = 'output window, operand 0']
    %18 = vsyncpa [#allocation3], 0
    %19 = vsyncpa [#allocation6], 0
    %20 = vsyncpa [#allocation9], 0
    %21 = vsyncpa [#allocation4], 0
    %s22 = scalar_lea.sflag [#allocation4], 1
    %23 = vsyncpa %s22, 0
    loop: start=0, step=1, limit=4
    $region2: #{tpu_custom_call.1} parent=1 // loop_pre_header
      _
    $region3: #{tpu_custom_call.1} parent=1 // loop_header
      %s25 = sphi 0, %s29
      %p26 = scmp.ge.s32.totalorder %s25, 4
      %s35 = sphi 0, %s37
      %s38 = sphi 0, %s35
      %s39 = sphi 0, %s38
      %s55 = sphi 0, %s39
      %s59 = sphi 0, %s59
      %s61 = sphi 0, %s59
      %s62 = sphi 0, %s61
      %s76 = sphi 0, %s62
      %s80 = sphi 0, %s80
      %s82 = sphi 0, %s80
      %s83 = sphi 0, %s82
      %s97 = sphi 0, %s83
      %s101 = sphi 0, %s101
      %s103 = sphi 0, %s101
      %s104 = sphi 0, %s103
      %s118 = sphi 0, %s104
      %s122 = sphi 0, %s122
      %s124 = sphi 0, %s122
      %s125 = sphi 0, %s124
      %s139 = sphi 0, %s125
      %s143 = sphi 0, %s143
      %s145 = sphi 0, %s143
      %s146 = sphi 0, %s145
      %s160 = sphi 0, %s146
      %s164 = sphi 0, %s164
      %s166 = sphi 0, %s164
      %s167 = sphi 0, %s166
      %s181 = sphi 0, %s167
      %s185 = sphi 0, %s185
      %s187 = sphi 0, %s185
      %s188 = sphi 0, %s187
      %s202 = sphi 0, %s188
      %s206 = sphi 0, %s206
      %s208 = sphi 0, %s206
      %s209 = sphi 0, %s208
      %s223 = sphi 0, %s209
      %s227 = sphi 0, %s227
      %s229 = sphi 0, %s227
      %s230 = sphi 0, %s229
      %s244 = sphi 0, %s230
      %s248 = sphi 0, %s248
      %s250 = sphi 0, %s248
      %s251 = sphi 0, %s250
      %s265 = sphi 0, %s251
      %s269 = sphi 0, %s269
      %s271 = sphi 0, %s269
      %s272 = sphi 0, %s271
      %s286 = sphi 0, %s272
      %s290 = sphi 0, %s290
      %s292 = sphi 0, %s290
      %s293 = sphi 0, %s292
      %s307 = sphi 0, %s293
      %s313 = sphi 0, %s315
      %s316 = sphi 0, %s313
      %s317 = sphi 0, %s316
      %s333 = sphi 0, %s317
    $region4: #{tpu_custom_call.1} parent=1 // loop_header_branch
      %28 = sbr.rel (%p26) target = $region8
    $region5: #{tpu_custom_call.1} parent=1 // loop_body
      %s30 = ssub.s32 %s25, 1
      %s31 = ssub.s32 %s25, 2
      %s32 = sadd.s32 %s25, 1
      %s33 = ssub.s32 %s25, %s32
      %p34 = scmp.eq.s32.totalorder %s33, 0
      %s36 = sadd.s32 %s35, 1
      %s37 = scalar_select %p34, %s35, %s36
      %p40 = pneg %p34
      %p41 = scmp.eq.s32.totalorder %s25, 1
      %p42 = por %p40, %p41
      %p43 = scmp.ne.s32.totalorder %s35, %s38
      %p44 = scmp.eq.s32.totalorder %s25, 0
      %p45 = por %p43, %p44
      %p46 = scmp.ne.s32.totalorder %s35, %s38
      %p47 = scmp.eq.s32.totalorder %s30, 1
      %p48 = por %p46, %p47
      %p49 = scmp.ne.s32.totalorder %s38, %s39
      %p50 = scmp.eq.s32.totalorder %s30, 0
      %p51 = por %p49, %p50
      %p52 = scmp.ne.s32.totalorder %s38, %s39
      %p53 = scmp.eq.s32.totalorder %s31, 1
      %p54 = por %p52, %p53
      %p56 = scmp.ne.s32.totalorder %s39, %s55
      %p57 = scmp.eq.s32.totalorder %s31, 0
      %p58 = por %p56, %p57
      %s60 = sadd.s32 %s59, 1
      %p63 = scmp.eq.s32.totalorder %s25, 1
      %p64 = scmp.ne.s32.totalorder %s59, %s61
      %p65 = scmp.eq.s32.totalorder %s25, 0
      %p66 = por %p64, %p65
      %p67 = scmp.ne.s32.totalorder %s59, %s61
      %p68 = scmp.eq.s32.totalorder %s30, 1
      %p69 = por %p67, %p68
      %p70 = scmp.ne.s32.totalorder %s61, %s62
      %p71 = scmp.eq.s32.totalorder %s30, 0
      %p72 = por %p70, %p71
      %p73 = scmp.ne.s32.totalorder %s61, %s62
      %p74 = scmp.eq.s32.totalorder %s31, 1
      %p75 = por %p73, %p74
      %p77 = scmp.ne.s32.totalorder %s62, %s76
      %p78 = scmp.eq.s32.totalorder %s31, 0
      %p79 = por %p77, %p78
      %s81 = sadd.s32 %s80, 1
      %p84 = scmp.eq.s32.totalorder %s25, 1
      %p85 = scmp.ne.s32.totalorder %s80, %s82
      %p86 = scmp.eq.s32.totalorder %s25, 0
      %p87 = por %p85, %p86
      %p88 = scmp.ne.s32.totalorder %s80, %s82
      %p89 = scmp.eq.s32.totalorder %s30, 1
      %p90 = por %p88, %p89
      %p91 = scmp.ne.s32.totalorder %s82, %s83
      %p92 = scmp.eq.s32.totalorder %s30, 0
      %p93 = por %p91, %p92
      %p94 = scmp.ne.s32.totalorder %s82, %s83
      %p95 = scmp.eq.s32.totalorder %s31, 1
      %p96 = por %p94, %p95
      %p98 = scmp.ne.s32.totalorder %s83, %s97
      %p99 = scmp.eq.s32.totalorder %s31, 0
      %p100 = por %p98, %p99
      %s102 = sadd.s32 %s101, 1
      %p105 = scmp.eq.s32.totalorder %s25, 1
      %p106 = scmp.ne.s32.totalorder %s101, %s103
      %p107 = scmp.eq.s32.totalorder %s25, 0
      %p108 = por %p106, %p107
      %p109 = scmp.ne.s32.totalorder %s101, %s103
      %p110 = scmp.eq.s32.totalorder %s30, 1
      %p111 = por %p109, %p110
      %p112 = scmp.ne.s32.totalorder %s103, %s104
      %p113 = scmp.eq.s32.totalorder %s30, 0
      %p114 = por %p112, %p113
      %p115 = scmp.ne.s32.totalorder %s103, %s104
      %p116 = scmp.eq.s32.totalorder %s31, 1
      %p117 = por %p115, %p116
      %p119 = scmp.ne.s32.totalorder %s104, %s118
      %p120 = scmp.eq.s32.totalorder %s31, 0
      %p121 = por %p119, %p120
      %s123 = sadd.s32 %s122, 1
      %p126 = scmp.eq.s32.totalorder %s25, 1
      %p127 = scmp.ne.s32.totalorder %s122, %s124
      %p128 = scmp.eq.s32.totalorder %s25, 0
      %p129 = por %p127, %p128
      %p130 = scmp.ne.s32.totalorder %s122, %s124
      %p131 = scmp.eq.s32.totalorder %s30, 1
      %p132 = por %p130, %p131
      %p133 = scmp.ne.s32.totalorder %s124, %s125
      %p134 = scmp.eq.s32.totalorder %s30, 0
      %p135 = por %p133, %p134
      %p136 = scmp.ne.s32.totalorder %s124, %s125
      %p137 = scmp.eq.s32.totalorder %s31, 1
      %p138 = por %p136, %p137
      %p140 = scmp.ne.s32.totalorder %s125, %s139
      %p141 = scmp.eq.s32.totalorder %s31, 0
      %p142 = por %p140, %p141
      %s144 = sadd.s32 %s143, 1
      %p147 = scmp.eq.s32.totalorder %s25, 1
      %p148 = scmp.ne.s32.totalorder %s143, %s145
      %p149 = scmp.eq.s32.totalorder %s25, 0
      %p150 = por %p148, %p149
      %p151 = scmp.ne.s32.totalorder %s143, %s145
      %p152 = scmp.eq.s32.totalorder %s30, 1
      %p153 = por %p151, %p152
      %p154 = scmp.ne.s32.totalorder %s145, %s146
      %p155 = scmp.eq.s32.totalorder %s30, 0
      %p156 = por %p154, %p155
      %p157 = scmp.ne.s32.totalorder %s145, %s146
      %p158 = scmp.eq.s32.totalorder %s31, 1
      %p159 = por %p157, %p158
      %p161 = scmp.ne.s32.totalorder %s146, %s160
      %p162 = scmp.eq.s32.totalorder %s31, 0
      %p163 = por %p161, %p162
      %s165 = sadd.s32 %s164, 1
      %p168 = scmp.eq.s32.totalorder %s25, 1
      %p169 = scmp.ne.s32.totalorder %s164, %s166
      %p170 = scmp.eq.s32.totalorder %s25, 0
      %p171 = por %p169, %p170
      %p172 = scmp.ne.s32.totalorder %s164, %s166
      %p173 = scmp.eq.s32.totalorder %s30, 1
      %p174 = por %p172, %p173
      %p175 = scmp.ne.s32.totalorder %s166, %s167
      %p176 = scmp.eq.s32.totalorder %s30, 0
      %p177 = por %p175, %p176
      %p178 = scmp.ne.s32.totalorder %s166, %s167
      %p179 = scmp.eq.s32.totalorder %s31, 1
      %p180 = por %p178, %p179
      %p182 = scmp.ne.s32.totalorder %s167, %s181
      %p183 = scmp.eq.s32.totalorder %s31, 0
      %p184 = por %p182, %p183
      %s186 = sadd.s32 %s185, 1
      %p189 = scmp.eq.s32.totalorder %s25, 1
      %p190 = scmp.ne.s32.totalorder %s185, %s187
      %p191 = scmp.eq.s32.totalorder %s25, 0
      %p192 = por %p190, %p191
      %p193 = scmp.ne.s32.totalorder %s185, %s187
      %p194 = scmp.eq.s32.totalorder %s30, 1
      %p195 = por %p193, %p194
      %p196 = scmp.ne.s32.totalorder %s187, %s188
      %p197 = scmp.eq.s32.totalorder %s30, 0
      %p198 = por %p196, %p197
      %p199 = scmp.ne.s32.totalorder %s187, %s188
      %p200 = scmp.eq.s32.totalorder %s31, 1
      %p201 = por %p199, %p200
      %p203 = scmp.ne.s32.totalorder %s188, %s202
      %p204 = scmp.eq.s32.totalorder %s31, 0
      %p205 = por %p203, %p204
      %s207 = sadd.s32 %s206, 1
      %p210 = scmp.eq.s32.totalorder %s25, 1
      %p211 = scmp.ne.s32.totalorder %s206, %s208
      %p212 = scmp.eq.s32.totalorder %s25, 0
      %p213 = por %p211, %p212
      %p214 = scmp.ne.s32.totalorder %s206, %s208
      %p215 = scmp.eq.s32.totalorder %s30, 1
      %p216 = por %p214, %p215
      %p217 = scmp.ne.s32.totalorder %s208, %s209
      %p218 = scmp.eq.s32.totalorder %s30, 0
      %p219 = por %p217, %p218
      %p220 = scmp.ne.s32.totalorder %s208, %s209
      %p221 = scmp.eq.s32.totalorder %s31, 1
      %p222 = por %p220, %p221
      %p224 = scmp.ne.s32.totalorder %s209, %s223
      %p225 = scmp.eq.s32.totalorder %s31, 0
      %p226 = por %p224, %p225
      %s228 = sadd.s32 %s227, 1
      %p231 = scmp.eq.s32.totalorder %s25, 1
      %p232 = scmp.ne.s32.totalorder %s227, %s229
      %p233 = scmp.eq.s32.totalorder %s25, 0
      %p234 = por %p232, %p233
      %p235 = scmp.ne.s32.totalorder %s227, %s229
      %p236 = scmp.eq.s32.totalorder %s30, 1
      %p237 = por %p235, %p236
      %p238 = scmp.ne.s32.totalorder %s229, %s230
      %p239 = scmp.eq.s32.totalorder %s30, 0
      %p240 = por %p238, %p239
      %p241 = scmp.ne.s32.totalorder %s229, %s230
      %p242 = scmp.eq.s32.totalorder %s31, 1
      %p243 = por %p241, %p242
      %p245 = scmp.ne.s32.totalorder %s230, %s244
      %p246 = scmp.eq.s32.totalorder %s31, 0
      %p247 = por %p245, %p246
      %s249 = sadd.s32 %s248, 1
      %p252 = scmp.eq.s32.totalorder %s25, 1
      %p253 = scmp.ne.s32.totalorder %s248, %s250
      %p254 = scmp.eq.s32.totalorder %s25, 0
      %p255 = por %p253, %p254
      %p256 = scmp.ne.s32.totalorder %s248, %s250
      %p257 = scmp.eq.s32.totalorder %s30, 1
      %p258 = por %p256, %p257
      %p259 = scmp.ne.s32.totalorder %s250, %s251
      %p260 = scmp.eq.s32.totalorder %s30, 0
      %p261 = por %p259, %p260
      %p262 = scmp.ne.s32.totalorder %s250, %s251
      %p263 = scmp.eq.s32.totalorder %s31, 1
      %p264 = por %p262, %p263
      %p266 = scmp.ne.s32.totalorder %s251, %s265
      %p267 = scmp.eq.s32.totalorder %s31, 0
      %p268 = por %p266, %p267
      %s270 = sadd.s32 %s269, 1
      %p273 = scmp.eq.s32.totalorder %s25, 1
      %p274 = scmp.ne.s32.totalorder %s269, %s271
      %p275 = scmp.eq.s32.totalorder %s25, 0
      %p276 = por %p274, %p275
      %p277 = scmp.ne.s32.totalorder %s269, %s271
      %p278 = scmp.eq.s32.totalorder %s30, 1
      %p279 = por %p277, %p278
      %p280 = scmp.ne.s32.totalorder %s271, %s272
      %p281 = scmp.eq.s32.totalorder %s30, 0
      %p282 = por %p280, %p281
      %p283 = scmp.ne.s32.totalorder %s271, %s272
      %p284 = scmp.eq.s32.totalorder %s31, 1
      %p285 = por %p283, %p284
      %p287 = scmp.ne.s32.totalorder %s272, %s286
      %p288 = scmp.eq.s32.totalorder %s31, 0
      %p289 = por %p287, %p288
      %s291 = sadd.s32 %s290, 1
      %p294 = scmp.eq.s32.totalorder %s25, 1
      %p295 = scmp.ne.s32.totalorder %s290, %s292
      %p296 = scmp.eq.s32.totalorder %s25, 0
      %p297 = por %p295, %p296
      %p298 = scmp.ne.s32.totalorder %s290, %s292
      %p299 = scmp.eq.s32.totalorder %s30, 1
      %p300 = por %p298, %p299
      %p301 = scmp.ne.s32.totalorder %s292, %s293
      %p302 = scmp.eq.s32.totalorder %s30, 0
      %p303 = por %p301, %p302
      %p304 = scmp.ne.s32.totalorder %s292, %s293
      %p305 = scmp.eq.s32.totalorder %s31, 1
      %p306 = por %p304, %p305
      %p308 = scmp.ne.s32.totalorder %s293, %s307
      %p309 = scmp.eq.s32.totalorder %s31, 0
      %p310 = por %p308, %p309
      %s311 = ssub.s32 %s25, %s32
      %p312 = scmp.eq.s32.totalorder %s311, 0
      %s314 = sadd.s32 %s313, 1
      %s315 = scalar_select %p312, %s313, %s314
      %p318 = pneg %p312
      %p319 = scmp.eq.s32.totalorder %s25, 1
      %p320 = por %p318, %p319
      %p321 = scmp.ne.s32.totalorder %s313, %s316
      %p322 = scmp.eq.s32.totalorder %s25, 0
      %p323 = por %p321, %p322
      %p324 = scmp.ne.s32.totalorder %s313, %s316
      %p325 = scmp.eq.s32.totalorder %s30, 1
      %p326 = por %p324, %p325
      %p327 = scmp.ne.s32.totalorder %s316, %s317
      %p328 = scmp.eq.s32.totalorder %s30, 0
      %p329 = por %p327, %p328
      %p330 = scmp.ne.s32.totalorder %s316, %s317
      %p331 = scmp.eq.s32.totalorder %s31, 1
      %p332 = por %p330, %p331
      %p334 = scmp.ne.s32.totalorder %s317, %s333
      %p335 = scmp.eq.s32.totalorder %s31, 0
      %p336 = por %p334, %p335
      %p337 = scmp.le.s32.totalorder 1, %s25
      %p338 = scmp.lt.s32.totalorder %s25, 3
      %p339 = pnand %p337, %p338
      %p340 = pneg %p339
      // Predicated region
      $region9: #{tpu_custom_call.1} parent=5 // pred_check
        _
      $region10: #{tpu_custom_call.1} parent=5 // pred_check_branch
        %342 = sbr.rel (%p339) target = $region12
      $region11: #{tpu_custom_call.1} parent=5 // pred_region
        %s343 = ssub.s32 %s25, 1
        // Predicated region
        $region13: #{tpu_custom_call.1} parent=11 // pred_check
          %p344 = pneg %p72
        $region14: #{tpu_custom_call.1} parent=11 // pred_check_branch
          %346 = sbr.rel (%p344) target = $region16
        $region15: #{tpu_custom_call.1} parent=11 // pred_region
          _
        $region16: #{tpu_custom_call.1} parent=11 // pred_fallthru
          _
        // Predicated region
        $region17: #{tpu_custom_call.1} parent=11 // pred_check
          %p347 = pneg %p93
        $region18: #{tpu_custom_call.1} parent=11 // pred_check_branch
          %349 = sbr.rel (%p347) target = $region20
        $region19: #{tpu_custom_call.1} parent=11 // pred_region
          _
        $region20: #{tpu_custom_call.1} parent=11 // pred_fallthru
          _
        // Predicated region
        $region21: #{tpu_custom_call.1} parent=11 // pred_check
          %p350 = pneg %p114
        $region22: #{tpu_custom_call.1} parent=11 // pred_check_branch
          %352 = sbr.rel (%p350) target = $region24
        $region23: #{tpu_custom_call.1} parent=11 // pred_region
          _
        $region24: #{tpu_custom_call.1} parent=11 // pred_fallthru
          _
        // Predicated region
        $region25: #{tpu_custom_call.1} parent=11 // pred_check
          %p353 = pneg %p135
        $region26: #{tpu_custom_call.1} parent=11 // pred_check_branch
          %355 = sbr.rel (%p353) target = $region28
        $region27: #{tpu_custom_call.1} parent=11 // pred_region
          _
        $region28: #{tpu_custom_call.1} parent=11 // pred_fallthru
          _
        // Predicated region
        $region29: #{tpu_custom_call.1} parent=11 // pred_check
          %p356 = pneg %p156
        $region30: #{tpu_custom_call.1} parent=11 // pred_check_branch
          %358 = sbr.rel (%p356) target = $region32
        $region31: #{tpu_custom_call.1} parent=11 // pred_region
          _
        $region32: #{tpu_custom_call.1} parent=11 // pred_fallthru
          _
        // Predicated region
        $region33: #{tpu_custom_call.1} parent=11 // pred_check
          %p359 = pneg %p177
        $region34: #{tpu_custom_call.1} parent=11 // pred_check_branch
          %361 = sbr.rel (%p359) target = $region36
        $region35: #{tpu_custom_call.1} parent=11 // pred_region
          _
        $region36: #{tpu_custom_call.1} parent=11 // pred_fallthru
          _
        // Predicated region
        $region37: #{tpu_custom_call.1} parent=11 // pred_check
          %p362 = pneg %p198
        $region38: #{tpu_custom_call.1} parent=11 // pred_check_branch
          %364 = sbr.rel (%p362) target = $region40
        $region39: #{tpu_custom_call.1} parent=11 // pred_region
          %s366 = ssub.s32 16, 16
          %367 = vsyncadd [#allocation3], %s366
          %s369 = sshll.u32 [#allocation2], 4
          %s370 = int_to_ptr.vmem [resolvable:$true] %s369
          %372 = dma.hbm_to_vmem [thread:$0]  %s7, 16, %s370, [#allocation3]
        $region40: #{tpu_custom_call.1} parent=11 // pred_fallthru
          _
        // Predicated region
        $region41: #{tpu_custom_call.1} parent=11 // pred_check
          %p373 = pneg %p219
        $region42: #{tpu_custom_call.1} parent=11 // pred_check_branch
          %375 = sbr.rel (%p373) target = $region44
        $region43: #{tpu_custom_call.1} parent=11 // pred_region
          %s377 = ssub.s32 16, 16
          %378 = vsyncadd [#allocation6], %s377
          %s380 = sshll.u32 [#allocation5], 4
          %s381 = int_to_ptr.vmem [resolvable:$true] %s380
          %383 = dma.hbm_to_vmem [thread:$0]  %s8, 16, %s381, [#allocation6]
        $region44: #{tpu_custom_call.1} parent=11 // pred_fallthru
          _
        // Predicated region
        $region45: #{tpu_custom_call.1} parent=11 // pred_check
          %p384 = pneg %p240
        $region46: #{tpu_custom_call.1} parent=11 // pred_check_branch
          %386 = sbr.rel (%p384) target = $region48
        $region47: #{tpu_custom_call.1} parent=11 // pred_region
          %s388 = ssub.s32 256, 256
          %389 = vsyncadd [#allocation6], %s388
          %s390 = sshll.u32 [#allocation7], 4
          %s391 = int_to_ptr.vmem [resolvable:$true] %s390
          %396 = dma.hbm_to_vmem [thread:$0]  %s9, 256, %s391, [#allocation6], 64, 64, 4
        $region48: #{tpu_custom_call.1} parent=11 // pred_fallthru
          _
        // Predicated region
        $region49: #{tpu_custom_call.1} parent=11 // pred_check
          %p397 = pneg %p261
        $region50: #{tpu_custom_call.1} parent=11 // pred_check_branch
          %399 = sbr.rel (%p397) target = $region52
        $region51: #{tpu_custom_call.1} parent=11 // pred_region
          %s401 = ssub.s32 16, 16
          %402 = vsyncadd [#allocation9], %s401
          %s404 = sshll.u32 [#allocation8], 4
          %s405 = int_to_ptr.vmem [resolvable:$true] %s404
          %407 = dma.hbm_to_vmem [thread:$0]  %s10, 16, %s405, [#allocation9]
        $region52: #{tpu_custom_call.1} parent=11 // pred_fallthru
          _
        // Predicated region
        $region53: #{tpu_custom_call.1} parent=11 // pred_check
          %p408 = pneg %p282
        $region54: #{tpu_custom_call.1} parent=11 // pred_check_branch
          %410 = sbr.rel (%p408) target = $region56
        $region55: #{tpu_custom_call.1} parent=11 // pred_region
          _
        $region56: #{tpu_custom_call.1} parent=11 // pred_fallthru
          _
        // Predicated region
        $region57: #{tpu_custom_call.1} parent=11 // pred_check
          %p411 = pneg %p303
        $region58: #{tpu_custom_call.1} parent=11 // pred_check_branch
          %413 = sbr.rel (%p411) target = $region60
        $region59: #{tpu_custom_call.1} parent=11 // pred_region
          _
        $region60: #{tpu_custom_call.1} parent=11 // pred_fallthru
          _
      $region12: #{tpu_custom_call.1} parent=5 // pred_fallthru
        _
      %p414 = scmp.lt.s32.totalorder %s25, 2
      // Predicated region
      $region61: #{tpu_custom_call.1} parent=5 // pred_check
        %p415 = pneg %p414
      $region62: #{tpu_custom_call.1} parent=5 // pred_check_branch
        %417 = sbr.rel (%p415) target = $region64
      $region63: #{tpu_custom_call.1} parent=5 // pred_region
        // Predicated region
        $region65: #{tpu_custom_call.1} parent=63 // pred_check
          %p418 = pneg %p45
        $region66: #{tpu_custom_call.1} parent=63 // pred_check_branch
          %420 = sbr.rel (%p418) target = $region68
        $region67: #{tpu_custom_call.1} parent=63 // pred_region
          %p421 = scmp.lt.s32.totalorder %s25, 1
          %s422 = scalar_select %p421, %s25, 1
          %s423 = smul.addr %s422, 8
          %s424 = scalar_lea.vmem %s0, %s423
        $region68: #{tpu_custom_call.1} parent=63 // pred_fallthru
          _
      $region64: #{tpu_custom_call.1} parent=5 // pred_fallthru
        _
      %p425 = scmp.le.s32.totalorder 1, %s25
      %p426 = scmp.lt.s32.totalorder %s25, 3
      %p427 = pnand %p425, %p426
      %p428 = pneg %p427
      // Predicated region
      $region69: #{tpu_custom_call.1} parent=5 // pred_check
        _
      $region70: #{tpu_custom_call.1} parent=5 // pred_check_branch
        %430 = sbr.rel (%p427) target = $region72
      $region71: #{tpu_custom_call.1} parent=5 // pred_region
        %s431 = ssub.s32 %s25, 1
        // Predicated region
        $region73: #{tpu_custom_call.1} parent=71 // pred_check
          %p432 = pneg %p198
        $region74: #{tpu_custom_call.1} parent=71 // pred_check_branch
          %434 = sbr.rel (%p432) target = $region76
        $region75: #{tpu_custom_call.1} parent=71 // pred_region
          %435 = dma.done [#allocation3], 16
        $region76: #{tpu_custom_call.1} parent=71 // pred_fallthru
          _
        // Predicated region
        $region77: #{tpu_custom_call.1} parent=71 // pred_check
          %p436 = pneg %p219
        $region78: #{tpu_custom_call.1} parent=71 // pred_check_branch
          %438 = sbr.rel (%p436) target = $region80
        $region79: #{tpu_custom_call.1} parent=71 // pred_region
          %439 = dma.done [#allocation6], 16
        $region80: #{tpu_custom_call.1} parent=71 // pred_fallthru
          _
        // Predicated region
        $region81: #{tpu_custom_call.1} parent=71 // pred_check
          %p440 = pneg %p240
        $region82: #{tpu_custom_call.1} parent=71 // pred_check_branch
          %442 = sbr.rel (%p440) target = $region84
        $region83: #{tpu_custom_call.1} parent=71 // pred_region
          %443 = dma.done [#allocation6], 256
        $region84: #{tpu_custom_call.1} parent=71 // pred_fallthru
          _
        // Predicated region
        $region85: #{tpu_custom_call.1} parent=71 // pred_check
          %p444 = pneg %p261
        $region86: #{tpu_custom_call.1} parent=71 // pred_check_branch
          %446 = sbr.rel (%p444) target = $region88
        $region87: #{tpu_custom_call.1} parent=71 // pred_region
          %447 = dma.done [#allocation9], 16
        $region88: #{tpu_custom_call.1} parent=71 // pred_fallthru
          _
        %p448 = scmp.lt.s32.totalorder %s30, 1
        %s449 = scalar_select %p448, %s30, 1
        %s450 = smul.addr %s449, 8
        %s451 = scalar_lea.vmem %s0, %s450
        %p452 = pneg %p51
        %p453 = pneg %p48
        %p454 = pneg %p72
        %p455 = pneg %p69
        %p456 = pneg %p93
        %p457 = pneg %p90
        %p458 = pneg %p114
        %p459 = pneg %p111
        %p460 = pneg %p135
        %p461 = pneg %p132
        %p462 = pneg %p156
        %p463 = pneg %p153
        %p464 = pneg %p177
        %p465 = pneg %p174
        %p466 = pneg %p198
        %p467 = pneg %p195
        %p468 = pneg %p219
        %p469 = pneg %p216
        %p470 = pneg %p240
        %p471 = pneg %p237
        %p472 = pneg %p261
        %p473 = pneg %p258
        %p474 = pneg %p282
        %p475 = pneg %p279
        %p476 = pneg %p303
        %p477 = pneg %p300
        %p478 = pneg %p329
        %p479 = pneg %p326
        %s480 = sand.u32 %s316, 1
        %s481 = scalar_lea.sflag [#allocation4], %s480
        %s482 = sand.u32 %s316, 1
        %s483 = smul.addr %s482, 8
        %s484 = scalar_lea.vmem [#allocation10], %s483
        %p485 = scmp.lt.s32.totalorder %s30, 1
        %s486 = scalar_select %p485, %s30, 1
        %s487 = smul.addr %s486, 8
        %s488 = scalar_lea.vmem %s0, %s487
        %v490 = vld [vmem:[%s488] sm:$0xff]
        %v491 = vld [vmem:[%s1] sm:$0x1]
        %v492 = vld [vmem:[%s2] sm:$0x1]
        %vm493 = vcmask 261120
        %v494 = vsel %vm493, %v490, 0.0
        %495 = vadd.xlane.f32.xlu0 %v494
        %v496 = vpop.xlane.xlu0 %495
        %v497 = vrcp.pop 32.0
        %v498 = vmul.f32 %v496, %v497
        %v499 = vsub.f32 %v490, %v498
        %v500 = vmul.f32 %v499, %v499
        %v501 = vsel %vm493, %v500, 0.0
        %502 = vadd.xlane.f32.xlu0 %v501
        %v503 = vpop.xlane.xlu0 %502
        %v504 = vmul.f32 %v503, %v497
        %v505 = vadd.f32 %v504, 1e-05
        %v506 = vrsqrt.pop %v505
        %v507 = vmul.f32 %v499, %v506
        %v509 = vlaneseq
        %v510 = vshrl.u32 %v509, 7
        %v511 = vsub.s32 0, %v510
        %v512 = vrot.slane %v491, %v511
        %v514 = vmul.f32 %v507, %v512
        %v516 = vlaneseq
        %v517 = vshrl.u32 %v516, 7
        %v518 = vsub.s32 0, %v517
        %v519 = vrot.slane %v492, %v518
        %v521 = vadd.f32 %v514, %v519
        %v522 = vpack.c.bf16 %v521, %v521
        %v523 = vld [vmem:[%s3] sm:$0xf]
        %v524 = vld [vmem:[%s3 + $0x4] sm:$0xf]
        %v525 = vld [vmem:[%s3 + $0x8] sm:$0xf]
        %v526 = vld [vmem:[%s3 + $0xc] sm:$0xf]
        %v527 = vld [vmem:[%s4] sm:$0x1]
        %v529 = vlaneseq
        %v530 = vshrl.u32 %v529, 7
        %v531 = vsub.s32 0, %v530
        %v532 = vrot.slane %v527, %v531
        %v538 = vunpack.c.l.b16 %v523
        %v539 = vunpack.c.l.b16 %v524
        %v540 = vunpack.c.l.b16 %v525
        %v541 = vunpack.c.l.b16 %v526
        %v542 = vpack.c.b16 %v539, %v538
        %v543 = vpack.c.b16 %v541, %v540
        %v547 = vsel %vm493, %v522, 0
        %549 = vmatprep.subr.bf16.mxu0 0
        %550 = vmatpush1.bf16.msra.mxu0 0
        %551 = vmatprep.subr.bf16.mxu0 0
        %552 = vmatpush1.bf16.msra.mxu0 0
        %553 = vmatprep.subr.bf16.mxu0 0
        %554 = vmatpush1.bf16.msra.mxu0 0
        %555 = vmatprep.subr.bf16.mxu0 0
        %556 = vmatpush1.bf16.msra.mxu0 0
        %557 = vmatprep.subr.bf16.mxu0 0
        %558 = vmatpush1.bf16.msra.mxu0 0
        %559 = vmatprep.subr.bf16.mxu0 0
        %560 = vmatpush1.bf16.msra.mxu0 0
        %561 = vmatprep.subr.bf16.mxu0 0
        %562 = vmatpush1.bf16.msra.mxu0 %v543
        %563 = vmatprep.subr.bf16.mxu0 0
        %564 = vmatpush1.bf16.msra.mxu0 %v542
        %565 = vmatprep.subr.bf16.mxu0 0
        %566 = vmatpush2.bf16.msra.mxu0 0
        %567 = vmatprep.subr.bf16.mxu0 0
        %568 = vmatpush2.bf16.msra.mxu0 0
        %569 = vmatprep.subr.bf16.mxu0 0
        %570 = vmatpush2.bf16.msra.mxu0 0
        %571 = vmatprep.subr.bf16.mxu0 0
        %572 = vmatpush2.bf16.msra.mxu0 0
        %573 = vmatprep.subr.bf16.mxu0 0
        %574 = vmatpush2.bf16.msra.mxu0 0
        %575 = vmatprep.subr.bf16.mxu0 0
        %576 = vmatpush2.bf16.msra.mxu0 0
        %577 = vmatprep.subr.bf16.mxu0 0
        %578 = vmatpush2.bf16.msra.mxu0 0
        %579 = vmatprep.subr.bf16.mxu0 0
        %580 = vmatpush2.bf16.msra.mxu0 0
        %581 = vmatprep.mubr.bf16.mxu0 0
        %582 = vmatmul.mubr.bf16.gmra.mxu0 %v547
        %v583 = vpop.f32.mrf.mxu0
        %v584 = vadd.f32 %v532, %v583
        %v585 = vpop.f32.mrf.mxu0
        %v586 = vpop.f32.mrf.mxu0
        %v587 = vpop.f32.mrf.mxu0
        %588 = vdwg.mxu0
        %v589 = vpack.c.bf16 %v584, %v584
        %591 = vrot.lane.b32.xlu0 %v589, 96
        %v592 = vpop.permute.xlu0 %591
        %vm593 = vcmask 64512
        %v595 = vsel %vm593, %v589, 0
        %v598 = vsel %vm593, %v592, 0
        %600 = vmatprep.subr.bf16.mxu0 0
        %601 = vmatpush1.bf16.xpose.msra.mxu0 0
        %602 = vmatprep.subr.bf16.mxu0 0
        %603 = vmatpush1.bf16.xpose.msra.mxu0 0
        %604 = vmatprep.subr.bf16.mxu0 0
        %605 = vmatpush1.bf16.xpose.msra.mxu0 0
        %606 = vmatprep.subr.bf16.mxu0 0
        %607 = vmatpush1.bf16.xpose.msra.mxu0 0
        %608 = vmatprep.subr.bf16.mxu0 0
        %609 = vmatpush1.bf16.xpose.msra.mxu0 0
        %610 = vmatprep.subr.bf16.mxu0 0
        %611 = vmatpush1.bf16.xpose.msra.mxu0 0
        %612 = vmatprep.subr.bf16.mxu0 0
        %613 = vmatpush1.bf16.xpose.msra.mxu0 0
        %614 = vmatprep.subr.bf16.mxu0 0
        %615 = vmatpush1.bf16.xpose.msra.mxu0 %v598
        %616 = vmatprep.subr.bf16.mxu0 0
        %617 = vmatpush2.bf16.xpose.msra.mxu0 0
        %618 = vmatprep.subr.bf16.mxu0 0
        %619 = vmatpush2.bf16.xpose.msra.mxu0 0
        %620 = vmatprep.subr.bf16.mxu0 0
        %621 = vmatpush2.bf16.xpose.msra.mxu0 0
        %622 = vmatprep.subr.bf16.mxu0 0
        %623 = vmatpush2.bf16.xpose.msra.mxu0 0
        %624 = vmatprep.subr.bf16.mxu0 0
        %625 = vmatpush2.bf16.xpose.msra.mxu0 0
        %626 = vmatprep.subr.bf16.mxu0 0
        %627 = vmatpush2.bf16.xpose.msra.mxu0 0
        %628 = vmatprep.subr.bf16.mxu0 0
        %629 = vmatpush2.bf16.xpose.msra.mxu0 0
        %630 = vmatprep.subr.bf16.mxu0 0
        %631 = vmatpush2.bf16.xpose.msra.mxu0 0
        %632 = vmatprep.mubr.bf16.mxu0 0
        %633 = vmatmul.mubr.bf16.gmra.mxu0 %v595
        %v634 = vpop.f32.mrf.mxu0
        %v635 = vadd.f32 0.0, %v634
        %v636 = vpop.f32.mrf.mxu0
        %v637 = vpop.f32.mrf.mxu0
        %v638 = vpop.f32.mrf.mxu0
        %639 = vdwg.mxu0
        %v640 = vsel %vm593, %v635, -inf
        %641 = vmax.xlane.f32.xlu0 %v640
        %v642 = vpop.xlane.xlu0 %641
        %v643 = vsub.f32 %v635, %v642
        %v644 = vmul.f32 %v643, 1.442695
        %v645 = vpow.pop %v644
        %v646 = vsel %vm593, %v645, 0.0
        %647 = vadd.xlane.f32.xlu0 %v646
        %v648 = vpop.xlane.xlu0 %647
        %v649 = vrcp.pop %v648
        %v650 = vmul.f32 %v645, %v649
        %v651 = vpack.c.bf16 %v650, %v650
        %652 = vrot.lane.b32.xlu0 %v589, 64
        %v653 = vpop.permute.xlu0 %652
        %v655 = vsel %vm593, %v651, 0
        %vm657 = vcmask 1043456
        %v659 = vsel %vm657, %v653, 0
        %661 = vmatprep.subr.bf16.mxu0 0
        %662 = vmatpush1.bf16.msra.mxu0 0
        %663 = vmatprep.subr.bf16.mxu0 0
        %664 = vmatpush1.bf16.msra.mxu0 0
        %665 = vmatprep.subr.bf16.mxu0 0
        %666 = vmatpush1.bf16.msra.mxu0 0
        %667 = vmatprep.subr.bf16.mxu0 0
        %668 = vmatpush1.bf16.msra.mxu0 0
        %669 = vmatprep.subr.bf16.mxu0 0
        %670 = vmatpush1.bf16.msra.mxu0 0
        %671 = vmatprep.subr.bf16.mxu0 0
        %672 = vmatpush1.bf16.msra.mxu0 0
        %673 = vmatprep.subr.bf16.mxu0 0
        %674 = vmatpush1.bf16.msra.mxu0 0
        %675 = vmatprep.subr.bf16.mxu0 0
        %676 = vmatpush1.bf16.msra.mxu0 %v659
        %677 = vmatprep.subr.bf16.mxu0 0
        %678 = vmatpush2.bf16.msra.mxu0 0
        %679 = vmatprep.subr.bf16.mxu0 0
        %680 = vmatpush2.bf16.msra.mxu0 0
        %681 = vmatprep.subr.bf16.mxu0 0
        %682 = vmatpush2.bf16.msra.mxu0 0
        %683 = vmatprep.subr.bf16.mxu0 0
        %684 = vmatpush2.bf16.msra.mxu0 0
        %685 = vmatprep.subr.bf16.mxu0 0
        %686 = vmatpush2.bf16.msra.mxu0 0
        %687 = vmatprep.subr.bf16.mxu0 0
        %688 = vmatpush2.bf16.msra.mxu0 0
        %689 = vmatprep.subr.bf16.mxu0 0
        %690 = vmatpush2.bf16.msra.mxu0 0
        %691 = vmatprep.subr.bf16.mxu0 0
        %692 = vmatpush2.bf16.msra.mxu0 0
        %693 = vmatprep.mubr.bf16.mxu0 0
        %694 = vmatmul.mubr.bf16.gmra.mxu0 %v655
        %v695 = vpop.f32.mrf.mxu0
        %v696 = vadd.f32 0.0, %v695
        %v697 = vpop.f32.mrf.mxu0
        %v698 = vpop.f32.mrf.mxu0
        %v699 = vpop.f32.mrf.mxu0
        %700 = vdwg.mxu0
        %v701 = vpack.c.bf16 %v696, %v696
        %v702 = vld [vmem:[%s5] sm:$0xf]
        %703 = vrot.lane.b32.xlu0 %v589, 120
        %v704 = vpop.permute.xlu0 %703
        %705 = vrot.lane.b32.xlu0 %v589, 88
        %v706 = vpop.permute.xlu0 %705
        %v708 = vsel %vm593, %v704, 0
        %v711 = vsel %vm593, %v706, 0
        %713 = vmatprep.subr.bf16.mxu0 0
        %714 = vmatpush1.bf16.xpose.msra.mxu0 0
        %715 = vmatprep.subr.bf16.mxu0 0
        %716 = vmatpush1.bf16.xpose.msra.mxu0 0
        %717 = vmatprep.subr.bf16.mxu0 0
        %718 = vmatpush1.bf16.xpose.msra.mxu0 0
        %719 = vmatprep.subr.bf16.mxu0 0
        %720 = vmatpush1.bf16.xpose.msra.mxu0 0
        %721 = vmatprep.subr.bf16.mxu0 0
        %722 = vmatpush1.bf16.xpose.msra.mxu0 0
        %723 = vmatprep.subr.bf16.mxu0 0
        %724 = vmatpush1.bf16.xpose.msra.mxu0 0
        %725 = vmatprep.subr.bf16.mxu0 0
        %726 = vmatpush1.bf16.xpose.msra.mxu0 0
        %727 = vmatprep.subr.bf16.mxu0 0
        %728 = vmatpush1.bf16.xpose.msra.mxu0 %v711
        %729 = vmatprep.subr.bf16.mxu0 0
        %730 = vmatpush2.bf16.xpose.msra.mxu0 0
        %731 = vmatprep.subr.bf16.mxu0 0
        %732 = vmatpush2.bf16.xpose.msra.mxu0 0
        %733 = vmatprep.subr.bf16.mxu0 0
        %734 = vmatpush2.bf16.xpose.msra.mxu0 0
        %735 = vmatprep.subr.bf16.mxu0 0
        %736 = vmatpush2.bf16.xpose.msra.mxu0 0
        %737 = vmatprep.subr.bf16.mxu0 0
        %738 = vmatpush2.bf16.xpose.msra.mxu0 0
        %739 = vmatprep.subr.bf16.mxu0 0
        %740 = vmatpush2.bf16.xpose.msra.mxu0 0
        %741 = vmatprep.subr.bf16.mxu0 0
        %742 = vmatpush2.bf16.xpose.msra.mxu0 0
        %743 = vmatprep.subr.bf16.mxu0 0
        %744 = vmatpush2.bf16.xpose.msra.mxu0 0
        %745 = vmatprep.mubr.bf16.mxu0 0
        %746 = vmatmul.mubr.bf16.gmra.mxu0 %v708
        %v747 = vpop.f32.mrf.mxu0
        %v748 = vadd.f32 0.0, %v747
        %v749 = vpop.f32.mrf.mxu0
        %v750 = vpop.f32.mrf.mxu0
        %v751 = vpop.f32.mrf.mxu0
        %752 = vdwg.mxu0
        %v753 = vsel %vm593, %v748, -inf
        %754 = vmax.xlane.f32.xlu0 %v753
        %v755 = vpop.xlane.xlu0 %754
        %v756 = vsub.f32 %v748, %v755
        %v757 = vmul.f32 %v756, 1.442695
        %v758 = vpow.pop %v757
        %v759 = vsel %vm593, %v758, 0.0
        %760 = vadd.xlane.f32.xlu0 %v759
        %v761 = vpop.xlane.xlu0 %760
        %v762 = vrcp.pop %v761
        %v763 = vmul.f32 %v758, %v762
        %v764 = vpack.c.bf16 %v763, %v763
        %765 = vrot.lane.b32.xlu0 %v589, 56
        %v766 = vpop.permute.xlu0 %765
        %v768 = vsel %vm593, %v764, 0
        %v771 = vsel %vm657, %v766, 0
        %773 = vmatprep.subr.bf16.mxu0 0
        %774 = vmatpush1.bf16.msra.mxu0 0
        %775 = vmatprep.subr.bf16.mxu0 0
        %776 = vmatpush1.bf16.msra.mxu0 0
        %777 = vmatprep.subr.bf16.mxu0 0
        %778 = vmatpush1.bf16.msra.mxu0 0
        %779 = vmatprep.subr.bf16.mxu0 0
        %780 = vmatpush1.bf16.msra.mxu0 0
        %781 = vmatprep.subr.bf16.mxu0 0
        %782 = vmatpush1.bf16.msra.mxu0 0
        %783 = vmatprep.subr.bf16.mxu0 0
        %784 = vmatpush1.bf16.msra.mxu0 0
        %785 = vmatprep.subr.bf16.mxu0 0
        %786 = vmatpush1.bf16.msra.mxu0 0
        %787 = vmatprep.subr.bf16.mxu0 0
        %788 = vmatpush1.bf16.msra.mxu0 %v771
        %789 = vmatprep.subr.bf16.mxu0 0
        %790 = vmatpush2.bf16.msra.mxu0 0
        %791 = vmatprep.subr.bf16.mxu0 0
        %792 = vmatpush2.bf16.msra.mxu0 0
        %793 = vmatprep.subr.bf16.mxu0 0
        %794 = vmatpush2.bf16.msra.mxu0 0
        %795 = vmatprep.subr.bf16.mxu0 0
        %796 = vmatpush2.bf16.msra.mxu0 0
        %797 = vmatprep.subr.bf16.mxu0 0
        %798 = vmatpush2.bf16.msra.mxu0 0
        %799 = vmatprep.subr.bf16.mxu0 0
        %800 = vmatpush2.bf16.msra.mxu0 0
        %801 = vmatprep.subr.bf16.mxu0 0
        %802 = vmatpush2.bf16.msra.mxu0 0
        %803 = vmatprep.subr.bf16.mxu0 0
        %804 = vmatpush2.bf16.msra.mxu0 0
        %805 = vmatprep.mubr.bf16.mxu0 0
        %806 = vmatmul.mubr.bf16.gmra.mxu0 %v768
        %v807 = vpop.f32.mrf.mxu0
        %v808 = vadd.f32 0.0, %v807
        %v809 = vpop.f32.mrf.mxu0
        %v810 = vpop.f32.mrf.mxu0
        %v811 = vpop.f32.mrf.mxu0
        %812 = vdwg.mxu0
        %v813 = vpack.c.bf16 %v808, %v808
        %s814 = scalar_lea.vmem %s5, 4
        %v815 = vld [vmem:[%s814] sm:$0xf]
        %v817 = vsel %vm593, %v813, 0
        %v820 = vsel %vm657, %v815, 0
        %822 = vmatprep.subr.bf16.mxu0 0
        %823 = vmatpush1.bf16.msra.mxu0 0
        %824 = vmatprep.subr.bf16.mxu0 0
        %825 = vmatpush1.bf16.msra.mxu0 0
        %826 = vmatprep.subr.bf16.mxu0 0
        %827 = vmatpush1.bf16.msra.mxu0 0
        %828 = vmatprep.subr.bf16.mxu0 0
        %829 = vmatpush1.bf16.msra.mxu0 0
        %830 = vmatprep.subr.bf16.mxu0 0
        %831 = vmatpush1.bf16.msra.mxu0 0
        %832 = vmatprep.subr.bf16.mxu0 0
        %833 = vmatpush1.bf16.msra.mxu0 0
        %834 = vmatprep.subr.bf16.mxu0 0
        %835 = vmatpush1.bf16.msra.mxu0 0
        %836 = vmatprep.subr.bf16.mxu0 0
        %837 = vmatpush1.bf16.msra.mxu0 %v820
        %838 = vmatprep.subr.bf16.mxu0 0
        %839 = vmatpush2.bf16.msra.mxu0 0
        %840 = vmatprep.subr.bf16.mxu0 0
        %841 = vmatpush2.bf16.msra.mxu0 0
        %842 = vmatprep.subr.bf16.mxu0 0
        %843 = vmatpush2.bf16.msra.mxu0 0
        %844 = vmatprep.subr.bf16.mxu0 0
        %845 = vmatpush2.bf16.msra.mxu0 0
        %846 = vmatprep.subr.bf16.mxu0 0
        %847 = vmatpush2.bf16.msra.mxu0 0
        %848 = vmatprep.subr.bf16.mxu0 0
        %849 = vmatpush2.bf16.msra.mxu0 0
        %850 = vmatprep.subr.bf16.mxu0 0
        %851 = vmatpush2.bf16.msra.mxu0 0
        %852 = vmatprep.subr.bf16.mxu0 0
        %853 = vmatpush2.bf16.msra.mxu0 0
        %854 = vmatprep.mubr.bf16.mxu0 0
        %855 = vmatmul.mubr.bf16.gmra.mxu0 %v817
        %v856 = vpop.f32.mrf.mxu0
        %v857 = vadd.f32 0.0, %v856
        %v858 = vpop.f32.mrf.mxu0
        %v859 = vpop.f32.mrf.mxu0
        %v860 = vpop.f32.mrf.mxu0
        %861 = vdwg.mxu0
        %v863 = vsel %vm593, %v701, 0
        %v866 = vsel %vm657, %v702, 0
        %868 = vmatprep.subr.bf16.mxu0 0
        %869 = vmatpush1.bf16.msra.mxu0 0
        %870 = vmatprep.subr.bf16.mxu0 0
        %871 = vmatpush1.bf16.msra.mxu0 0
        %872 = vmatprep.subr.bf16.mxu0 0
        %873 = vmatpush1.bf16.msra.mxu0 0
        %874 = vmatprep.subr.bf16.mxu0 0
        %875 = vmatpush1.bf16.msra.mxu0 0
        %876 = vmatprep.subr.bf16.mxu0 0
        %877 = vmatpush1.bf16.msra.mxu0 0
        %878 = vmatprep.subr.bf16.mxu0 0
        %879 = vmatpush1.bf16.msra.mxu0 0
        %880 = vmatprep.subr.bf16.mxu0 0
        %881 = vmatpush1.bf16.msra.mxu0 0
        %882 = vmatprep.subr.bf16.mxu0 0
        %883 = vmatpush1.bf16.msra.mxu0 %v866
        %884 = vmatprep.subr.bf16.mxu0 0
        %885 = vmatpush2.bf16.msra.mxu0 0
        %886 = vmatprep.subr.bf16.mxu0 0
        %887 = vmatpush2.bf16.msra.mxu0 0
        %888 = vmatprep.subr.bf16.mxu0 0
        %889 = vmatpush2.bf16.msra.mxu0 0
        %890 = vmatprep.subr.bf16.mxu0 0
        %891 = vmatpush2.bf16.msra.mxu0 0
        %892 = vmatprep.subr.bf16.mxu0 0
        %893 = vmatpush2.bf16.msra.mxu0 0
        %894 = vmatprep.subr.bf16.mxu0 0
        %895 = vmatpush2.bf16.msra.mxu0 0
        %896 = vmatprep.subr.bf16.mxu0 0
        %897 = vmatpush2.bf16.msra.mxu0 0
        %898 = vmatprep.subr.bf16.mxu0 0
        %899 = vmatpush2.bf16.msra.mxu0 0
        %900 = vmatprep.mubr.bf16.mxu0 0
        %901 = vmatmul.mubr.bf16.gmra.mxu0 %v863
        %v902 = vpop.f32.mrf.mxu0
        %v903 = vadd.f32 %v857, %v902
        %v904 = vpop.f32.mrf.mxu0
        %v905 = vpop.f32.mrf.mxu0
        %v906 = vpop.f32.mrf.mxu0
        %907 = vdwg.mxu0
        %908 = vrot.lane.b32.xlu0 %v589, 112
        %v909 = vpop.permute.xlu0 %908
        %910 = vrot.lane.b32.xlu0 %v589, 80
        %v911 = vpop.permute.xlu0 %910
        %v913 = vsel %vm593, %v909, 0
        %v916 = vsel %vm593, %v911, 0
        %918 = vmatprep.subr.bf16.mxu0 0
        %919 = vmatpush1.bf16.xpose.msra.mxu0 0
        %920 = vmatprep.subr.bf16.mxu0 0
        %921 = vmatpush1.bf16.xpose.msra.mxu0 0
        %922 = vmatprep.subr.bf16.mxu0 0
        %923 = vmatpush1.bf16.xpose.msra.mxu0 0
        %924 = vmatprep.subr.bf16.mxu0 0
        %925 = vmatpush1.bf16.xpose.msra.mxu0 0
        %926 = vmatprep.subr.bf16.mxu0 0
        %927 = vmatpush1.bf16.xpose.msra.mxu0 0
        %928 = vmatprep.subr.bf16.mxu0 0
        %929 = vmatpush1.bf16.xpose.msra.mxu0 0
        %930 = vmatprep.subr.bf16.mxu0 0
        %931 = vmatpush1.bf16.xpose.msra.mxu0 0
        %932 = vmatprep.subr.bf16.mxu0 0
        %933 = vmatpush1.bf16.xpose.msra.mxu0 %v916
        %934 = vmatprep.subr.bf16.mxu0 0
        %935 = vmatpush2.bf16.xpose.msra.mxu0 0
        %936 = vmatprep.subr.bf16.mxu0 0
        %937 = vmatpush2.bf16.xpose.msra.mxu0 0
        %938 = vmatprep.subr.bf16.mxu0 0
        %939 = vmatpush2.bf16.xpose.msra.mxu0 0
        %940 = vmatprep.subr.bf16.mxu0 0
        %941 = vmatpush2.bf16.xpose.msra.mxu0 0
        %942 = vmatprep.subr.bf16.mxu0 0
        %943 = vmatpush2.bf16.xpose.msra.mxu0 0
        %944 = vmatprep.subr.bf16.mxu0 0
        %945 = vmatpush2.bf16.xpose.msra.mxu0 0
        %946 = vmatprep.subr.bf16.mxu0 0
        %947 = vmatpush2.bf16.xpose.msra.mxu0 0
        %948 = vmatprep.subr.bf16.mxu0 0
        %949 = vmatpush2.bf16.xpose.msra.mxu0 0
        %950 = vmatprep.mubr.bf16.mxu0 0
        %951 = vmatmul.mubr.bf16.gmra.mxu0 %v913
        %v952 = vpop.f32.mrf.mxu0
        %v953 = vadd.f32 0.0, %v952
        %v954 = vpop.f32.mrf.mxu0
        %v955 = vpop.f32.mrf.mxu0
        %v956 = vpop.f32.mrf.mxu0
        %957 = vdwg.mxu0
        %v958 = vsel %vm593, %v953, -inf
        %959 = vmax.xlane.f32.xlu0 %v958
        %v960 = vpop.xlane.xlu0 %959
        %v961 = vsub.f32 %v953, %v960
        %v962 = vmul.f32 %v961, 1.442695
        %v963 = vpow.pop %v962
        %v964 = vsel %vm593, %v963, 0.0
        %965 = vadd.xlane.f32.xlu0 %v964
        %v966 = vpop.xlane.xlu0 %965
        %v967 = vrcp.pop %v966
        %v968 = vmul.f32 %v963, %v967
        %v969 = vpack.c.bf16 %v968, %v968
        %970 = vrot.lane.b32.xlu0 %v589, 48
        %v971 = vpop.permute.xlu0 %970
        %v973 = vsel %vm593, %v969, 0
        %v976 = vsel %vm657, %v971, 0
        %978 = vmatprep.subr.bf16.mxu0 0
        %979 = vmatpush1.bf16.msra.mxu0 0
        %980 = vmatprep.subr.bf16.mxu0 0
        %981 = vmatpush1.bf16.msra.mxu0 0
        %982 = vmatprep.subr.bf16.mxu0 0
        %983 = vmatpush1.bf16.msra.mxu0 0
        %984 = vmatprep.subr.bf16.mxu0 0
        %985 = vmatpush1.bf16.msra.mxu0 0
        %986 = vmatprep.subr.bf16.mxu0 0
        %987 = vmatpush1.bf16.msra.mxu0 0
        %988 = vmatprep.subr.bf16.mxu0 0
        %989 = vmatpush1.bf16.msra.mxu0 0
        %990 = vmatprep.subr.bf16.mxu0 0
        %991 = vmatpush1.bf16.msra.mxu0 0
        %992 = vmatprep.subr.bf16.mxu0 0
        %993 = vmatpush1.bf16.msra.mxu0 %v976
        %994 = vmatprep.subr.bf16.mxu0 0
        %995 = vmatpush2.bf16.msra.mxu0 0
        %996 = vmatprep.subr.bf16.mxu0 0
        %997 = vmatpush2.bf16.msra.mxu0 0
        %998 = vmatprep.subr.bf16.mxu0 0
        %999 = vmatpush2.bf16.msra.mxu0 0
        %1000 = vmatprep.subr.bf16.mxu0 0
        %1001 = vmatpush2.bf16.msra.mxu0 0
        %1002 = vmatprep.subr.bf16.mxu0 0
        %1003 = vmatpush2.bf16.msra.mxu0 0
        %1004 = vmatprep.subr.bf16.mxu0 0
        %1005 = vmatpush2.bf16.msra.mxu0 0
        %1006 = vmatprep.subr.bf16.mxu0 0
        %1007 = vmatpush2.bf16.msra.mxu0 0
        %1008 = vmatprep.subr.bf16.mxu0 0
        %1009 = vmatpush2.bf16.msra.mxu0 0
        %1010 = vmatprep.mubr.bf16.mxu0 0
        %1011 = vmatmul.mubr.bf16.gmra.mxu0 %v973
        %v1012 = vpop.f32.mrf.mxu0
        %v1013 = vadd.f32 0.0, %v1012
        %v1014 = vpop.f32.mrf.mxu0
        %v1015 = vpop.f32.mrf.mxu0
        %v1016 = vpop.f32.mrf.mxu0
        %1017 = vdwg.mxu0
        %v1018 = vpack.c.bf16 %v1013, %v1013
        %s1019 = scalar_lea.vmem %s5, 8
        %v1020 = vld [vmem:[%s1019] sm:$0xf]
        %v1022 = vsel %vm593, %v1018, 0
        %v1025 = vsel %vm657, %v1020, 0
        %1027 = vmatprep.subr.bf16.mxu0 0
        %1028 = vmatpush1.bf16.msra.mxu0 0
        %1029 = vmatprep.subr.bf16.mxu0 0
        %1030 = vmatpush1.bf16.msra.mxu0 0
        %1031 = vmatprep.subr.bf16.mxu0 0
        %1032 = vmatpush1.bf16.msra.mxu0 0
        %1033 = vmatprep.subr.bf16.mxu0 0
        %1034 = vmatpush1.bf16.msra.mxu0 0
        %1035 = vmatprep.subr.bf16.mxu0 0
        %1036 = vmatpush1.bf16.msra.mxu0 0
        %1037 = vmatprep.subr.bf16.mxu0 0
        %1038 = vmatpush1.bf16.msra.mxu0 0
        %1039 = vmatprep.subr.bf16.mxu0 0
        %1040 = vmatpush1.bf16.msra.mxu0 0
        %1041 = vmatprep.subr.bf16.mxu0 0
        %1042 = vmatpush1.bf16.msra.mxu0 %v1025
        %1043 = vmatprep.subr.bf16.mxu0 0
        %1044 = vmatpush2.bf16.msra.mxu0 0
        %1045 = vmatprep.subr.bf16.mxu0 0
        %1046 = vmatpush2.bf16.msra.mxu0 0
        %1047 = vmatprep.subr.bf16.mxu0 0
        %1048 = vmatpush2.bf16.msra.mxu0 0
        %1049 = vmatprep.subr.bf16.mxu0 0
        %1050 = vmatpush2.bf16.msra.mxu0 0
        %1051 = vmatprep.subr.bf16.mxu0 0
        %1052 = vmatpush2.bf16.msra.mxu0 0
        %1053 = vmatprep.subr.bf16.mxu0 0
        %1054 = vmatpush2.bf16.msra.mxu0 0
        %1055 = vmatprep.subr.bf16.mxu0 0
        %1056 = vmatpush2.bf16.msra.mxu0 0
        %1057 = vmatprep.subr.bf16.mxu0 0
        %1058 = vmatpush2.bf16.msra.mxu0 0
        %1059 = vmatprep.mubr.bf16.mxu0 0
        %1060 = vmatmul.mubr.bf16.gmra.mxu0 %v1022
        %v1061 = vpop.f32.mrf.mxu0
        %v1062 = vadd.f32 0.0, %v1061
        %v1063 = vpop.f32.mrf.mxu0
        %v1064 = vpop.f32.mrf.mxu0
        %v1065 = vpop.f32.mrf.mxu0
        %1066 = vdwg.mxu0
        %v1067 = vadd.f32 %v903, %v1062
        %1068 = vrot.lane.b32.xlu0 %v589, 104
        %v1069 = vpop.permute.xlu0 %1068
        %1070 = vrot.lane.b32.xlu0 %v589, 72
        %v1071 = vpop.permute.xlu0 %1070
        %v1073 = vsel %vm593, %v1069, 0
        %v1076 = vsel %vm593, %v1071, 0
        %1078 = vmatprep.subr.bf16.mxu0 0
        %1079 = vmatpush1.bf16.xpose.msra.mxu0 0
        %1080 = vmatprep.subr.bf16.mxu0 0
        %1081 = vmatpush1.bf16.xpose.msra.mxu0 0
        %1082 = vmatprep.subr.bf16.mxu0 0
        %1083 = vmatpush1.bf16.xpose.msra.mxu0 0
        %1084 = vmatprep.subr.bf16.mxu0 0
        %1085 = vmatpush1.bf16.xpose.msra.mxu0 0
        %1086 = vmatprep.subr.bf16.mxu0 0
        %1087 = vmatpush1.bf16.xpose.msra.mxu0 0
        %1088 = vmatprep.subr.bf16.mxu0 0
        %1089 = vmatpush1.bf16.xpose.msra.mxu0 0
        %1090 = vmatprep.subr.bf16.mxu0 0
        %1091 = vmatpush1.bf16.xpose.msra.mxu0 0
        %1092 = vmatprep.subr.bf16.mxu0 0
        %1093 = vmatpush1.bf16.xpose.msra.mxu0 %v1076
        %1094 = vmatprep.subr.bf16.mxu0 0
        %1095 = vmatpush2.bf16.xpose.msra.mxu0 0
        %1096 = vmatprep.subr.bf16.mxu0 0
        %1097 = vmatpush2.bf16.xpose.msra.mxu0 0
        %1098 = vmatprep.subr.bf16.mxu0 0
        %1099 = vmatpush2.bf16.xpose.msra.mxu0 0
        %1100 = vmatprep.subr.bf16.mxu0 0
        %1101 = vmatpush2.bf16.xpose.msra.mxu0 0
        %1102 = vmatprep.subr.bf16.mxu0 0
        %1103 = vmatpush2.bf16.xpose.msra.mxu0 0
        %1104 = vmatprep.subr.bf16.mxu0 0
        %1105 = vmatpush2.bf16.xpose.msra.mxu0 0
        %1106 = vmatprep.subr.bf16.mxu0 0
        %1107 = vmatpush2.bf16.xpose.msra.mxu0 0
        %1108 = vmatprep.subr.bf16.mxu0 0
        %1109 = vmatpush2.bf16.xpose.msra.mxu0 0
        %1110 = vmatprep.mubr.bf16.mxu0 0
        %1111 = vmatmul.mubr.bf16.gmra.mxu0 %v1073
        %v1112 = vpop.f32.mrf.mxu0
        %v1113 = vadd.f32 0.0, %v1112
        %v1114 = vpop.f32.mrf.mxu0
        %v1115 = vpop.f32.mrf.mxu0
        %v1116 = vpop.f32.mrf.mxu0
        %1117 = vdwg.mxu0
        %v1118 = vsel %vm593, %v1113, -inf
        %1119 = vmax.xlane.f32.xlu0 %v1118
        %v1120 = vpop.xlane.xlu0 %1119
        %v1121 = vsub.f32 %v1113, %v1120
        %v1122 = vmul.f32 %v1121, 1.442695
        %v1123 = vpow.pop %v1122
        %v1124 = vsel %vm593, %v1123, 0.0
        %1125 = vadd.xlane.f32.xlu0 %v1124
        %v1126 = vpop.xlane.xlu0 %1125
        %v1127 = vrcp.pop %v1126
        %v1128 = vmul.f32 %v1123, %v1127
        %v1129 = vpack.c.bf16 %v1128, %v1128
        %1130 = vrot.lane.b32.xlu0 %v589, 40
        %v1131 = vpop.permute.xlu0 %1130
        %v1133 = vsel %vm593, %v1129, 0
        %v1136 = vsel %vm657, %v1131, 0
        %1138 = vmatprep.subr.bf16.mxu0 0
        %1139 = vmatpush1.bf16.msra.mxu0 0
        %1140 = vmatprep.subr.bf16.mxu0 0
        %1141 = vmatpush1.bf16.msra.mxu0 0
        %1142 = vmatprep.subr.bf16.mxu0 0
        %1143 = vmatpush1.bf16.msra.mxu0 0
        %1144 = vmatprep.subr.bf16.mxu0 0
        %1145 = vmatpush1.bf16.msra.mxu0 0
        %1146 = vmatprep.subr.bf16.mxu0 0
        %1147 = vmatpush1.bf16.msra.mxu0 0
        %1148 = vmatprep.subr.bf16.mxu0 0
        %1149 = vmatpush1.bf16.msra.mxu0 0
        %1150 = vmatprep.subr.bf16.mxu0 0
        %1151 = vmatpush1.bf16.msra.mxu0 0
        %1152 = vmatprep.subr.bf16.mxu0 0
        %1153 = vmatpush1.bf16.msra.mxu0 %v1136
        %1154 = vmatprep.subr.bf16.mxu0 0
        %1155 = vmatpush2.bf16.msra.mxu0 0
        %1156 = vmatprep.subr.bf16.mxu0 0
        %1157 = vmatpush2.bf16.msra.mxu0 0
        %1158 = vmatprep.subr.bf16.mxu0 0
        %1159 = vmatpush2.bf16.msra.mxu0 0
        %1160 = vmatprep.subr.bf16.mxu0 0
        %1161 = vmatpush2.bf16.msra.mxu0 0
        %1162 = vmatprep.subr.bf16.mxu0 0
        %1163 = vmatpush2.bf16.msra.mxu0 0
        %1164 = vmatprep.subr.bf16.mxu0 0
        %1165 = vmatpush2.bf16.msra.mxu0 0
        %1166 = vmatprep.subr.bf16.mxu0 0
        %1167 = vmatpush2.bf16.msra.mxu0 0
        %1168 = vmatprep.subr.bf16.mxu0 0
        %1169 = vmatpush2.bf16.msra.mxu0 0
        %1170 = vmatprep.mubr.bf16.mxu0 0
        %1171 = vmatmul.mubr.bf16.gmra.mxu0 %v1133
        %v1172 = vpop.f32.mrf.mxu0
        %v1173 = vadd.f32 0.0, %v1172
        %v1174 = vpop.f32.mrf.mxu0
        %v1175 = vpop.f32.mrf.mxu0
        %v1176 = vpop.f32.mrf.mxu0
        %1177 = vdwg.mxu0
        %v1178 = vpack.c.bf16 %v1173, %v1173
        %s1179 = scalar_lea.vmem %s5, 12
        %v1180 = vld [vmem:[%s1179] sm:$0xf]
        %v1182 = vsel %vm593, %v1178, 0
        %v1185 = vsel %vm657, %v1180, 0
        %1187 = vmatprep.subr.bf16.mxu0 0
        %1188 = vmatpush1.bf16.msra.mxu0 0
        %1189 = vmatprep.subr.bf16.mxu0 0
        %1190 = vmatpush1.bf16.msra.mxu0 0
        %1191 = vmatprep.subr.bf16.mxu0 0
        %1192 = vmatpush1.bf16.msra.mxu0 0
        %1193 = vmatprep.subr.bf16.mxu0 0
        %1194 = vmatpush1.bf16.msra.mxu0 0
        %1195 = vmatprep.subr.bf16.mxu0 0
        %1196 = vmatpush1.bf16.msra.mxu0 0
        %1197 = vmatprep.subr.bf16.mxu0 0
        %1198 = vmatpush1.bf16.msra.mxu0 0
        %1199 = vmatprep.subr.bf16.mxu0 0
        %1200 = vmatpush1.bf16.msra.mxu0 0
        %1201 = vmatprep.subr.bf16.mxu0 0
        %1202 = vmatpush1.bf16.msra.mxu0 %v1185
        %1203 = vmatprep.subr.bf16.mxu0 0
        %1204 = vmatpush2.bf16.msra.mxu0 0
        %1205 = vmatprep.subr.bf16.mxu0 0
        %1206 = vmatpush2.bf16.msra.mxu0 0
        %1207 = vmatprep.subr.bf16.mxu0 0
        %1208 = vmatpush2.bf16.msra.mxu0 0
        %1209 = vmatprep.subr.bf16.mxu0 0
        %1210 = vmatpush2.bf16.msra.mxu0 0
        %1211 = vmatprep.subr.bf16.mxu0 0
        %1212 = vmatpush2.bf16.msra.mxu0 0
        %1213 = vmatprep.subr.bf16.mxu0 0
        %1214 = vmatpush2.bf16.msra.mxu0 0
        %1215 = vmatprep.subr.bf16.mxu0 0
        %1216 = vmatpush2.bf16.msra.mxu0 0
        %1217 = vmatprep.subr.bf16.mxu0 0
        %1218 = vmatpush2.bf16.msra.mxu0 0
        %1219 = vmatprep.mubr.bf16.mxu0 0
        %1220 = vmatmul.mubr.bf16.gmra.mxu0 %v1182
        %v1221 = vpop.f32.mrf.mxu0
        %v1222 = vadd.f32 0.0, %v1221
        %v1223 = vpop.f32.mrf.mxu0
        %v1224 = vpop.f32.mrf.mxu0
        %v1225 = vpop.f32.mrf.mxu0
        %1226 = vdwg.mxu0
        %v1227 = vadd.f32 %v1067, %v1222
        %v1228 = vadd.f32 %v490, %v1227
        %v1229 = vld [vmem:[%s6] sm:$0x1]
        %v1231 = vlaneseq
        %v1232 = vshrl.u32 %v1231, 7
        %v1233 = vsub.s32 0, %v1232
        %v1234 = vrot.slane %v1229, %v1233
        %v1236 = vadd.f32 %v1228, %v1234
        %v1237 = vld [vmem:[#allocation2] sm:$0x1]
        %v1238 = vld [vmem:[#allocation5] sm:$0x1]
        %v1239 = vsel %vm493, %v1236, 0.0
        %1240 = vadd.xlane.f32.xlu0 %v1239
        %v1241 = vpop.xlane.xlu0 %1240
        %v1242 = vmul.f32 %v1241, %v497
        %v1243 = vsub.f32 %v1236, %v1242
        %v1244 = vmul.f32 %v1243, %v1243
        %v1245 = vsel %vm493, %v1244, 0.0
        %1246 = vadd.xlane.f32.xlu0 %v1245
        %v1247 = vpop.xlane.xlu0 %1246
        %v1248 = vmul.f32 %v1247, %v497
        %v1249 = vadd.f32 %v1248, 1e-05
        %v1250 = vrsqrt.pop %v1249
        %v1251 = vmul.f32 %v1243, %v1250
        %v1253 = vlaneseq
        %v1254 = vshrl.u32 %v1253, 7
        %v1255 = vsub.s32 0, %v1254
        %v1256 = vrot.slane %v1237, %v1255
        %v1258 = vmul.f32 %v1251, %v1256
        %v1260 = vlaneseq
        %v1261 = vshrl.u32 %v1260, 7
        %v1262 = vsub.s32 0, %v1261
        %v1263 = vrot.slane %v1238, %v1262
        %v1265 = vadd.f32 %v1258, %v1263
        %v1266 = vpack.c.bf16 %v1265, %v1265
        %v1267 = vld [vmem:[#allocation7] sm:$0xf]
        %v1268 = vld [vmem:[#allocation7 + $0x4] sm:$0xf]
        %v1269 = vld [vmem:[#allocation7 + $0x8] sm:$0xf]
        %v1270 = vld [vmem:[#allocation7 + $0xc] sm:$0xf]
        %v1271 = vld [vmem:[#allocation8] sm:$0x1]
        %v1273 = vlaneseq
        %v1274 = vshrl.u32 %v1273, 7
        %v1275 = vsub.s32 0, %v1274
        %v1276 = vrot.slane %v1271, %v1275
        %v1282 = vunpack.c.l.b16 %v1267
        %v1283 = vunpack.c.l.b16 %v1268
        %v1284 = vunpack.c.l.b16 %v1269
        %v1285 = vunpack.c.l.b16 %v1270
        %v1286 = vpack.c.b16 %v1283, %v1282
        %v1287 = vpack.c.b16 %v1285, %v1284
        %v1291 = vsel %vm493, %v1266, 0
        %1293 = vmatprep.subr.bf16.mxu0 0
        %1294 = vmatpush1.bf16.msra.mxu0 0
        %1295 = vmatprep.subr.bf16.mxu0 0
        %1296 = vmatpush1.bf16.msra.mxu0 0
        %1297 = vmatprep.subr.bf16.mxu0 0
        %1298 = vmatpush1.bf16.msra.mxu0 0
        %1299 = vmatprep.subr.bf16.mxu0 0
        %1300 = vmatpush1.bf16.msra.mxu0 0
        %1301 = vmatprep.subr.bf16.mxu0 0
        %1302 = vmatpush1.bf16.msra.mxu0 0
        %1303 = vmatprep.subr.bf16.mxu0 0
        %1304 = vmatpush1.bf16.msra.mxu0 0
        %1305 = vmatprep.subr.bf16.mxu0 0
        %1306 = vmatpush1.bf16.msra.mxu0 %v1287
        %1307 = vmatprep.subr.bf16.mxu0 0
        %1308 = vmatpush1.bf16.msra.mxu0 %v1286
        %1309 = vmatprep.subr.bf16.mxu0 0
        %1310 = vmatpush2.bf16.msra.mxu0 0
        %1311 = vmatprep.subr.bf16.mxu0 0
        %1312 = vmatpush2.bf16.msra.mxu0 0
        %1313 = vmatprep.subr.bf16.mxu0 0
        %1314 = vmatpush2.bf16.msra.mxu0 0
        %1315 = vmatprep.subr.bf16.mxu0 0
        %1316 = vmatpush2.bf16.msra.mxu0 0
        %1317 = vmatprep.subr.bf16.mxu0 0
        %1318 = vmatpush2.bf16.msra.mxu0 0
        %1319 = vmatprep.subr.bf16.mxu0 0
        %1320 = vmatpush2.bf16.msra.mxu0 0
        %1321 = vmatprep.subr.bf16.mxu0 0
        %1322 = vmatpush2.bf16.msra.mxu0 0
        %1323 = vmatprep.subr.bf16.mxu0 0
        %1324 = vmatpush2.bf16.msra.mxu0 0
        %1325 = vmatprep.mubr.bf16.mxu0 0
        %1326 = vmatmul.mubr.bf16.gmra.mxu0 %v1291
        %v1327 = vpop.f32.mrf.mxu0
        %v1328 = vadd.f32 %v1276, %v1327
        %v1329 = vpop.f32.mrf.mxu0
        %v1330 = vpop.f32.mrf.mxu0
        %v1331 = vpop.f32.mrf.mxu0
        %1332 = vdwg.mxu0
        %v1333 = vmul.f32 %v1328, 0.5
        %v1334 = vmul.f32 %v1328, 0.70710677
        %v1335 = verf.f32.pop %v1334
        %v1336 = vadd.f32 %v1335, 1.0
        %v1337 = vmul.f32 %v1333, %v1336
        %v1338 = vpack.c.bf16 %v1337, %v1337
        %v1339 = vld [vmem:[%s11] sm:$0xf]
        %v1340 = vld [vmem:[%s11 + $0x4] sm:$0xf]
        %v1341 = vld [vmem:[%s11 + $0x8] sm:$0xf]
        %v1342 = vld [vmem:[%s11 + $0xc] sm:$0xf]
        %v1343 = vld [vmem:[%s11 + $0x10] sm:$0xf]
        %v1344 = vld [vmem:[%s11 + $0x14] sm:$0xf]
        %v1345 = vld [vmem:[%s11 + $0x18] sm:$0xf]
        %v1346 = vld [vmem:[%s11 + $0x1c] sm:$0xf]
        %v1347 = vld [vmem:[%s12] sm:$0x1]
        %v1349 = vlaneseq
        %v1350 = vshrl.u32 %v1349, 7
        %v1351 = vsub.s32 0, %v1350
        %v1352 = vrot.slane %v1347, %v1351
        %v1362 = vunpack.c.l.b16 %v1339
        %v1363 = vunpack.c.l.b16 %v1340
        %v1364 = vunpack.c.l.b16 %v1341
        %v1365 = vunpack.c.l.b16 %v1342
        %v1366 = vunpack.c.l.b16 %v1343
        %v1367 = vunpack.c.l.b16 %v1344
        %v1368 = vunpack.c.l.b16 %v1345
        %v1369 = vunpack.c.l.b16 %v1346
        %v1370 = vpack.c.b16 %v1363, %v1362
        %v1371 = vpack.c.b16 %v1365, %v1364
        %v1372 = vpack.c.b16 %v1367, %v1366
        %v1373 = vpack.c.b16 %v1369, %v1368
        %vm1378 = vcmask 523264
        %v1380 = vsel %vm1378, %v1338, 0
        %1382 = vmatprep.subr.bf16.mxu0 0
        %1383 = vmatpush1.bf16.msra.mxu0 0
        %1384 = vmatprep.subr.bf16.mxu0 0
        %1385 = vmatpush1.bf16.msra.mxu0 0
        %1386 = vmatprep.subr.bf16.mxu0 0
        %1387 = vmatpush1.bf16.msra.mxu0 0
        %1388 = vmatprep.subr.bf16.mxu0 0
        %1389 = vmatpush1.bf16.msra.mxu0 0
        %1390 = vmatprep.subr.bf16.mxu0 0
        %1391 = vmatpush1.bf16.msra.mxu0 %v1373
        %1392 = vmatprep.subr.bf16.mxu0 0
        %1393 = vmatpush1.bf16.msra.mxu0 %v1372
        %1394 = vmatprep.subr.bf16.mxu0 0
        %1395 = vmatpush1.bf16.msra.mxu0 %v1371
        %1396 = vmatprep.subr.bf16.mxu0 0
        %1397 = vmatpush1.bf16.msra.mxu0 %v1370
        %1398 = vmatprep.subr.bf16.mxu0 0
        %1399 = vmatpush2.bf16.msra.mxu0 0
        %1400 = vmatprep.subr.bf16.mxu0 0
        %1401 = vmatpush2.bf16.msra.mxu0 0
        %1402 = vmatprep.subr.bf16.mxu0 0
        %1403 = vmatpush2.bf16.msra.mxu0 0
        %1404 = vmatprep.subr.bf16.mxu0 0
        %1405 = vmatpush2.bf16.msra.mxu0 0
        %1406 = vmatprep.subr.bf16.mxu0 0
        %1407 = vmatpush2.bf16.msra.mxu0 0
        %1408 = vmatprep.subr.bf16.mxu0 0
        %1409 = vmatpush2.bf16.msra.mxu0 0
        %1410 = vmatprep.subr.bf16.mxu0 0
        %1411 = vmatpush2.bf16.msra.mxu0 0
        %1412 = vmatprep.subr.bf16.mxu0 0
        %1413 = vmatpush2.bf16.msra.mxu0 0
        %1414 = vmatprep.mubr.bf16.mxu0 0
        %1415 = vmatmul.mubr.bf16.gmra.mxu0 %v1380
        %v1416 = vpop.f32.mrf.mxu0
        %v1417 = vadd.f32 %v1352, %v1416
        %v1418 = vpop.f32.mrf.mxu0
        %v1419 = vpop.f32.mrf.mxu0
        %v1420 = vpop.f32.mrf.mxu0
        %1421 = vdwg.mxu0
        %v1422 = vadd.f32 %v1236, %v1417
        %1423 = vst.msk [vmem:[%s484] sm:$0xff] %vm493, %v1422
        %s1424 = sand.u32 %s316, 1
        %s1425 = scalar_lea.sflag [#allocation4], %s1424
        %s1426 = sand.u32 %s316, 1
        %s1427 = smul.addr %s1426, 8
        %s1428 = scalar_lea.vmem [#allocation10], %s1427
        // Predicated region
        $region89: #{tpu_custom_call.1} parent=71 // pred_check
          %p1429 = pneg %p326
        $region90: #{tpu_custom_call.1} parent=71 // pred_check_branch
          %1431 = sbr.rel (%p1429) target = $region92
        $region91: #{tpu_custom_call.1} parent=71 // pred_region
          %s1433 = ssub.s32 128, 128
          %1434 = vsyncadd %s1425, %s1433
          %s1435 = smul.addr %s30, 128
          %s1436 = scalar_lea.hbm %s13, %s1435
          %s1438 = sshll.u32 %s1428, 4
          %s1439 = int_to_ptr.vmem [resolvable:$true] %s1438
          %1441 = dma.vmem_to_hbm [thread:$0]  %s1439, 128, %s1436, %s1425
        $region92: #{tpu_custom_call.1} parent=71 // pred_fallthru
          _
      $region72: #{tpu_custom_call.1} parent=5 // pred_fallthru
        _
      %p1442 = scmp.le.s32.totalorder 2, %s25
      // Predicated region
      $region93: #{tpu_custom_call.1} parent=5 // pred_check
        %p1443 = pneg %p1442
      $region94: #{tpu_custom_call.1} parent=5 // pred_check_branch
        %1445 = sbr.rel (%p1443) target = $region96
      $region95: #{tpu_custom_call.1} parent=5 // pred_region
        %s1446 = ssub.s32 %s25, 2
        // Predicated region
        $region97: #{tpu_custom_call.1} parent=95 // pred_check
          %p1447 = pneg %p332
        $region98: #{tpu_custom_call.1} parent=95 // pred_check_branch
          %1449 = sbr.rel (%p1447) target = $region100
        $region99: #{tpu_custom_call.1} parent=95 // pred_region
          %s1450 = sand.u32 %s317, 1
          %s1451 = scalar_lea.sflag [#allocation4], %s1450
          %s1452 = sand.u32 %s317, 1
          %s1453 = smul.addr %s1452, 8
          %s1454 = scalar_lea.vmem [#allocation10], %s1453
          %1455 = dma.done %s1451, 128
        $region100: #{tpu_custom_call.1} parent=95 // pred_fallthru
          _
      $region96: #{tpu_custom_call.1} parent=5 // pred_fallthru
        _
    $region6: #{tpu_custom_call.1} parent=1 // loop_footer
      %s29 = sadd.s32 1, %s25
    $region7: #{tpu_custom_call.1} parent=1 // loop_footer_branch
      %24 = sbr.rel target = $region3
    $region8: #{tpu_custom_call.1} parent=1 // loop_exit
      _
    %1456 = vsyncpa [#allocation3], 1
    %s1457 = scalar_lea.sflag [#allocation3], 1
    %1458 = vsyncpa %s1457, 1
    %1459 = vsyncpa [#allocation6], 1
    %1460 = vsyncpa [#allocation9], 1
    %1461 = vsyncpa [#allocation4], 1
    %s1462 = scalar_lea.sflag [#allocation4], 1
    %1463 = vsyncpa %s1462, 1

// kernel: tpu_custom_call.1
$region0: #{tpu_custom_call.1}
  #allocation0 [shape = 'u32[]', space=smem, size = 0x4, offset = 0x4, fixed_abs, tag = 'smem constant byte address 0x4 - core index']
  #allocation1 [shape = 'u32[144,128]{1,0:T(1,128)}', space=vmem, size = 0x12000, scoped, tag = 'internal scratch']
  %s0 = inlined_call_operand.vmem [shape: f32[2,8,32], index: 0, kind: input, shape index: {}]
  %s1 = inlined_call_operand.vmem [shape: f32[1,32], index: 1, kind: input, shape index: {}]
  %s2 = inlined_call_operand.vmem [shape: f32[1,32], index: 2, kind: input, shape index: {}]
  %s3 = inlined_call_operand.vmem [shape: bf16[32,96], index: 3, kind: input, shape index: {}]
  %s4 = inlined_call_operand.vmem [shape: f32[1,96], index: 4, kind: input, shape index: {}]
  %s5 = inlined_call_operand.vmem [shape: bf16[4,8,32], index: 5, kind: input, shape index: {}]
  %s6 = inlined_call_operand.vmem [shape: f32[1,32], index: 6, kind: input, shape index: {}]
  %s7 = inlined_call_operand.hbm [shape: f32[1,32], index: 7, kind: input, shape index: {}]
  %s8 = inlined_call_operand.hbm [shape: f32[1,32], index: 8, kind: input, shape index: {}]
  %s9 = inlined_call_operand.hbm [shape: bf16[32,64], index: 9, kind: input, shape index: {}]
  %s10 = inlined_call_operand.hbm [shape: f32[1,64], index: 10, kind: input, shape index: {}]
  %s11 = inlined_call_operand.vmem [shape: bf16[64,32], index: 11, kind: input, shape index: {}]
  %s12 = inlined_call_operand.vmem [shape: f32[1,32], index: 12, kind: input, shape index: {}]
  %s13 = inlined_call_operand.hbm [shape: f32[2,8,32], index: 13, kind: output, shape index: {}]
  %s14 = sld [smem:[#allocation0]]
  $region101: #{tpu_custom_call.1} parent=0
    _
  %s16 = ssub.s32 1, %s14
  %s17 = scalar_select 0, %s16, %s14
  $region1: #{tpu_custom_call.1} parent=0
    #allocation2 [shape = 'u8[512]{0}', space=vmem, size = 0x400, scoped, tag = 'input window, operand 7, single buffered']
    #allocation3 [shape = 's32[2]{0}', space=sflag, size = 0x8, scoped, tag = 'scoped memory for tpu_custom_call.1']
    #allocation4 [shape = 's32[2]{0}', space=sflag, size = 0x8, scoped, tag = 'scoped memory for tpu_custom_call.1']
    #allocation5 [shape = 'u8[512]{0}', space=vmem, size = 0x400, scoped, tag = 'input window, operand 8, single buffered']
    #allocation6 [shape = 's32[1]{0}', space=sflag, size = 0x4, scoped, tag = 'scoped memory for tpu_custom_call.1']
    #allocation7 [shape = 'u8[8192]{0}', space=vmem, size = 0x2000, scoped, tag = 'input window, operand 9, single buffered']
    #allocation8 [shape = 'u8[512]{0}', space=vmem, size = 0x400, scoped, tag = 'input window, operand 10, single buffered']
    #allocation9 [shape = 's32[1]{0}', space=sflag, size = 0x4, scoped, tag = 'scoped memory for tpu_custom_call.1']
    #allocation10 [shape = 'u8[8192]{0}', space=vmem, size = 0x2000, scoped, tag = 'output window, operand 0']
    %18 = vsyncpa [#allocation3], 0
    %19 = vsyncpa [#allocation6], 0
    %20 = vsyncpa [#allocation9], 0
    %21 = vsyncpa [#allocation4], 0
    %s22 = scalar_lea.sflag [#allocation4], 1
    %23 = vsyncpa %s22, 0
    loop: start=0, step=1, limit=4
    $region2: #{tpu_custom_call.1} parent=1 // loop_pre_header
      _
    $region3: #{tpu_custom_call.1} parent=1 // loop_header
      %s25 = sphi 0, %s29
      %p26 = scmp.ge.s32.totalorder %s25, 4
      %s35 = sphi 0, %s37
      %s38 = sphi 0, %s35
      %s39 = sphi 0, %s38
      %s55 = sphi 0, %s39
      %s59 = sphi 0, %s59
      %s61 = sphi 0, %s59
      %s62 = sphi 0, %s61
      %s76 = sphi 0, %s62
      %s80 = sphi 0, %s80
      %s82 = sphi 0, %s80
      %s83 = sphi 0, %s82
      %s97 = sphi 0, %s83
      %s101 = sphi 0, %s101
      %s103 = sphi 0, %s101
      %s104 = sphi 0, %s103
      %s118 = sphi 0, %s104
      %s122 = sphi 0, %s122
      %s124 = sphi 0, %s122
      %s125 = sphi 0, %s124
      %s139 = sphi 0, %s125
      %s143 = sphi 0, %s143
      %s145 = sphi 0, %s143
      %s146 = sphi 0, %s145
      %s160 = sphi 0, %s146
      %s164 = sphi 0, %s164
      %s166 = sphi 0, %s164
      %s167 = sphi 0, %s166
      %s181 = sphi 0, %s167
      %s185 = sphi 0, %s185
      %s187 = sphi 0, %s185
      %s188 = sphi 0, %s187
      %s202 = sphi 0, %s188
      %s206 = sphi 0, %s206
      %s208 = sphi 0, %s206
      %s209 = sphi 0, %s208
      %s223 = sphi 0, %s209
      %s227 = sphi 0, %s227
      %s229 = sphi 0, %s227
      %s230 = sphi 0, %s229
      %s244 = sphi 0, %s230
      %s248 = sphi 0, %s248
      %s250 = sphi 0, %s248
      %s251 = sphi 0, %s250
      %s265 = sphi 0, %s251
      %s269 = sphi 0, %s269
      %s271 = sphi 0, %s269
      %s272 = sphi 0, %s271
      %s286 = sphi 0, %s272
      %s290 = sphi 0, %s290
      %s292 = sphi 0, %s290
      %s293 = sphi 0, %s292
      %s307 = sphi 0, %s293
      %s313 = sphi 0, %s315
      %s316 = sphi 0, %s313
      %s317 = sphi 0, %s316
      %s333 = sphi 0, %s317
    $region4: #{tpu_custom_call.1} parent=1 // loop_header_branch
      %28 = sbr.rel (%p26) target = $region8
    $region5: #{tpu_custom_call.1} parent=1 // loop_body
      %s30 = ssub.s32 %s25, 1
      %s31 = ssub.s32 %s25, 2
      %s32 = sadd.s32 %s25, 1
      %s33 = ssub.s32 %s25, %s32
      %p34 = scmp.eq.s32.totalorder %s33, 0
      %s36 = sadd.s32 %s35, 1
      %s37 = scalar_select %p34, %s35, %s36
      %p40 = pneg %p34
      %p41 = scmp.eq.s32.totalorder %s25, 1
      %p42 = por %p40, %p41
      %p43 = scmp.ne.s32.totalorder %s35, %s38
      %p44 = scmp.eq.s32.totalorder %s25, 0
      %p45 = por %p43, %p44
      %p46 = scmp.ne.s32.totalorder %s35, %s38
      %p47 = scmp.eq.s32.totalorder %s30, 1
      %p48 = por %p46, %p47
      %p49 = scmp.ne.s32.totalorder %s38, %s39
      %p50 = scmp.eq.s32.totalorder %s30, 0
      %p51 = por %p49, %p50
      %p52 = scmp.ne.s32.totalorder %s38, %s39
      %p53 = scmp.eq.s32.totalorder %s31, 1
      %p54 = por %p52, %p53
      %p56 = scmp.ne.s32.totalorder %s39, %s55
      %p57 = scmp.eq.s32.totalorder %s31, 0
      %p58 = por %p56, %p57
      %s60 = sadd.s32 %s59, 1
      %p63 = scmp.eq.s32.totalorder %s25, 1
      %p64 = scmp.ne.s32.totalorder %s59, %s61
      %p65 = scmp.eq.s32.totalorder %s25, 0
      %p66 = por %p64, %p65
      %p67 = scmp.ne.s32.totalorder %s59, %s61
      %p68 = scmp.eq.s32.totalorder %s30, 1
      %p69 = por %p67, %p68
      %p70 = scmp.ne.s32.totalorder %s61, %s62
      %p71 = scmp.eq.s32.totalorder %s30, 0
      %p72 = por %p70, %p71
      %p73 = scmp.ne.s32.totalorder %s61, %s62
      %p74 = scmp.eq.s32.totalorder %s31, 1
      %p75 = por %p73, %p74
      %p77 = scmp.ne.s32.totalorder %s62, %s76
      %p78 = scmp.eq.s32.totalorder %s31, 0
      %p79 = por %p77, %p78
      %s81 = sadd.s32 %s80, 1
      %p84 = scmp.eq.s32.totalorder %s25, 1
      %p85 = scmp.ne.s32.totalorder %s80, %s82
      %p86 = scmp.eq.s32.totalorder %s25, 0
      %p87 = por %p85, %p86
      %p88 = scmp.ne.s32.totalorder %s80, %s82
      %p89 = scmp.eq.s32.totalorder %s30, 1
      %p90 = por %p88, %p89
      %p91 = scmp.ne.s32.totalorder %s82, %s83
      %p92 = scmp.eq.s32.totalorder %s30, 0
      %p93 = por %p91, %p92
      %p94 = scmp.ne.s32.totalorder %s82, %s83
      %p95 = scmp.eq.s32.totalorder %s31, 1
      %p96 = por %p94, %p95
      %p98 = scmp.ne.s32.totalorder %s83, %s97
      %p99 = scmp.eq.s32.totalorder %s31, 0
      %p100 = por %p98, %p99
      %s102 = sadd.s32 %s101, 1
      %p105 = scmp.eq.s32.totalorder %s25, 1
      %p106 = scmp.ne.s32.totalorder %s101, %s103
      %p107 = scmp.eq.s32.totalorder %s25, 0
      %p108 = por %p106, %p107
      %p109 = scmp.ne.s32.totalorder %s101, %s103
      %p110 = scmp.eq.s32.totalorder %s30, 1
      %p111 = por %p109, %p110
      %p112 = scmp.ne.s32.totalorder %s103, %s104
      %p113 = scmp.eq.s32.totalorder %s30, 0
      %p114 = por %p112, %p113
      %p115 = scmp.ne.s32.totalorder %s103, %s104
      %p116 = scmp.eq.s32.totalorder %s31, 1
      %p117 = por %p115, %p116
      %p119 = scmp.ne.s32.totalorder %s104, %s118
      %p120 = scmp.eq.s32.totalorder %s31, 0
      %p121 = por %p119, %p120
      %s123 = sadd.s32 %s122, 1
      %p126 = scmp.eq.s32.totalorder %s25, 1
      %p127 = scmp.ne.s32.totalorder %s122, %s124
      %p128 = scmp.eq.s32.totalorder %s25, 0
      %p129 = por %p127, %p128
      %p130 = scmp.ne.s32.totalorder %s122, %s124
      %p131 = scmp.eq.s32.totalorder %s30, 1
      %p132 = por %p130, %p131
      %p133 = scmp.ne.s32.totalorder %s124, %s125
      %p134 = scmp.eq.s32.totalorder %s30, 0
      %p135 = por %p133, %p134
      %p136 = scmp.ne.s32.totalorder %s124, %s125
      %p137 = scmp.eq.s32.totalorder %s31, 1
      %p138 = por %p136, %p137
      %p140 = scmp.ne.s32.totalorder %s125, %s139
      %p141 = scmp.eq.s32.totalorder %s31, 0
      %p142 = por %p140, %p141
      %s144 = sadd.s32 %s143, 1
      %p147 = scmp.eq.s32.totalorder %s25, 1
      %p148 = scmp.ne.s32.totalorder %s143, %s145
      %p149 = scmp.eq.s32.totalorder %s25, 0
      %p150 = por %p148, %p149
      %p151 = scmp.ne.s32.totalorder %s143, %s145
      %p152 = scmp.eq.s32.totalorder %s30, 1
      %p153 = por %p151, %p152
      %p154 = scmp.ne.s32.totalorder %s145, %s146
      %p155 = scmp.eq.s32.totalorder %s30, 0
      %p156 = por %p154, %p155
      %p157 = scmp.ne.s32.totalorder %s145, %s146
      %p158 = scmp.eq.s32.totalorder %s31, 1
      %p159 = por %p157, %p158
      %p161 = scmp.ne.s32.totalorder %s146, %s160
      %p162 = scmp.eq.s32.totalorder %s31, 0
      %p163 = por %p161, %p162
      %s165 = sadd.s32 %s164, 1
      %p168 = scmp.eq.s32.totalorder %s25, 1
      %p169 = scmp.ne.s32.totalorder %s164, %s166
      %p170 = scmp.eq.s32.totalorder %s25, 0
      %p171 = por %p169, %p170
      %p172 = scmp.ne.s32.totalorder %s164, %s166
      %p173 = scmp.eq.s32.totalorder %s30, 1
      %p174 = por %p172, %p173
      %p175 = scmp.ne.s32.totalorder %s166, %s167
      %p176 = scmp.eq.s32.totalorder %s30, 0
      %p177 = por %p175, %p176
      %p178 = scmp.ne.s32.totalorder %s166, %s167
      %p179 = scmp.eq.s32.totalorder %s31, 1
      %p180 = por %p178, %p179
      %p182 = scmp.ne.s32.totalorder %s167, %s181
      %p183 = scmp.eq.s32.totalorder %s31, 0
      %p184 = por %p182, %p183
      %s186 = sadd.s32 %s185, 1
      %p189 = scmp.eq.s32.totalorder %s25, 1
      %p190 = scmp.ne.s32.totalorder %s185, %s187
      %p191 = scmp.eq.s32.totalorder %s25, 0
      %p192 = por %p190, %p191
      %p193 = scmp.ne.s32.totalorder %s185, %s187
      %p194 = scmp.eq.s32.totalorder %s30, 1
      %p195 = por %p193, %p194
      %p196 = scmp.ne.s32.totalorder %s187, %s188
      %p197 = scmp.eq.s32.totalorder %s30, 0
      %p198 = por %p196, %p197
      %p199 = scmp.ne.s32.totalorder %s187, %s188
      %p200 = scmp.eq.s32.totalorder %s31, 1
      %p201 = por %p199, %p200
      %p203 = scmp.ne.s32.totalorder %s188, %s202
      %p204 = scmp.eq.s32.totalorder %s31, 0
      %p205 = por %p203, %p204
      %s207 = sadd.s32 %s206, 1
      %p210 = scmp.eq.s32.totalorder %s25, 1
      %p211 = scmp.ne.s32.totalorder %s206, %s208
      %p212 = scmp.eq.s32.totalorder %s25, 0
      %p213 = por %p211, %p212
      %p214 = scmp.ne.s32.totalorder %s206, %s208
      %p215 = scmp.eq.s32.totalorder %s30, 1
      %p216 = por %p214, %p215
      %p217 = scmp.ne.s32.totalorder %s208, %s209
      %p218 = scmp.eq.s32.totalorder %s30, 0
      %p219 = por %p217, %p218
      %p220 = scmp.ne.s32.totalorder %s208, %s209
      %p221 = scmp.eq.s32.totalorder %s31, 1
      %p222 = por %p220, %p221
      %p224 = scmp.ne.s32.totalorder %s209, %s223
      %p225 = scmp.eq.s32.totalorder %s31, 0
      %p226 = por %p224, %p225
      %s228 = sadd.s32 %s227, 1
      %p231 = scmp.eq.s32.totalorder %s25, 1
      %p232 = scmp.ne.s32.totalorder %s227, %s229
      %p233 = scmp.eq.s32.totalorder %s25, 0
      %p234 = por %p232, %p233
      %p235 = scmp.ne.s32.totalorder %s227, %s229
      %p236 = scmp.eq.s32.totalorder %s30, 1
      %p237 = por %p235, %p236
      %p238 = scmp.ne.s32.totalorder %s229, %s230
      %p239 = scmp.eq.s32.totalorder %s30, 0
      %p240 = por %p238, %p239
      %p241 = scmp.ne.s32.totalorder %s229, %s230
      %p242 = scmp.eq.s32.totalorder %s31, 1
      %p243 = por %p241, %p242
      %p245 = scmp.ne.s32.totalorder %s230, %s244
      %p246 = scmp.eq.s32.totalorder %s31, 0
      %p247 = por %p245, %p246
      %s249 = sadd.s32 %s248, 1
      %p252 = scmp.eq.s32.totalorder %s25, 1
      %p253 = scmp.ne.s32.totalorder %s248, %s250
      %p254 = scmp.eq.s32.totalorder %s25, 0
      %p255 = por %p253, %p254
      %p256 = scmp.ne.s32.totalorder %s248, %s250
      %p257 = scmp.eq.s32.totalorder %s30, 1
      %p258 = por %p256, %p257
      %p259 = scmp.ne.s32.totalorder %s250, %s251
      %p260 = scmp.eq.s32.totalorder %s30, 0
      %p261 = por %p259, %p260
      %p262 = scmp.ne.s32.totalorder %s250, %s251
      %p263 = scmp.eq.s32.totalorder %s31, 1
      %p264 = por %p262, %p263
      %p266 = scmp.ne.s32.totalorder %s251, %s265
      %p267 = scmp.eq.s32.totalorder %s31, 0
      %p268 = por %p266, %p267
      %s270 = sadd.s32 %s269, 1
      %p273 = scmp.eq.s32.totalorder %s25, 1
      %p274 = scmp.ne.s32.totalorder %s269, %s271
      %p275 = scmp.eq.s32.totalorder %s25, 0
      %p276 = por %p274, %p275
      %p277 = scmp.ne.s32.totalorder %s269, %s271
      %p278 = scmp.eq.s32.totalorder %s30, 1
      %p279 = por %p277, %p278
      %p280 = scmp.ne.s32.totalorder %s271, %s272
      %p281 = scmp.eq.s32.totalorder %s30, 0
      %p282 = por %p280, %p281
      %p283 = scmp.ne.s32.totalorder %s271, %s272
      %p284 = scmp.eq.s32.totalorder %s31, 1
      %p285 = por %p283, %p284
      %p287 = scmp.ne.s32.totalorder %s272, %s286
      %p288 = scmp.eq.s32.totalorder %s31, 0
      %p289 = por %p287, %p288
      %s291 = sadd.s32 %s290, 1
      %p294 = scmp.eq.s32.totalorder %s25, 1
      %p295 = scmp.ne.s32.totalorder %s290, %s292
      %p296 = scmp.eq.s32.totalorder %s25, 0
      %p297 = por %p295, %p296
      %p298 = scmp.ne.s32.totalorder %s290, %s292
      %p299 = scmp.eq.s32.totalorder %s30, 1
      %p300 = por %p298, %p299
      %p301 = scmp.ne.s32.totalorder %s292, %s293
      %p302 = scmp.eq.s32.totalorder %s30, 0
      %p303 = por %p301, %p302
      %p304 = scmp.ne.s32.totalorder %s292, %s293
      %p305 = scmp.eq.s32.totalorder %s31, 1
      %p306 = por %p304, %p305
      %p308 = scmp.ne.s32.totalorder %s293, %s307
      %p309 = scmp.eq.s32.totalorder %s31, 0
      %p310 = por %p308, %p309
      %s311 = ssub.s32 %s25, %s32
      %p312 = scmp.eq.s32.totalorder %s311, 0
      %s314 = sadd.s32 %s313, 1
      %s315 = scalar_select %p312, %s313, %s314
      %p318 = pneg %p312
      %p319 = scmp.eq.s32.totalorder %s25, 1
      %p320 = por %p318, %p319
      %p321 = scmp.ne.s32.totalorder %s313, %s316
      %p322 = scmp.eq.s32.totalorder %s25, 0
      %p323 = por %p321, %p322
      %p324 = scmp.ne.s32.totalorder %s313, %s316
      %p325 = scmp.eq.s32.totalorder %s30, 1
      %p326 = por %p324, %p325
      %p327 = scmp.ne.s32.totalorder %s316, %s317
      %p328 = scmp.eq.s32.totalorder %s30, 0
      %p329 = por %p327, %p328
      %p330 = scmp.ne.s32.totalorder %s316, %s317
      %p331 = scmp.eq.s32.totalorder %s31, 1
      %p332 = por %p330, %p331
      %p334 = scmp.ne.s32.totalorder %s317, %s333
      %p335 = scmp.eq.s32.totalorder %s31, 0
      %p336 = por %p334, %p335
      %p337 = scmp.le.s32.totalorder 1, %s25
      %p338 = scmp.lt.s32.totalorder %s25, 3
      %p339 = pnand %p337, %p338
      %p340 = pneg %p339
      // Predicated region
      $region9: #{tpu_custom_call.1} parent=5 // pred_check
        _
      $region10: #{tpu_custom_call.1} parent=5 // pred_check_branch
        %342 = sbr.rel (%p339) target = $region12
      $region11: #{tpu_custom_call.1} parent=5 // pred_region
        %s343 = ssub.s32 %s25, 1
        // Predicated region
        $region13: #{tpu_custom_call.1} parent=11 // pred_check
          %p344 = pneg %p72
        $region14: #{tpu_custom_call.1} parent=11 // pred_check_branch
          %346 = sbr.rel (%p344) target = $region16
        $region15: #{tpu_custom_call.1} parent=11 // pred_region
          _
        $region16: #{tpu_custom_call.1} parent=11 // pred_fallthru
          _
        // Predicated region
        $region17: #{tpu_custom_call.1} parent=11 // pred_check
          %p347 = pneg %p93
        $region18: #{tpu_custom_call.1} parent=11 // pred_check_branch
          %349 = sbr.rel (%p347) target = $region20
        $region19: #{tpu_custom_call.1} parent=11 // pred_region
          _
        $region20: #{tpu_custom_call.1} parent=11 // pred_fallthru
          _
        // Predicated region
        $region21: #{tpu_custom_call.1} parent=11 // pred_check
          %p350 = pneg %p114
        $region22: #{tpu_custom_call.1} parent=11 // pred_check_branch
          %352 = sbr.rel (%p350) target = $region24
        $region23: #{tpu_custom_call.1} parent=11 // pred_region
          _
        $region24: #{tpu_custom_call.1} parent=11 // pred_fallthru
          _
        // Predicated region
        $region25: #{tpu_custom_call.1} parent=11 // pred_check
          %p353 = pneg %p135
        $region26: #{tpu_custom_call.1} parent=11 // pred_check_branch
          %355 = sbr.rel (%p353) target = $region28
        $region27: #{tpu_custom_call.1} parent=11 // pred_region
          _
        $region28: #{tpu_custom_call.1} parent=11 // pred_fallthru
          _
        // Predicated region
        $region29: #{tpu_custom_call.1} parent=11 // pred_check
          %p356 = pneg %p156
        $region30: #{tpu_custom_call.1} parent=11 // pred_check_branch
          %358 = sbr.rel (%p356) target = $region32
        $region31: #{tpu_custom_call.1} parent=11 // pred_region
          _
        $region32: #{tpu_custom_call.1} parent=11 // pred_fallthru
          _
        // Predicated region
        $region33: #{tpu_custom_call.1} parent=11 // pred_check
          %p359 = pneg %p177
        $region34: #{tpu_custom_call.1} parent=11 // pred_check_branch
          %361 = sbr.rel (%p359) target = $region36
        $region35: #{tpu_custom_call.1} parent=11 // pred_region
          _
        $region36: #{tpu_custom_call.1} parent=11 // pred_fallthru
          _
        // Predicated region
        $region37: #{tpu_custom_call.1} parent=11 // pred_check
          %p362 = pneg %p198
        $region38: #{tpu_custom_call.1} parent=11 // pred_check_branch
          %364 = sbr.rel (%p362) target = $region40
        $region39: #{tpu_custom_call.1} parent=11 // pred_region
          %s366 = ssub.s32 16, 16
          %367 = vsyncadd [#allocation3], %s366
          %s369 = sshll.u32 [#allocation2], 4
          %s370 = int_to_ptr.vmem [resolvable:$true] %s369
          %372 = dma.hbm_to_vmem [thread:$0]  %s7, 16, %s370, [#allocation3]
        $region40: #{tpu_custom_call.1} parent=11 // pred_fallthru
          _
        // Predicated region
        $region41: #{tpu_custom_call.1} parent=11 // pred_check
          %p373 = pneg %p219
        $region42: #{tpu_custom_call.1} parent=11 // pred_check_branch
          %375 = sbr.rel (%p373) target = $region44
        $region43: #{tpu_custom_call.1} parent=11 // pred_region
          %s377 = ssub.s32 16, 16
          %378 = vsyncadd [#allocation6], %s377
          %s380 = sshll.u32 [#allocation5], 4
          %s381 = int_to_ptr.vmem [resolvable:$true] %s380
          %383 = dma.hbm_to_vmem [thread:$0]  %s8, 16, %s381, [#allocation6]
        $region44: #{tpu_custom_call.1} parent=11 // pred_fallthru
          _
        // Predicated region
        $region45: #{tpu_custom_call.1} parent=11 // pred_check
          %p384 = pneg %p240
        $region46: #{tpu_custom_call.1} parent=11 // pred_check_branch
          %386 = sbr.rel (%p384) target = $region48
        $region47: #{tpu_custom_call.1} parent=11 // pred_region
          %s388 = ssub.s32 256, 256
          %389 = vsyncadd [#allocation6], %s388
          %s390 = sshll.u32 [#allocation7], 4
          %s391 = int_to_ptr.vmem [resolvable:$true] %s390
          %396 = dma.hbm_to_vmem [thread:$0]  %s9, 256, %s391, [#allocation6], 64, 64, 4
        $region48: #{tpu_custom_call.1} parent=11 // pred_fallthru
          _
        // Predicated region
        $region49: #{tpu_custom_call.1} parent=11 // pred_check
          %p397 = pneg %p261
        $region50: #{tpu_custom_call.1} parent=11 // pred_check_branch
          %399 = sbr.rel (%p397) target = $region52
        $region51: #{tpu_custom_call.1} parent=11 // pred_region
          %s401 = ssub.s32 16, 16
          %402 = vsyncadd [#allocation9], %s401
          %s404 = sshll.u32 [#allocation8], 4
          %s405 = int_to_ptr.vmem [resolvable:$true] %s404
          %407 = dma.hbm_to_vmem [thread:$0]  %s10, 16, %s405, [#allocation9]
        $region52: #{tpu_custom_call.1} parent=11 // pred_fallthru
          _
        // Predicated region
        $region53: #{tpu_custom_call.1} parent=11 // pred_check
          %p408 = pneg %p282
        $region54: #{tpu_custom_call.1} parent=11 // pred_check_branch
          %410 = sbr.rel (%p408) target = $region56
        $region55: #{tpu_custom_call.1} parent=11 // pred_region
          _
        $region56: #{tpu_custom_call.1} parent=11 // pred_fallthru
          _
        // Predicated region
        $region57: #{tpu_custom_call.1} parent=11 // pred_check
          %p411 = pneg %p303
        $region58: #{tpu_custom_call.1} parent=11 // pred_check_branch
          %413 = sbr.rel (%p411) target = $region60
        $region59: #{tpu_custom_call.1} parent=11 // pred_region
          _
        $region60: #{tpu_custom_call.1} parent=11 // pred_fallthru
          _
      $region12: #{tpu_custom_call.1} parent=5 // pred_fallthru
        _
      %p414 = scmp.lt.s32.totalorder %s25, 2
      // Predicated region
      $region61: #{tpu_custom_call.1} parent=5 // pred_check
        %p415 = pneg %p414
      $region62: #{tpu_custom_call.1} parent=5 // pred_check_branch
        %417 = sbr.rel (%p415) target = $region64
      $region63: #{tpu_custom_call.1} parent=5 // pred_region
        // Predicated region
        $region65: #{tpu_custom_call.1} parent=63 // pred_check
          %p418 = pneg %p45
        $region66: #{tpu_custom_call.1} parent=63 // pred_check_branch
          %420 = sbr.rel (%p418) target = $region68
        $region67: #{tpu_custom_call.1} parent=63 // pred_region
          %p421 = scmp.lt.s32.totalorder %s25, 1
          %s422 = scalar_select %p421, %s25, 1
          %s423 = smul.addr %s422, 8
          %s424 = scalar_lea.vmem %s0, %s423
        $region68: #{tpu_custom_call.1} parent=63 // pred_fallthru
          _
      $region64: #{tpu_custom_call.1} parent=5 // pred_fallthru
        _
      %p425 = scmp.le.s32.totalorder 1, %s25
      %p426 = scmp.lt.s32.totalorder %s25, 3
      %p427 = pnand %p425, %p426
      %p428 = pneg %p427
      // Predicated region
      $region69: #{tpu_custom_call.1} parent=5 // pred_check
        _
      $region70: #{tpu_custom_call.1} parent=5 // pred_check_branch
        %430 = sbr.rel (%p427) target = $region72
      $region71: #{tpu_custom_call.1} parent=5 // pred_region
        %s431 = ssub.s32 %s25, 1
        // Predicated region
        $region73: #{tpu_custom_call.1} parent=71 // pred_check
          %p432 = pneg %p198
        $region74: #{tpu_custom_call.1} parent=71 // pred_check_branch
          %434 = sbr.rel (%p432) target = $region76
        $region75: #{tpu_custom_call.1} parent=71 // pred_region
          %435 = dma.done [#allocation3], 16
        $region76: #{tpu_custom_call.1} parent=71 // pred_fallthru
          _
        // Predicated region
        $region77: #{tpu_custom_call.1} parent=71 // pred_check
          %p436 = pneg %p219
        $region78: #{tpu_custom_call.1} parent=71 // pred_check_branch
          %438 = sbr.rel (%p436) target = $region80
        $region79: #{tpu_custom_call.1} parent=71 // pred_region
          %439 = dma.done [#allocation6], 16
        $region80: #{tpu_custom_call.1} parent=71 // pred_fallthru
          _
        // Predicated region
        $region81: #{tpu_custom_call.1} parent=71 // pred_check
          %p440 = pneg %p240
        $region82: #{tpu_custom_call.1} parent=71 // pred_check_branch
          %442 = sbr.rel (%p440) target = $region84
        $region83: #{tpu_custom_call.1} parent=71 // pred_region
          %443 = dma.done [#allocation6], 256
        $region84: #{tpu_custom_call.1} parent=71 // pred_fallthru
          _
        // Predicated region
        $region85: #{tpu_custom_call.1} parent=71 // pred_check
          %p444 = pneg %p261
        $region86: #{tpu_custom_call.1} parent=71 // pred_check_branch
          %446 = sbr.rel (%p444) target = $region88
        $region87: #{tpu_custom_call.1} parent=71 // pred_region
          %447 = dma.done [#allocation9], 16
        $region88: #{tpu_custom_call.1} parent=71 // pred_fallthru
          _
        %p448 = scmp.lt.s32.totalorder %s30, 1
        %s449 = scalar_select %p448, %s30, 1
        %s450 = smul.addr %s449, 8
        %s451 = scalar_lea.vmem %s0, %s450
        %p452 = pneg %p51
        %p453 = pneg %p48
        %p454 = pneg %p72
        %p455 = pneg %p69
        %p456 = pneg %p93
        %p457 = pneg %p90
        %p458 = pneg %p114
        %p459 = pneg %p111
        %p460 = pneg %p135
        %p461 = pneg %p132
        %p462 = pneg %p156
        %p463 = pneg %p153
        %p464 = pneg %p177
        %p465 = pneg %p174
        %p466 = pneg %p198
        %p467 = pneg %p195
        %p468 = pneg %p219
        %p469 = pneg %p216
        %p470 = pneg %p240
        %p471 = pneg %p237
        %p472 = pneg %p261
        %p473 = pneg %p258
        %p474 = pneg %p282
        %p475 = pneg %p279
        %p476 = pneg %p303
        %p477 = pneg %p300
        %p478 = pneg %p329
        %p479 = pneg %p326
        %s480 = sand.u32 %s316, 1
        %s481 = scalar_lea.sflag [#allocation4], %s480
        %s482 = sand.u32 %s316, 1
        %s483 = smul.addr %s482, 8
        %s484 = scalar_lea.vmem [#allocation10], %s483
        %p485 = scmp.lt.s32.totalorder %s30, 1
        %s486 = scalar_select %p485, %s30, 1
        %s487 = smul.addr %s486, 8
        %s488 = scalar_lea.vmem %s0, %s487
        %v490 = vld [vmem:[%s488] sm:$0xff]
        %v491 = vld [vmem:[%s1] sm:$0x1]
        %v492 = vld [vmem:[%s2] sm:$0x1]
        %vm493 = vcmask 261120
        %v494 = vsel %vm493, %v490, 0.0
        %495 = vadd.xlane.f32.xlu0 %v494
        %v496 = vpop.xlane.xlu0 %495
        %v497 = vrcp.pop 32.0
        %v498 = vmul.f32 %v496, %v497
        %v499 = vsub.f32 %v490, %v498
        %v500 = vmul.f32 %v499, %v499
        %v501 = vsel %vm493, %v500, 0.0
        %502 = vadd.xlane.f32.xlu0 %v501
        %v503 = vpop.xlane.xlu0 %502
        %v504 = vmul.f32 %v503, %v497
        %v505 = vadd.f32 %v504, 1e-05
        %v506 = vrsqrt.pop %v505
        %v507 = vmul.f32 %v499, %v506
        %v509 = vlaneseq
        %v510 = vshrl.u32 %v509, 7
        %v511 = vsub.s32 0, %v510
        %v512 = vrot.slane %v491, %v511
        %v514 = vmul.f32 %v507, %v512
        %v516 = vlaneseq
        %v517 = vshrl.u32 %v516, 7
        %v518 = vsub.s32 0, %v517
        %v519 = vrot.slane %v492, %v518
        %v521 = vadd.f32 %v514, %v519
        %v522 = vpack.c.bf16 %v521, %v521
        %v523 = vld [vmem:[%s3] sm:$0xf]
        %v524 = vld [vmem:[%s3 + $0x4] sm:$0xf]
        %v525 = vld [vmem:[%s3 + $0x8] sm:$0xf]
        %v526 = vld [vmem:[%s3 + $0xc] sm:$0xf]
        %v527 = vld [vmem:[%s4] sm:$0x1]
        %v529 = vlaneseq
        %v530 = vshrl.u32 %v529, 7
        %v531 = vsub.s32 0, %v530
        %v532 = vrot.slane %v527, %v531
        %v538 = vunpack.c.l.b16 %v523
        %v539 = vunpack.c.l.b16 %v524
        %v540 = vunpack.c.l.b16 %v525
        %v541 = vunpack.c.l.b16 %v526
        %v542 = vpack.c.b16 %v539, %v538
        %v543 = vpack.c.b16 %v541, %v540
        %v547 = vsel %vm493, %v522, 0
        %549 = vmatprep.subr.bf16.mxu0 0
        %550 = vmatpush1.bf16.msra.mxu0 0
        %551 = vmatprep.subr.bf16.mxu0 0
        %552 = vmatpush1.bf16.msra.mxu0 0
        %553 = vmatprep.subr.bf16.mxu0 0
        %554 = vmatpush1.bf16.msra.mxu0 0
        %555 = vmatprep.subr.bf16.mxu0 0
        %556 = vmatpush1.bf16.msra.mxu0 0
        %557 = vmatprep.subr.bf16.mxu0 0
        %558 = vmatpush1.bf16.msra.mxu0 0
        %559 = vmatprep.subr.bf16.mxu0 0
        %560 = vmatpush1.bf16.msra.mxu0 0
        %561 = vmatprep.subr.bf16.mxu0 0
        %562 = vmatpush1.bf16.msra.mxu0 %v543
        %563 = vmatprep.subr.bf16.mxu0 0
        %564 = vmatpush1.bf16.msra.mxu0 %v542
        %565 = vmatprep.subr.bf16.mxu0 0
        %566 = vmatpush2.bf16.msra.mxu0 0
        %567 = vmatprep.subr.bf16.mxu0 0
        %568 = vmatpush2.bf16.msra.mxu0 0
        %569 = vmatprep.subr.bf16.mxu0 0
        %570 = vmatpush2.bf16.msra.mxu0 0
        %571 = vmatprep.subr.bf16.mxu0 0
        %572 = vmatpush2.bf16.msra.mxu0 0
        %573 = vmatprep.subr.bf16.mxu0 0
        %574 = vmatpush2.bf16.msra.mxu0 0
        %575 = vmatprep.subr.bf16.mxu0 0
        %576 = vmatpush2.bf16.msra.mxu0 0
        %577 = vmatprep.subr.bf16.mxu0 0
        %578 = vmatpush2.bf16.msra.mxu0 0
        %579 = vmatprep.subr.bf16.mxu0 0
        %580 = vmatpush2.bf16.msra.mxu0 0
        %581 = vmatprep.mubr.bf16.mxu0 0
        %582 = vmatmul.mubr.bf16.gmra.mxu0 %v547
        %v583 = vpop.f32.mrf.mxu0
        %v584 = vadd.f32 %v532, %v583
        %v585 = vpop.f32.mrf.mxu0
        %v586 = vpop.f32.mrf.mxu0
        %v587 = vpop.f32.mrf.mxu0
        %588 = vdwg.mxu0
        %v589 = vpack.c.bf16 %v584, %v584
        %591 = vrot.lane.b32.xlu0 %v589, 96
        %v592 = vpop.permute.xlu0 %591
        %vm593 = vcmask 64512
        %v595 = vsel %vm593, %v589, 0
        %v598 = vsel %vm593, %v592, 0
        %600 = vmatprep.subr.bf16.mxu0 0
        %601 = vmatpush1.bf16.xpose.msra.mxu0 0
        %602 = vmatprep.subr.bf16.mxu0 0
        %603 = vmatpush1.bf16.xpose.msra.mxu0 0
        %604 = vmatprep.subr.bf16.mxu0 0
        %605 = vmatpush1.bf16.xpose.msra.mxu0 0
        %606 = vmatprep.subr.bf16.mxu0 0
        %607 = vmatpush1.bf16.xpose.msra.mxu0 0
        %608 = vmatprep.subr.bf16.mxu0 0
        %609 = vmatpush1.bf16.xpose.msra.mxu0 0
        %610 = vmatprep.subr.bf16.mxu0 0
        %611 = vmatpush1.bf16.xpose.msra.mxu0 0
        %612 = vmatprep.subr.bf16.mxu0 0
        %613 = vmatpush1.bf16.xpose.msra.mxu0 0
        %614 = vmatprep.subr.bf16.mxu0 0
        %615 = vmatpush1.bf16.xpose.msra.mxu0 %v598
        %616 = vmatprep.subr.bf16.mxu0 0
        %617 = vmatpush2.bf16.xpose.msra.mxu0 0
        %618 = vmatprep.subr.bf16.mxu0 0
        %619 = vmatpush2.bf16.xpose.msra.mxu0 0
        %620 = vmatprep.subr.bf16.mxu0 0
        %621 = vmatpush2.bf16.xpose.msra.mxu0 0
        %622 = vmatprep.subr.bf16.mxu0 0
        %623 = vmatpush2.bf16.xpose.msra.mxu0 0
        %624 = vmatprep.subr.bf16.mxu0 0
        %625 = vmatpush2.bf16.xpose.msra.mxu0 0
        %626 = vmatprep.subr.bf16.mxu0 0
        %627 = vmatpush2.bf16.xpose.msra.mxu0 0
        %628 = vmatprep.subr.bf16.mxu0 0
        %629 = vmatpush2.bf16.xpose.msra.mxu0 0
        %630 = vmatprep.subr.bf16.mxu0 0
        %631 = vmatpush2.bf16.xpose.msra.mxu0 0
        %632 = vmatprep.mubr.bf16.mxu0 0
        %633 = vmatmul.mubr.bf16.gmra.mxu0 %v595
        %v634 = vpop.f32.mrf.mxu0
        %v635 = vadd.f32 0.0, %v634
        %v636 = vpop.f32.mrf.mxu0
        %v637 = vpop.f32.mrf.mxu0
        %v638 = vpop.f32.mrf.mxu0
        %639 = vdwg.mxu0
        %v640 = vsel %vm593, %v635, -inf
        %641 = vmax.xlane.f32.xlu0 %v640
        %v642 = vpop.xlane.xlu0 %641
        %v643 = vsub.f32 %v635, %v642
        %v644 = vmul.f32 %v643, 1.442695
        %v645 = vpow.pop %v644
        %v646 = vsel %vm593, %v645, 0.0
        %647 = vadd.xlane.f32.xlu0 %v646
        %v648 = vpop.xlane.xlu0 %647
        %v649 = vrcp.pop %v648
        %v650 = vmul.f32 %v645, %v649
        %v651 = vpack.c.bf16 %v650, %v650
        %652 = vrot.lane.b32.xlu0 %v589, 64
        %v653 = vpop.permute.xlu0 %652
        %v655 = vsel %vm593, %v651, 0
        %vm657 = vcmask 1043456
        %v659 = vsel %vm657, %v653, 0
        %661 = vmatprep.subr.bf16.mxu0 0
        %662 = vmatpush1.bf16.msra.mxu0 0
        %663 = vmatprep.subr.bf16.mxu0 0
        %664 = vmatpush1.bf16.msra.mxu0 0
        %665 = vmatprep.subr.bf16.mxu0 0
        %666 = vmatpush1.bf16.msra.mxu0 0
        %667 = vmatprep.subr.bf16.mxu0 0
        %668 = vmatpush1.bf16.msra.mxu0 0
        %669 = vmatprep.subr.bf16.mxu0 0
        %670 = vmatpush1.bf16.msra.mxu0 0
        %671 = vmatprep.subr.bf16.mxu0 0
        %672 = vmatpush1.bf16.msra.mxu0 0
        %673 = vmatprep.subr.bf16.mxu0 0
        %674 = vmatpush1.bf16.msra.mxu0 0
        %675 = vmatprep.subr.bf16.mxu0 0
        %676 = vmatpush1.bf16.msra.mxu0 %v659
        %677 = vmatprep.subr.bf16.mxu0 0
        %678 = vmatpush2.bf16.msra.mxu0 0
        %679 = vmatprep.subr.bf16.mxu0 0
        %680 = vmatpush2.bf16.msra.mxu0 0
        %681 = vmatprep.subr.bf16.mxu0 0
        %682 = vmatpush2.bf16.msra.mxu0 0
        %683 = vmatprep.subr.bf16.mxu0 0
        %684 = vmatpush2.bf16.msra.mxu0 0
        %685 = vmatprep.subr.bf16.mxu0 0
        %686 = vmatpush2.bf16.msra.mxu0 0
        %687 = vmatprep.subr.bf16.mxu0 0
        %688 = vmatpush2.bf16.msra.mxu0 0
        %689 = vmatprep.subr.bf16.mxu0 0
        %690 = vmatpush2.bf16.msra.mxu0 0
        %691 = vmatprep.subr.bf16.mxu0 0
        %692 = vmatpush2.bf16.msra.mxu0 0
        %693 = vmatprep.mubr.bf16.mxu0 0
        %694 = vmatmul.mubr.bf16.gmra.mxu0 %v655
        %v695 = vpop.f32.mrf.mxu0
        %v696 = vadd.f32 0.0, %v695
        %v697 = vpop.f32.mrf.mxu0
        %v698 = vpop.f32.mrf.mxu0
        %v699 = vpop.f32.mrf.mxu0
        %700 = vdwg.mxu0
        %v701 = vpack.c.bf16 %v696, %v696
        %v702 = vld [vmem:[%s5] sm:$0xf]
        %703 = vrot.lane.b32.xlu0 %v589, 120
        %v704 = vpop.permute.xlu0 %703
        %705 = vrot.lane.b32.xlu0 %v589, 88
        %v706 = vpop.permute.xlu0 %705
        %v708 = vsel %vm593, %v704, 0
        %v711 = vsel %vm593, %v706, 0
        %713 = vmatprep.subr.bf16.mxu0 0
        %714 = vmatpush1.bf16.xpose.msra.mxu0 0
        %715 = vmatprep.subr.bf16.mxu0 0
        %716 = vmatpush1.bf16.xpose.msra.mxu0 0
        %717 = vmatprep.subr.bf16.mxu0 0
        %718 = vmatpush1.bf16.xpose.msra.mxu0 0
        %719 = vmatprep.subr.bf16.mxu0 0
        %720 = vmatpush1.bf16.xpose.msra.mxu0 0
        %721 = vmatprep.subr.bf16.mxu0 0
        %722 = vmatpush1.bf16.xpose.msra.mxu0 0
        %723 = vmatprep.subr.bf16.mxu0 0
        %724 = vmatpush1.bf16.xpose.msra.mxu0 0
        %725 = vmatprep.subr.bf16.mxu0 0
        %726 = vmatpush1.bf16.xpose.msra.mxu0 0
        %727 = vmatprep.subr.bf16.mxu0 0
        %728 = vmatpush1.bf16.xpose.msra.mxu0 %v711
        %729 = vmatprep.subr.bf16.mxu0 0
        %730 = vmatpush2.bf16.xpose.msra.mxu0 0
        %731 = vmatprep.subr.bf16.mxu0 0
        %732 = vmatpush2.bf16.xpose.msra.mxu0 0
        %733 = vmatprep.subr.bf16.mxu0 0
        %734 = vmatpush2.bf16.xpose.msra.mxu0 0
        %735 = vmatprep.subr.bf16.mxu0 0
        %736 = vmatpush2.bf16.xpose.msra.mxu0 0
        %737 = vmatprep.subr.bf16.mxu0 0
        %738 = vmatpush2.bf16.xpose.msra.mxu0 0
        %739 = vmatprep.subr.bf16.mxu0 0
        %740 = vmatpush2.bf16.xpose.msra.mxu0 0
        %741 = vmatprep.subr.bf16.mxu0 0
        %742 = vmatpush2.bf16.xpose.msra.mxu0 0
        %743 = vmatprep.subr.bf16.mxu0 0
        %744 = vmatpush2.bf16.xpose.msra.mxu0 0
        %745 = vmatprep.mubr.bf16.mxu0 0
        %746 = vmatmul.mubr.bf16.gmra.mxu0 %v708
        %v747 = vpop.f32.mrf.mxu0
        %v748 = vadd.f32 0.0, %v747
        %v749 = vpop.f32.mrf.mxu0
        %v750 = vpop.f32.mrf.mxu0
        %v751 = vpop.f32.mrf.mxu0
        %752 = vdwg.mxu0
        %v753 = vsel %vm593, %v748, -inf
        %754 = vmax.xlane.f32.xlu0 %v753
        %v755 = vpop.xlane.xlu0 %754
        %v756 = vsub.f32 %v748, %v755
        %v757 = vmul.f32 %v756, 1.442695
        %v758 = vpow.pop %v757
        %v759 = vsel %vm593, %v758, 0.0
        %760 = vadd.xlane.f32.xlu0 %v759
        %v761 = vpop.xlane.xlu0 %760
        %v762 = vrcp.pop %v761
        %v763 = vmul.f32 %v758, %v762
        %v764 = vpack.c.bf16 %v763, %v763
        %765 = vrot.lane.b32.xlu0 %v589, 56
        %v766 = vpop.permute.xlu0 %765
        %v768 = vsel %vm593, %v764, 0
        %v771 = vsel %vm657, %v766, 0
        %773 = vmatprep.subr.bf16.mxu0 0
        %774 = vmatpush1.bf16.msra.mxu0 0
        %775 = vmatprep.subr.bf16.mxu0 0
        %776 = vmatpush1.bf16.msra.mxu0 0
        %777 = vmatprep.subr.bf16.mxu0 0
        %778 = vmatpush1.bf16.msra.mxu0 0
        %779 = vmatprep.subr.bf16.mxu0 0
        %780 = vmatpush1.bf16.msra.mxu0 0
        %781 = vmatprep.subr.bf16.mxu0 0
        %782 = vmatpush1.bf16.msra.mxu0 0
        %783 = vmatprep.subr.bf16.mxu0 0
        %784 = vmatpush1.bf16.msra.mxu0 0
        %785 = vmatprep.subr.bf16.mxu0 0
        %786 = vmatpush1.bf16.msra.mxu0 0
        %787 = vmatprep.subr.bf16.mxu0 0
        %788 = vmatpush1.bf16.msra.mxu0 %v771
        %789 = vmatprep.subr.bf16.mxu0 0
        %790 = vmatpush2.bf16.msra.mxu0 0
        %791 = vmatprep.subr.bf16.mxu0 0
        %792 = vmatpush2.bf16.msra.mxu0 0
        %793 = vmatprep.subr.bf16.mxu0 0
        %794 = vmatpush2.bf16.msra.mxu0 0
        %795 = vmatprep.subr.bf16.mxu0 0
        %796 = vmatpush2.bf16.msra.mxu0 0
        %797 = vmatprep.subr.bf16.mxu0 0
        %798 = vmatpush2.bf16.msra.mxu0 0
        %799 = vmatprep.subr.bf16.mxu0 0
        %800 = vmatpush2.bf16.msra.mxu0 0
        %801 = vmatprep.subr.bf16.mxu0 0
        %802 = vmatpush2.bf16.msra.mxu0 0
        %803 = vmatprep.subr.bf16.mxu0 0
        %804 = vmatpush2.bf16.msra.mxu0 0
        %805 = vmatprep.mubr.bf16.mxu0 0
        %806 = vmatmul.mubr.bf16.gmra.mxu0 %v768
        %v807 = vpop.f32.mrf.mxu0
        %v808 = vadd.f32 0.0, %v807
        %v809 = vpop.f32.mrf.mxu0
        %v810 = vpop.f32.mrf.mxu0
        %v811 = vpop.f32.mrf.mxu0
        %812 = vdwg.mxu0
        %v813 = vpack.c.bf16 %v808, %v808
        %s814 = scalar_lea.vmem %s5, 4
        %v815 = vld [vmem:[%s814] sm:$0xf]
        %v817 = vsel %vm593, %v813, 0
        %v820 = vsel %vm657, %v815, 0
        %822 = vmatprep.subr.bf16.mxu0 0
        %823 = vmatpush1.bf16.msra.mxu0 0
        %824 = vmatprep.subr.bf16.mxu0 0
        %825 = vmatpush1.bf16.msra.mxu0 0
        %826 = vmatprep.subr.bf16.mxu0 0
        %827 = vmatpush1.bf16.msra.mxu0 0
        %828 = vmatprep.subr.bf16.mxu0 0
        %829 = vmatpush1.bf16.msra.mxu0 0
        %830 = vmatprep.subr.bf16.mxu0 0
        %831 = vmatpush1.bf16.msra.mxu0 0
        %832 = vmatprep.subr.bf16.mxu0 0
        %833 = vmatpush1.bf16.msra.mxu0 0
        %834 = vmatprep.subr.bf16.mxu0 0
        %835 = vmatpush1.bf16.msra.mxu0 0
        %836 = vmatprep.subr.bf16.mxu0 0
        %837 = vmatpush1.bf16.msra.mxu0 %v820
        %838 = vmatprep.subr.bf16.mxu0 0
        %839 = vmatpush2.bf16.msra.mxu0 0
        %840 = vmatprep.subr.bf16.mxu0 0
        %841 = vmatpush2.bf16.msra.mxu0 0
        %842 = vmatprep.subr.bf16.mxu0 0
        %843 = vmatpush2.bf16.msra.mxu0 0
        %844 = vmatprep.subr.bf16.mxu0 0
        %845 = vmatpush2.bf16.msra.mxu0 0
        %846 = vmatprep.subr.bf16.mxu0 0
        %847 = vmatpush2.bf16.msra.mxu0 0
        %848 = vmatprep.subr.bf16.mxu0 0
        %849 = vmatpush2.bf16.msra.mxu0 0
        %850 = vmatprep.subr.bf16.mxu0 0
        %851 = vmatpush2.bf16.msra.mxu0 0
        %852 = vmatprep.subr.bf16.mxu0 0
        %853 = vmatpush2.bf16.msra.mxu0 0
        %854 = vmatprep.mubr.bf16.mxu0 0
        %855 = vmatmul.mubr.bf16.gmra.mxu0 %v817
        %v856 = vpop.f32.mrf.mxu0
        %v857 = vadd.f32 0.0, %v856
        %v858 = vpop.f32.mrf.mxu0
        %v859 = vpop.f32.mrf.mxu0
        %v860 = vpop.f32.mrf.mxu0
        %861 = vdwg.mxu0
        %v863 = vsel %vm593, %v701, 0
        %v866 = vsel %vm657, %v702, 0
        %868 = vmatprep.subr.bf16.mxu0 0
        %869 = vmatpush1.bf16.msra.mxu0 0
        %870 = vmatprep.subr.bf16.mxu0 0
        %871 = vmatpush1.bf16.msra.mxu0 0
        %872 = vmatprep.subr.bf16.mxu0 0
        %873 = vmatpush1.bf16.msra.mxu0 0
        %874 = vmatprep.subr.bf16.mxu0 0
        %875 = vmatpush1.bf16.msra.mxu0 0
        %876 = vmatprep.subr.bf16.mxu0 0
        %877 = vmatpush1.bf16.msra.mxu0 0
        %878 = vmatprep.subr.bf16.mxu0 0
        %879 = vmatpush1.bf16.msra.mxu0 0
        %880 = vmatprep.subr.bf16.mxu0 0
        %881 = vmatpush1.bf16.msra.mxu0 0
        %882 = vmatprep.subr.bf16.mxu0 0
        %883 = vmatpush1.bf16.msra.mxu0 %v866
        %884 = vmatprep.subr.bf16.mxu0 0
        %885 = vmatpush2.bf16.msra.mxu0 0
        %886 = vmatprep.subr.bf16.mxu0 0
        %887 = vmatpush2.bf16.msra.mxu0 0
        %888 = vmatprep.subr.bf16.mxu0 0
        %889 = vmatpush2.bf16.msra.mxu0 0
        %890 = vmatprep.subr.bf16.mxu0 0
        %891 = vmatpush2.bf16.msra.mxu0 0
        %892 = vmatprep.subr.bf16.mxu0 0
        %893 = vmatpush2.bf16.msra.mxu0 0
        %894 = vmatprep.subr.bf16.mxu0 0
        %895 = vmatpush2.bf16.msra.mxu0 0
        %896 = vmatprep.subr.bf16.mxu0 0
        %897 = vmatpush2.bf16.msra.mxu0 0
        %898 = vmatprep.subr.bf16.mxu0 0
        %899 = vmatpush2.bf16.msra.mxu0 0
        %900 = vmatprep.mubr.bf16.mxu0 0
        %901 = vmatmul.mubr.bf16.gmra.mxu0 %v863
        %v902 = vpop.f32.mrf.mxu0
        %v903 = vadd.f32 %v857, %v902
        %v904 = vpop.f32.mrf.mxu0
        %v905 = vpop.f32.mrf.mxu0
        %v906 = vpop.f32.mrf.mxu0
        %907 = vdwg.mxu0
        %908 = vrot.lane.b32.xlu0 %v589, 112
        %v909 = vpop.permute.xlu0 %908
        %910 = vrot.lane.b32.xlu0 %v589, 80
        %v911 = vpop.permute.xlu0 %910
        %v913 = vsel %vm593, %v909, 0
        %v916 = vsel %vm593, %v911, 0
        %918 = vmatprep.subr.bf16.mxu0 0
        %919 = vmatpush1.bf16.xpose.msra.mxu0 0
        %920 = vmatprep.subr.bf16.mxu0 0
        %921 = vmatpush1.bf16.xpose.msra.mxu0 0
        %922 = vmatprep.subr.bf16.mxu0 0
        %923 = vmatpush1.bf16.xpose.msra.mxu0 0
        %924 = vmatprep.subr.bf16.mxu0 0
        %925 = vmatpush1.bf16.xpose.msra.mxu0 0
        %926 = vmatprep.subr.bf16.mxu0 0
        %927 = vmatpush1.bf16.xpose.msra.mxu0 0
        %928 = vmatprep.subr.bf16.mxu0 0
        %929 = vmatpush1.bf16.xpose.msra.mxu0 0
        %930 = vmatprep.subr.bf16.mxu0 0
        %931 = vmatpush1.bf16.xpose.msra.mxu0 0
        %932 = vmatprep.subr.bf16.mxu0 0
        %933 = vmatpush1.bf16.xpose.msra.mxu0 %v916
        %934 = vmatprep.subr.bf16.mxu0 0
        %935 = vmatpush2.bf16.xpose.msra.mxu0 0
        %936 = vmatprep.subr.bf16.mxu0 0
        %937 = vmatpush2.bf16.xpose.msra.mxu0 0
        %938 = vmatprep.subr.bf16.mxu0 0
        %939 = vmatpush2.bf16.xpose.msra.mxu0 0
        %940 = vmatprep.subr.bf16.mxu0 0
        %941 = vmatpush2.bf16.xpose.msra.mxu0 0
        %942 = vmatprep.subr.bf16.mxu0 0
        %943 = vmatpush2.bf16.xpose.msra.mxu0 0
        %944 = vmatprep.subr.bf16.mxu0 0
        %945 = vmatpush2.bf16.xpose.msra.mxu0 0
        %946 = vmatprep.subr.bf16.mxu0 0
        %947 = vmatpush2.bf16.xpose.msra.mxu0 0
        %948 = vmatprep.subr.bf16.mxu0 0
        %949 = vmatpush2.bf16.xpose.msra.mxu0 0
        %950 = vmatprep.mubr.bf16.mxu0 0
        %951 = vmatmul.mubr.bf16.gmra.mxu0 %v913
        %v952 = vpop.f32.mrf.mxu0
        %v953 = vadd.f32 0.0, %v952
        %v954 = vpop.f32.mrf.mxu0
        %v955 = vpop.f32.mrf.mxu0
        %v956 = vpop.f32.mrf.mxu0
        %957 = vdwg.mxu0
        %v958 = vsel %vm593, %v953, -inf
        %959 = vmax.xlane.f32.xlu0 %v958
        %v960 = vpop.xlane.xlu0 %959
        %v961 = vsub.f32 %v953, %v960
        %v962 = vmul.f32 %v961, 1.442695
        %v963 = vpow.pop %v962
        %v964 = vsel %vm593, %v963, 0.0
        %965 = vadd.xlane.f32.xlu0 %v964
        %v966 = vpop.xlane.xlu0 %965
        %v967 = vrcp.pop %v966
        %v968 = vmul.f32 %v963, %v967
        %v969 = vpack.c.bf16 %v968, %v968
        %970 = vrot.lane.b32.xlu0 %v589, 48
        %v971 = vpop.permute.xlu0 %970
        %v973 = vsel %vm593, %v969, 0
        %v976 = vsel %vm657, %v971, 0
        %978 = vmatprep.subr.bf16.mxu0 0
        %979 = vmatpush1.bf16.msra.mxu0 0
        %980 = vmatprep.subr.bf16.mxu0 0
        %981 = vmatpush1.bf16.msra.mxu0 0
        %982 = vmatprep.subr.bf16.mxu0 0
        %983 = vmatpush1.bf16.msra.mxu0 0
        %984 = vmatprep.subr.bf16.mxu0 0
        %985 = vmatpush1.bf16.msra.mxu0 0
        %986 = vmatprep.subr.bf16.mxu0 0
        %987 = vmatpush1.bf16.msra.mxu0 0
        %988 = vmatprep.subr.bf16.mxu0 0
        %989 = vmatpush1.bf16.msra.mxu0 0
        %990 = vmatprep.subr.bf16.mxu0 0
        %991 = vmatpush1.bf16.msra.mxu0 0
        %992 = vmatprep.subr.bf16.mxu0 0
        %993 = vmatpush1.bf16.msra.mxu0 %v976
        %994 = vmatprep.subr.bf16.mxu0 0
        %995 = vmatpush2.bf16.msra.mxu0 0
        %996 = vmatprep.subr.bf16.mxu0 0
        %997 = vmatpush2.bf16.msra.mxu0 0
        %998 = vmatprep.subr.bf16.mxu0 0
        %999 = vmatpush2.bf16.msra.mxu0 0
        %1000 = vmatprep.subr.bf16.mxu0 0
        %1001 = vmatpush2.bf16.msra.mxu0 0
        %1002 = vmatprep.subr.bf16.mxu0 0
        %1003 = vmatpush2.bf16.msra.mxu0 0
        %1004 = vmatprep.subr.bf16.mxu0 0
        %1005 = vmatpush2.bf16.msra.mxu0 0
        %1006 = vmatprep.subr.bf16.mxu0 0
        %1007 = vmatpush2.bf16.msra.mxu0 0
        %1008 = vmatprep.subr.bf16.mxu0 0
        %1009 = vmatpush2.bf16.msra.mxu0 0
        %1010 = vmatprep.mubr.bf16.mxu0 0
        %1011 = vmatmul.mubr.bf16.gmra.mxu0 %v973
        %v1012 = vpop.f32.mrf.mxu0
        %v1013 = vadd.f32 0.0, %v1012
        %v1014 = vpop.f32.mrf.mxu0
        %v1015 = vpop.f32.mrf.mxu0
        %v1016 = vpop.f32.mrf.mxu0
        %1017 = vdwg.mxu0
        %v1018 = vpack.c.bf16 %v1013, %v1013
        %s1019 = scalar_lea.vmem %s5, 8
        %v1020 = vld [vmem:[%s1019] sm:$0xf]
        %v1022 = vsel %vm593, %v1018, 0
        %v1025 = vsel %vm657, %v1020, 0
        %1027 = vmatprep.subr.bf16.mxu0 0
        %1028 = vmatpush1.bf16.msra.mxu0 0
        %1029 = vmatprep.subr.bf16.mxu0 0
        %1030 = vmatpush1.bf16.msra.mxu0 0
        %1031 = vmatprep.subr.bf16.mxu0 0
        %1032 = vmatpush1.bf16.msra.mxu0 0
        %1033 = vmatprep.subr.bf16.mxu0 0
        %1034 = vmatpush1.bf16.msra.mxu0 0
        %1035 = vmatprep.subr.bf16.mxu0 0
        %1036 = vmatpush1.bf16.msra.mxu0 0
        %1037 = vmatprep.subr.bf16.mxu0 0
        %1038 = vmatpush1.bf16.msra.mxu0 0
        %1039 = vmatprep.subr.bf16.mxu0 0
        %1040 = vmatpush1.bf16.msra.mxu0 0
        %1041 = vmatprep.subr.bf16.mxu0 0
        %1042 = vmatpush1.bf16.msra.mxu0 %v1025
        %1043 = vmatprep.subr.bf16.mxu0 0
        %1044 = vmatpush2.bf16.msra.mxu0 0
        %1045 = vmatprep.subr.bf16.mxu0 0
        %1046 = vmatpush2.bf16.msra.mxu0 0
        %1047 = vmatprep.subr.bf16.mxu0 0
        %1048 = vmatpush2.bf16.msra.mxu0 0
        %1049 = vmatprep.subr.bf16.mxu0 0
        %1050 = vmatpush2.bf16.msra.mxu0 0
        %1051 = vmatprep.subr.bf16.mxu0 0
        %1052 = vmatpush2.bf16.msra.mxu0 0
        %1053 = vmatprep.subr.bf16.mxu0 0
        %1054 = vmatpush2.bf16.msra.mxu0 0
        %1055 = vmatprep.subr.bf16.mxu0 0
        %1056 = vmatpush2.bf16.msra.mxu0 0
        %1057 = vmatprep.subr.bf16.mxu0 0
        %1058 = vmatpush2.bf16.msra.mxu0 0
        %1059 = vmatprep.mubr.bf16.mxu0 0
        %1060 = vmatmul.mubr.bf16.gmra.mxu0 %v1022
        %v1061 = vpop.f32.mrf.mxu0
        %v1062 = vadd.f32 0.0, %v1061
        %v1063 = vpop.f32.mrf.mxu0
        %v1064 = vpop.f32.mrf.mxu0
        %v1065 = vpop.f32.mrf.mxu0
        %1066 = vdwg.mxu0
        %v1067 = vadd.f32 %v903, %v1062
        %1068 = vrot.lane.b32.xlu0 %v589, 104
        %v1069 = vpop.permute.xlu0 %1068
        %1070 = vrot.lane.b32.xlu0 %v589, 72
        %v1071 = vpop.permute.xlu0 %1070
        %v1073 = vsel %vm593, %v1069, 0
        %v1076 = vsel %vm593, %v1071, 0
        %1078 = vmatprep.subr.bf16.mxu0 0
        %1079 = vmatpush1.bf16.xpose.msra.mxu0 0
        %1080 = vmatprep.subr.bf16.mxu0 0
        %1081 = vmatpush1.bf16.xpose.msra.mxu0 0
        %1082 = vmatprep.subr.bf16.mxu0 0
        %1083 = vmatpush1.bf16.xpose.msra.mxu0 0
        %1084 = vmatprep.subr.bf16.mxu0 0
        %1085 = vmatpush1.bf16.xpose.msra.mxu0 0
        %1086 = vmatprep.subr.bf16.mxu0 0
        %1087 = vmatpush1.bf16.xpose.msra.mxu0 0
        %1088 = vmatprep.subr.bf16.mxu0 0
        %1089 = vmatpush1.bf16.xpose.msra.mxu0 0
        %1090 = vmatprep.subr.bf16.mxu0 0
        %1091 = vmatpush1.bf16.xpose.msra.mxu0 0
        %1092 = vmatprep.subr.bf16.mxu0 0
        %1093 = vmatpush1.bf16.xpose.msra.mxu0 %v1076
        %1094 = vmatprep.subr.bf16.mxu0 0
        %1095 = vmatpush2.bf16.xpose.msra.mxu0 0
        %1096 = vmatprep.subr.bf16.mxu0 0
        %1097 = vmatpush2.bf16.xpose.msra.mxu0 0
        %1098 = vmatprep.subr.bf16.mxu0 0
        %1099 = vmatpush2.bf16.xpose.msra.mxu0 0
        %1100 = vmatprep.subr.bf16.mxu0 0
        %1101 = vmatpush2.bf16.xpose.msra.mxu0 0
        %1102 = vmatprep.subr.bf16.mxu0 0
        %1103 = vmatpush2.bf16.xpose.msra.mxu0 0
        %1104 = vmatprep.subr.bf16.mxu0 0
        %1105 = vmatpush2.bf16.xpose.msra.mxu0 0
        %1106 = vmatprep.subr.bf16.mxu0 0
        %1107 = vmatpush2.bf16.xpose.msra.mxu0 0
        %1108 = vmatprep.subr.bf16.mxu0 0
        %1109 = vmatpush2.bf16.xpose.msra.mxu0 0
        %1110 = vmatprep.mubr.bf16.mxu0 0
        %1111 = vmatmul.mubr.bf16.gmra.mxu0 %v1073
        %v1112 = vpop.f32.mrf.mxu0
        %v1113 = vadd.f32 0.0, %v1112
        %v1114 = vpop.f32.mrf.mxu0
        %v1115 = vpop.f32.mrf.mxu0
        %v1116 = vpop.f32.mrf.mxu0
        %1117 = vdwg.mxu0
        %v1118 = vsel %vm593, %v1113, -inf
        %1119 = vmax.xlane.f32.xlu0 %v1118
        %v1120 = vpop.xlane.xlu0 %1119
        %v1121 = vsub.f32 %v1113, %v1120
        %v1122 = vmul.f32 %v1121, 1.442695
        %v1123 = vpow.pop %v1122
        %v1124 = vsel %vm593, %v1123, 0.0
        %1125 = vadd.xlane.f32.xlu0 %v1124
        %v1126 = vpop.xlane.xlu0 %1125
        %v1127 = vrcp.pop %v1126
        %v1128 = vmul.f32 %v1123, %v1127
        %v1129 = vpack.c.bf16 %v1128, %v1128
        %1130 = vrot.lane.b32.xlu0 %v589, 40
        %v1131 = vpop.permute.xlu0 %1130
        %v1133 = vsel %vm593, %v1129, 0
        %v1136 = vsel %vm657, %v1131, 0
        %1138 = vmatprep.subr.bf16.mxu0 0
        %1139 = vmatpush1.bf16.msra.mxu0 0
        %1140 = vmatprep.subr.bf16.mxu0 0
        %1141 = vmatpush1.bf16.msra.mxu0 0
        %1142 = vmatprep.subr.bf16.mxu0 0
        %1143 = vmatpush1.bf16.msra.mxu0 0
        %1144 = vmatprep.subr.bf16.mxu0 0
        %1145 = vmatpush1.bf16.msra.mxu0 0
        %1146 = vmatprep.subr.bf16.mxu0 0
        %1147 = vmatpush1.bf16.msra.mxu0 0
        %1148 = vmatprep.subr.bf16.mxu0 0
        %1149 = vmatpush1.bf16.msra.mxu0 0
        %1150 = vmatprep.subr.bf16.mxu0 0
        %1151 = vmatpush1.bf16.msra.mxu0 0
        %1152 = vmatprep.subr.bf16.mxu0 0
        %1153 = vmatpush1.bf16.msra.mxu0 %v1136
        %1154 = vmatprep.subr.bf16.mxu0 0
        %1155 = vmatpush2.bf16.msra.mxu0 0
        %1156 = vmatprep.subr.bf16.mxu0 0
        %1157 = vmatpush2.bf16.msra.mxu0 0
        %1158 = vmatprep.subr.bf16.mxu0 0
        %1159 = vmatpush2.bf16.msra.mxu0 0
        %1160 = vmatprep.subr.bf16.mxu0 0
        %1161 = vmatpush2.bf16.msra.mxu0 0
        %1162 = vmatprep.subr.bf16.mxu0 0
        %1163 = vmatpush2.bf16.msra.mxu0 0
        %1164 = vmatprep.subr.bf16.mxu0 0
        %1165 = vmatpush2.bf16.msra.mxu0 0
        %1166 = vmatprep.subr.bf16.mxu0 0
        %1167 = vmatpush2.bf16.msra.mxu0 0
        %1168 = vmatprep.subr.bf16.mxu0 0
        %1169 = vmatpush2.bf16.msra.mxu0 0
        %1170 = vmatprep.mubr.bf16.mxu0 0
        %1171 = vmatmul.mubr.bf16.gmra.mxu0 %v1133
        %v1172 = vpop.f32.mrf.mxu0
        %v1173 = vadd.f32 0.0, %v1172
        %v1174 = vpop.f32.mrf.mxu0
        %v1175 = vpop.f32.mrf.mxu0
        %v1176 = vpop.f32.mrf.mxu0
        %1177 = vdwg.mxu0
        %v1178 = vpack.c.bf16 %v1173, %v1173
        %s1179 = scalar_lea.vmem %s5, 12
        %v1180 = vld [vmem:[%s1179] sm:$0xf]
        %v1182 = vsel %vm593, %v1178, 0
        %v1185 = vsel %vm657, %v1180, 0
        %1187 = vmatprep.subr.bf16.mxu0 0
        %1188 = vmatpush1.bf16.msra.mxu0 0
        %1189 = vmatprep.subr.bf16.mxu0 0
        %1190 = vmatpush1.bf16.msra.mxu0 0
        %1191 = vmatprep.subr.bf16.mxu0 0
        %1192 = vmatpush1.bf16.msra.mxu0 0
        %1193 = vmatprep.subr.bf16.mxu0 0
        %1194 = vmatpush1.bf16.msra.mxu0 0
        %1195 = vmatprep.subr.bf16.mxu0 0
        %1196 = vmatpush1.bf16.msra.mxu0 0
        %1197 = vmatprep.subr.bf16.mxu0 0
        %1198 = vmatpush1.bf16.msra.mxu0 0
        %1199 = vmatprep.subr.bf16.mxu0 0
        %1200 = vmatpush1.bf16.msra.mxu0 0
        %1201 = vmatprep.subr.bf16.mxu0 0
        %1202 = vmatpush1.bf16.msra.mxu0 %v1185
        %1203 = vmatprep.subr.bf16.mxu0 0
        %1204 = vmatpush2.bf16.msra.mxu0 0
        %1205 = vmatprep.subr.bf16.mxu0 0
        %1206 = vmatpush2.bf16.msra.mxu0 0
        %1207 = vmatprep.subr.bf16.mxu0 0
        %1208 = vmatpush2.bf16.msra.mxu0 0
        %1209 = vmatprep.subr.bf16.mxu0 0
        %1210 = vmatpush2.bf16.msra.mxu0 0
        %1211 = vmatprep.subr.bf16.mxu0 0
        %1212 = vmatpush2.bf16.msra.mxu0 0
        %1213 = vmatprep.subr.bf16.mxu0 0
        %1214 = vmatpush2.bf16.msra.mxu0 0
        %1215 = vmatprep.subr.bf16.mxu0 0
        %1216 = vmatpush2.bf16.msra.mxu0 0
        %1217 = vmatprep.subr.bf16.mxu0 0
        %1218 = vmatpush2.bf16.msra.mxu0 0
        %1219 = vmatprep.mubr.bf16.mxu0 0
        %1220 = vmatmul.mubr.bf16.gmra.mxu0 %v1182
        %v1221 = vpop.f32.mrf.mxu0
        %v1222 = vadd.f32 0.0, %v1221
        %v1223 = vpop.f32.mrf.mxu0
        %v1224 = vpop.f32.mrf.mxu0
        %v1225 = vpop.f32.mrf.mxu0
        %1226 = vdwg.mxu0
        %v1227 = vadd.f32 %v1067, %v1222
        %v1228 = vadd.f32 %v490, %v1227
        %v1229 = vld [vmem:[%s6] sm:$0x1]
        %v1231 = vlaneseq
        %v1232 = vshrl.u32 %v1231, 7
        %v1233 = vsub.s32 0, %v1232
        %v1234 = vrot.slane %v1229, %v1233
        %v1236 = vadd.f32 %v1228, %v1234
        %v1237 = vld [vmem:[#allocation2] sm:$0x1]
        %v1238 = vld [vmem:[#allocation5] sm:$0x1]
        %v1239 = vsel %vm493, %v1236, 0.0
        %1240 = vadd.xlane.f32.xlu0 %v1239
        %v1241 = vpop.xlane.xlu0 %1240
        %v1242 = vmul.f32 %v1241, %v497
        %v1243 = vsub.f32 %v1236, %v1242
        %v1244 = vmul.f32 %v1243, %v1243
        %v1245 = vsel %vm493, %v1244, 0.0
        %1246 = vadd.xlane.f32.xlu0 %v1245
        %v1247 = vpop.xlane.xlu0 %1246
        %v1248 = vmul.f32 %v1247, %v497
        %v1249 = vadd.f32 %v1248, 1e-05
        %v1250 = vrsqrt.pop %v1249
        %v1251 = vmul.f32 %v1243, %v1250
        %v1253 = vlaneseq
        %v1254 = vshrl.u32 %v1253, 7
        %v1255 = vsub.s32 0, %v1254
        %v1256 = vrot.slane %v1237, %v1255
        %v1258 = vmul.f32 %v1251, %v1256
        %v1260 = vlaneseq
        %v1261 = vshrl.u32 %v1260, 7
        %v1262 = vsub.s32 0, %v1261
        %v1263 = vrot.slane %v1238, %v1262
        %v1265 = vadd.f32 %v1258, %v1263
        %v1266 = vpack.c.bf16 %v1265, %v1265
        %v1267 = vld [vmem:[#allocation7] sm:$0xf]
        %v1268 = vld [vmem:[#allocation7 + $0x4] sm:$0xf]
        %v1269 = vld [vmem:[#allocation7 + $0x8] sm:$0xf]
        %v1270 = vld [vmem:[#allocation7 + $0xc] sm:$0xf]
        %v1271 = vld [vmem:[#allocation8] sm:$0x1]
        %v1273 = vlaneseq
        %v1274 = vshrl.u32 %v1273, 7
        %v1275 = vsub.s32 0, %v1274
        %v1276 = vrot.slane %v1271, %v1275
        %v1282 = vunpack.c.l.b16 %v1267
        %v1283 = vunpack.c.l.b16 %v1268
        %v1284 = vunpack.c.l.b16 %v1269
        %v1285 = vunpack.c.l.b16 %v1270
        %v1286 = vpack.c.b16 %v1283, %v1282
        %v1287 = vpack.c.b16 %v1285, %v1284
        %v1291 = vsel %vm493, %v1266, 0
        %1293 = vmatprep.subr.bf16.mxu0 0
        %1294 = vmatpush1.bf16.msra.mxu0 0
        %1295 = vmatprep.subr.bf16.mxu0 0
        %1296 = vmatpush1.bf16.msra.mxu0 0
        %1297 = vmatprep.subr.bf16.mxu0 0
        %1298 = vmatpush1.bf16.msra.mxu0 0
        %1299 = vmatprep.subr.bf16.mxu0 0
        %1300 = vmatpush1.bf16.msra.mxu0 0
        %1301 = vmatprep.subr.bf16.mxu0 0
        %1302 = vmatpush1.bf16.msra.mxu0 0
        %1303 = vmatprep.subr.bf16.mxu0 0
        %1304 = vmatpush1.bf16.msra.mxu0 0
        %1305 = vmatprep.subr.bf16.mxu0 0
        %1306 = vmatpush1.bf16.msra.mxu0 %v1287
        %1307 = vmatprep.subr.bf16.mxu0 0
        %1308 = vmatpush1.bf16.msra.mxu0 %v1286
        %1309 = vmatprep.subr.bf16.mxu0 0
        %1310 = vmatpush2.bf16.msra.mxu0 0
        %1311 = vmatprep.subr.bf16.mxu0 0
        %1312 = vmatpush2.bf16.msra.mxu0 0
        %1313 = vmatprep.subr.bf16.mxu0 0
        %1314 = vmatpush2.bf16.msra.mxu0 0
        %1315 = vmatprep.subr.bf16.mxu0 0
        %1316 = vmatpush2.bf16.msra.mxu0 0
        %1317 = vmatprep.subr.bf16.mxu0 0
        %1318 = vmatpush2.bf16.msra.mxu0 0
        %1319 = vmatprep.subr.bf16.mxu0 0
        %1320 = vmatpush2.bf16.msra.mxu0 0
        %1321 = vmatprep.subr.bf16.mxu0 0
        %1322 = vmatpush2.bf16.msra.mxu0 0
        %1323 = vmatprep.subr.bf16.mxu0 0
        %1324 = vmatpush2.bf16.msra.mxu0 0
        %1325 = vmatprep.mubr.bf16.mxu0 0
        %1326 = vmatmul.mubr.bf16.gmra.mxu0 %v1291
        %v1327 = vpop.f32.mrf.mxu0
        %v1328 = vadd.f32 %v1276, %v1327
        %v1329 = vpop.f32.mrf.mxu0
        %v1330 = vpop.f32.mrf.mxu0
        %v1331 = vpop.f32.mrf.mxu0
        %1332 = vdwg.mxu0
        %v1333 = vmul.f32 %v1328, 0.5
        %v1334 = vmul.f32 %v1328, 0.70710677
        %v1335 = verf.f32.pop %v1334
        %v1336 = vadd.f32 %v1335, 1.0
        %v1337 = vmul.f32 %v1333, %v1336
        %v1338 = vpack.c.bf16 %v1337, %v1337
        %v1339 = vld [vmem:[%s11] sm:$0xf]
        %v1340 = vld [vmem:[%s11 + $0x4] sm:$0xf]
        %v1341 = vld [vmem:[%s11 + $0x8] sm:$0xf]
        %v1342 = vld [vmem:[%s11 + $0xc] sm:$0xf]
        %v1343 = vld [vmem:[%s11 + $0x10] sm:$0xf]
        %v1344 = vld [vmem:[%s11 + $0x14] sm:$0xf]
        %v1345 = vld [vmem:[%s11 + $0x18] sm:$0xf]
        %v1346 = vld [vmem:[%s11 + $0x1c] sm:$0xf]
        %v1347 = vld [vmem:[%s12] sm:$0x1]
        %v1349 = vlaneseq
        %v1350 = vshrl.u32 %v1349, 7
        %v1351 = vsub.s32 0, %v1350
        %v1352 = vrot.slane %v1347, %v1351
        %v1362 = vunpack.c.l.b16 %v1339
        %v1363 = vunpack.c.l.b16 %v1340
        %v1364 = vunpack.c.l.b16 %v1341
        %v1365 = vunpack.c.l.b16 %v1342
        %v1366 = vunpack.c.l.b16 %v1343
        %v1367 = vunpack.c.l.b16 %v1344
        %v1368 = vunpack.c.l.b16 %v1345
        %v1369 = vunpack.c.l.b16 %v1346
        %v1370 = vpack.c.b16 %v1363, %v1362
        %v1371 = vpack.c.b16 %v1365, %v1364
        %v1372 = vpack.c.b16 %v1367, %v1366
        %v1373 = vpack.c.b16 %v1369, %v1368
        %vm1378 = vcmask 523264
        %v1380 = vsel %vm1378, %v1338, 0
        %1382 = vmatprep.subr.bf16.mxu0 0
        %1383 = vmatpush1.bf16.msra.mxu0 0
        %1384 = vmatprep.subr.bf16.mxu0 0
        %1385 = vmatpush1.bf16.msra.mxu0 0
        %1386 = vmatprep.subr.bf16.mxu0 0
        %1387 = vmatpush1.bf16.msra.mxu0 0
        %1388 = vmatprep.subr.bf16.mxu0 0
        %1389 = vmatpush1.bf16.msra.mxu0 0
        %1390 = vmatprep.subr.bf16.mxu0 0
        %1391 = vmatpush1.bf16.msra.mxu0 %v1373
        %1392 = vmatprep.subr.bf16.mxu0 0
        %1393 = vmatpush1.bf16.msra.mxu0 %v1372
        %1394 = vmatprep.subr.bf16.mxu0 0
        %1395 = vmatpush1.bf16.msra.mxu0 %v1371
        %1396 = vmatprep.subr.bf16.mxu0 0
        %1397 = vmatpush1.bf16.msra.mxu0 %v1370
        %1398 = vmatprep.subr.bf16.mxu0 0
        %1399 = vmatpush2.bf16.msra.mxu0 0
        %1400 = vmatprep.subr.bf16.mxu0 0
        %1401 = vmatpush2.bf16.msra.mxu0 0
        %1402 = vmatprep.subr.bf16.mxu0 0
        %1403 = vmatpush2.bf16.msra.mxu0 0
        %1404 = vmatprep.subr.bf16.mxu0 0
        %1405 = vmatpush2.bf16.msra.mxu0 0
        %1406 = vmatprep.subr.bf16.mxu0 0
        %1407 = vmatpush2.bf16.msra.mxu0 0
        %1408 = vmatprep.subr.bf16.mxu0 0
        %1409 = vmatpush2.bf16.msra.mxu0 0
        %1410 = vmatprep.subr.bf16.mxu0 0
        %1411 = vmatpush2.bf16.msra.mxu0 0
        %1412 = vmatprep.subr.bf16.mxu0 0
        %1413 = vmatpush2.bf16.msra.mxu0 0
        %1414 = vmatprep.mubr.bf16.mxu0 0
        %1415 = vmatmul.mubr.bf16.gmra.mxu0 %v1380
        %v1416 = vpop.f32.mrf.mxu0
        %v1417 = vadd.f32 %v1352, %v1416
        %v1418 = vpop.f32.mrf.mxu0
        %v1419 = vpop.f32.mrf.mxu0
        %v1420 = vpop.f32.mrf.mxu0
        %1421 = vdwg.mxu0
        %v1422 = vadd.f32 %v1236, %v1417
        %1423 = vst.msk [vmem:[%s484] sm:$0xff] %vm493, %v1422
        %s1424 = sand.u32 %s316, 1
        %s1425 = scalar_lea.sflag [#allocation4], %s1424
        %s1426 = sand.u32 %s316, 1
        %s1427 = smul.addr %s1426, 8
        %s1428 = scalar_lea.vmem [#allocation10], %s1427
        // Predicated region
        $region89: #{tpu_custom_call.1} parent=71 // pred_check
          %p1429 = pneg %p326
        $region90: #{tpu_custom_call.1} parent=71 // pred_check_branch
          %1431 = sbr.rel (%p1429) target = $region92
        $region91: #{tpu_custom_call.1} parent=71 // pred_region
          %s1433 = ssub.s32 128, 128
          %1434 = vsyncadd %s1425, %s1433
          %s1435 = smul.addr %s30, 128
          %s1436 = scalar_lea.hbm %s13, %s1435
          %s1438 = sshll.u32 %s1428, 4
          %s1439 = int_to_ptr.vmem [resolvable:$true] %s1438
          %1441 = dma.vmem_to_hbm [thread:$0]  %s1439, 128, %s1436, %s1425
        $region92: #{tpu_custom_call.1} parent=71 // pred_fallthru
          _
      $region72: #{tpu_custom_call.1} parent=5 // pred_fallthru
        _
      %p1442 = scmp.le.s32.totalorder 2, %s25
      // Predicated region
      $region93: #{tpu_custom_call.1} parent=5 // pred_check
        %p1443 = pneg %p1442
      $region94: #{tpu_custom_call.1} parent=5 // pred_check_branch
        %1445 = sbr.rel (%p1443) target = $region96
      $region95: #{tpu_custom_call.1} parent=5 // pred_region
        %s1446 = ssub.s32 %s25, 2
        // Predicated region
        $region97: #{tpu_custom_call.1} parent=95 // pred_check
          %p1447 = pneg %p332
        $region98: #{tpu_custom_call.1} parent=95 // pred_check_branch
          %1449 = sbr.rel (%p1447) target = $region100
        $region99: #{tpu_custom_call.1} parent=95 // pred_region
          %s1450 = sand.u32 %s317, 1
          %s1451 = scalar_lea.sflag [#allocation4], %s1450
          %s1452 = sand.u32 %s317, 1
          %s1453 = smul.addr %s1452, 8
          %s1454 = scalar_lea.vmem [#allocation10], %s1453
          %1455 = dma.done %s1451, 128
        $region100: #{tpu_custom_call.1} parent=95 // pred_fallthru
          _
      $region96: #{tpu_custom_call.1} parent=5 // pred_fallthru
        _
    $region6: #{tpu_custom_call.1} parent=1 // loop_footer
      %s29 = sadd.s32 1, %s25
    $region7: #{tpu_custom_call.1} parent=1 // loop_footer_branch
      %24 = sbr.rel target = $region3
    $region8: #{tpu_custom_call.1} parent=1 // loop_exit
      _
    %1456 = vsyncpa [#allocation3], 1
    %s1457 = scalar_lea.sflag [#allocation3], 1
    %1458 = vsyncpa %s1457, 1
    %1459 = vsyncpa [#allocation6], 1
    %1460 = vsyncpa [#allocation9], 1
    %1461 = vsyncpa [#allocation4], 1
    %s1462 = scalar_lea.sflag [#allocation4], 1
    %1463 = vsyncpa %s1462, 1

</llo_original>
